<compile_context>
chip_gen: v5e
topology: v5e:2x2
jax: 0.10.0
libtpu: 0.0.40
codegen_flags: <defaults>
</compile_context>

<pallas_src>
import functools

import jax
import jax.numpy as jnp
from jax.experimental import pallas as pl
from jax.experimental.pallas import tpu as pltpu

# ----------------------------- model config (small) -------------------------
INPUT_SIZE = 1
HIDDEN_SIZE = 32          # scaled-down stand-in for the default hidden_size=50
NUM_LAYERS = 2
KAN_HIDDEN = 64
OUTPUT_SIZE = 1
GRID_SIZE = 5
SPLINE_ORDER = 3
N_BASES = GRID_SIZE + SPLINE_ORDER          # 8 B-spline basis functions
BATCH = 2
SEQ = 8

# Uniform knot grid (identical for every input feature in efficient-kan), so
# the knots are plain Python scalars baked into the kernel (constant-folded).
_H_STEP = (1.0 - (-1.0)) / GRID_SIZE
GRID_PTS = [(-1.0) + _H_STEP * (m - SPLINE_ORDER)
            for m in range(GRID_SIZE + 2 * SPLINE_ORDER + 1)]   # 12 knots


# ============================ in-kernel helpers ==============================
def _lstm_gate_update(gates, c, H):
    """LSTM cell update; gates laid out [i | f | o | g] (reordered in wrapper)."""
    sig = jax.nn.sigmoid(gates[:, :3 * H])     # single EUP pass over 3H lanes
    g = jnp.tanh(gates[:, 3 * H:])             # single EUP pass over H lanes
    i = sig[:, :H]
    f = sig[:, H:2 * H]
    o = sig[:, 2 * H:3 * H]
    c_new = f * c + i * g
    h_new = o * jnp.tanh(c_new)
    return h_new, c_new


def _kan_features(x):
    """concat([SiLU(x), B-spline bases 0..N_BASES-1], axis=-1) -> (B, 9*in).

    Cox-de Boor recursion over scalar Python knots; all intermediates stay
    2-D (B, in) and lane-friendly (no 3-D reshapes in-kernel).
    """
    act = x * jax.nn.sigmoid(x)
    g = GRID_PTS
    bases = [jnp.logical_and(x >= g[m], x < g[m + 1]).astype(jnp.float32)
             for m in range(len(g) - 1)]
    for k in range(1, SPLINE_ORDER + 1):
        new_bases = []
        for m in range(len(bases) - 1):
            left = (x - g[m]) / (g[m + k] - g[m]) * bases[m]
            right = (g[m + k + 1] - x) / (g[m + k + 1] - g[m + 1]) * bases[m + 1]
            new_bases.append(left + right)
        bases = new_bases
    return jnp.concatenate([act] + bases, axis=-1)


# ============================= fused forward kernel ==========================
def fused_kernel(x_ref, wih0_ref, whh0_ref, b0_ref, w1_ref, b1_ref,
                 kanw1_ref, kanw2_ref, out_ref, *, H, S):
    x_all = x_ref[...]          # (S, B, I) time-major, I == 1
    wih0 = wih0_ref[...]        # (I, 4H)
    whh0 = whh0_ref[...]        # (H, 4H)
    b0 = b0_ref[...]            # (1, 4H)
    w1 = w1_ref[...]            # (2H, 4H) = vstack(W_ih1^T, W_hh1^T)
    b1 = b1_ref[...]            # (1, 4H)
    B = x_all.shape[1]

    h0 = jnp.zeros((B, H), jnp.float32)
    c0 = jnp.zeros((B, H), jnp.float32)
    h1 = jnp.zeros((B, H), jnp.float32)
    c1 = jnp.zeros((B, H), jnp.float32)

    # Statically unrolled recurrence (S is a compile-time constant).
    for t in range(S):
        x_t = x_all[t]          # (B, I), I == 1
        # input_size == 1: contraction of length 1 == broadcast multiply.
        gates0 = (x_t * wih0
                  + jnp.dot(h0, whh0, preferred_element_type=jnp.float32)
                  + b0)
        h0, c0 = _lstm_gate_update(gates0, c0, H)

        # Layer 1: both matmuls fused into one deeper (B, 2H) @ (2H, 4H) dot.
        hcat = jnp.concatenate([h0, h1], axis=-1)              # (B, 2H)
        gates1 = jnp.dot(hcat, w1, preferred_element_type=jnp.float32) + b1
        h1, c1 = _lstm_gate_update(gates1, c1, H)

    # KAN [hidden -> 64 -> 1]; each layer is ONE deep matmul.
    h_mid = jnp.dot(_kan_features(h1), kanw1_ref[...],
                    preferred_element_type=jnp.float32)        # (B, 64)
    y = jnp.dot(_kan_features(h_mid), kanw2_ref[...],
                preferred_element_type=jnp.float32)            # (B, 1)
    out_ref[...] = y


def lstm_kan_forward(x_bsi, kernel_params):
    """x_bsi: (batch, seq, input) batch-first (PyTorch layout). -> (batch, 1)."""
    B, S, _ = x_bsi.shape
    x_sbi = jnp.transpose(x_bsi, (1, 0, 2))   # time-major for the recurrence
    vmem = pl.BlockSpec(memory_space=pltpu.MemorySpace.VMEM)
    return pl.pallas_call(
        functools.partial(fused_kernel, H=HIDDEN_SIZE, S=S),
        out_shape=jax.ShapeDtypeStruct((B, OUTPUT_SIZE), jnp.float32),
        in_specs=[vmem] * (1 + len(kernel_params)),
        out_specs=vmem,
    )(x_sbi, *kernel_params)


# ============================= parameter preparation =========================
def _reorder_gates(w):
    """PyTorch LSTM gate order [i|f|g|o] -> kernel order [i|f|o|g] (axis 0)."""
    H = HIDDEN_SIZE
    return jnp.concatenate(
        [w[0:H], w[H:2 * H], w[3 * H:4 * H], w[2 * H:3 * H]], axis=0)


def prepare_params(wih0, whh0, bih0, bhh0, wih1, whh1, bih1, bhh1,
                   kan1_base, kan1_scaled, kan2_base, kan2_scaled):
    # ---- LSTM: reorder gates, pre-transpose to (in, 4H); layer-1 stacked.
    wih0_t = _reorder_gates(wih0).T                             # (I, 4H)
    whh0_t = _reorder_gates(whh0).T                             # (H, 4H)
    b0 = _reorder_gates(bih0 + bhh0)[None, :]                   # (1, 4H)
    w1 = jnp.concatenate([_reorder_gates(wih1).T,
                          _reorder_gates(whh1).T], axis=0)      # (2H, 4H)
    b1 = _reorder_gates(bih1 + bhh1)[None, :]                   # (1, 4H)

    # ---- KAN: stack base + 8 spline-basis slices into one ((1+nb)*in, out).
    def stack_kan(base_w, scaled_spline_w):
        # base_w: (out, in); scaled_spline_w: (out, in, n_bases)
        base_t = base_w.T                                       # (in, out)
        spl_t = jnp.transpose(scaled_spline_w, (2, 1, 0))       # (nb, in, out)
        return jnp.concatenate(
            [base_t] + [spl_t[j] for j in range(N_BASES)], axis=0)

    kan_w1 = stack_kan(kan1_base, kan1_scaled)                  # (9*H, 64)
    kan_w2 = stack_kan(kan2_base, kan2_scaled)                  # (9*64, 1)
    return (wih0_t, whh0_t, b0, w1, b1, kan_w1, kan_w2)


# =============================== pure-JAX reference ==========================
def _lstm_ref(x_bsi, raw):
    (wih0, whh0, bih0, bhh0, wih1, whh1, bih1, bhh1) = raw
    B, S, _ = x_bsi.shape
    H = HIDDEN_SIZE
    h0 = jnp.zeros((B, H)); c0 = jnp.zeros((B, H))
    h1 = jnp.zeros((B, H)); c1 = jnp.zeros((B, H))

    def cell(x_t, h, c, wih, whh, bih, bhh):
        gates = x_t @ wih.T + h @ whh.T + bih + bhh
        i = jax.nn.sigmoid(gates[:, 0:H])
        f = jax.nn.sigmoid(gates[:, H:2 * H])
        g = jnp.tanh(gates[:, 2 * H:3 * H])
        o = jax.nn.sigmoid(gates[:, 3 * H:4 * H])
        c = f * c + i * g
        return o * jnp.tanh(c), c

    for t in range(S):
        x_t = x_bsi[:, t, :]
        h0, c0 = cell(x_t, h0, c0, wih0, whh0, bih0, bhh0)
        h1, c1 = cell(h0, h1, c1, wih1, whh1, bih1, bhh1)
    return h1


def _b_splines_ref(x, grid):
    g = grid[None, None, :]
    xx = x[:, :, None]
    bases = jnp.logical_and(xx >= g[:, :, :-1], xx < g[:, :, 1:]).astype(jnp.float32)
    for k in range(1, SPLINE_ORDER + 1):
        bases = ((xx - g[:, :, :-(k + 1)]) / (g[:, :, k:-1] - g[:, :, :-(k + 1)])
                 * bases[:, :, :-1]
                 + (g[:, :, k + 1:] - xx) / (g[:, :, k + 1:] - g[:, :, 1:-k])
                 * bases[:, :, 1:])
    return bases  # (B, in, n_bases)


def _kan_linear_ref(x, base_w, scaled_spline_w, grid):
    act = x * jax.nn.sigmoid(x)
    base_out = act @ base_w.T
    bs = _b_splines_ref(x, grid)
    spline_out = jnp.einsum('bin,oin->bo', bs, scaled_spline_w)
    return base_out + spline_out


# =================================== main ====================================
if __name__ == "__main__":
    H = HIDDEN_SIZE
    key = jax.random.PRNGKey(0)
    keys = jax.random.split(key, 20)

    def init(k, shape, scale=0.1):
        return scale * jax.random.normal(k, shape, dtype=jnp.float32)

    # ---- LSTM parameters (raw PyTorch layout, gate order [i|f|g|o])
    wih0 = init(keys[0], (4 * H, INPUT_SIZE))
    whh0 = init(keys[1], (4 * H, H))
    bih0 = init(keys[2], (4 * H,))
    bhh0 = init(keys[3], (4 * H,))
    wih1 = init(keys[4], (4 * H, H))
    whh1 = init(keys[5], (4 * H, H))
    bih1 = init(keys[6], (4 * H,))
    bhh1 = init(keys[7], (4 * H,))

    # ---- KAN parameters (efficient-kan layout), spline scaler folded in
    kan1_base = init(keys[8], (KAN_HIDDEN, H))
    kan1_spl = init(keys[9], (KAN_HIDDEN, H, N_BASES))
    kan1_scaler = 1.0 + init(keys[10], (KAN_HIDDEN, H))
    kan2_base = init(keys[11], (OUTPUT_SIZE, KAN_HIDDEN))
    kan2_spl = init(keys[12], (OUTPUT_SIZE, KAN_HIDDEN, N_BASES))
    kan2_scaler = 1.0 + init(keys[13], (OUTPUT_SIZE, KAN_HIDDEN))
    kan1_scaled = kan1_spl * kan1_scaler[:, :, None]          # (out, in, nb)
    kan2_scaled = kan2_spl * kan2_scaler[:, :, None]

    # ---- kernel-layout parameters (reordered / stacked / transposed)
    kernel_params = prepare_params(
        wih0, whh0, bih0, bhh0, wih1, whh1, bih1, bhh1,
        kan1_base, kan1_scaled, kan2_base, kan2_scaled)

    # ---- input (PyTorch batch-first layout)
    x = jax.random.normal(keys[14], (BATCH, SEQ, INPUT_SIZE), dtype=jnp.float32)

    # ---- fused Pallas forward
    y = lstm_kan_forward(x, kernel_params)
    y = jax.block_until_ready(y)

    # ---- pure-JAX reference check
    grid_arr = jnp.asarray(GRID_PTS, dtype=jnp.float32)
    h_ref = _lstm_ref(x, (wih0, whh0, bih0, bhh0, wih1, whh1, bih1, bhh1))
    m_ref = _kan_linear_ref(h_ref, kan1_base, kan1_scaled, grid_arr)
    y_ref = _kan_linear_ref(m_ref, kan2_base, kan2_scaled, grid_arr)

    assert y.shape == (BATCH, OUTPUT_SIZE), y.shape
    assert jnp.allclose(y, y_ref, atol=5e-3, rtol=5e-2), (y, y_ref)
    print("KERNEL_OK")
</pallas_src>

<mosaic_0001>
module attributes {stable_mosaic.version = 11 : i64} {
  func.func @fused_kernel(%arg0: memref<8x2x1xf32, #tpu.memory_space<vmem>>, %arg1: memref<1x128xf32, #tpu.memory_space<vmem>>, %arg2: memref<32x128xf32, #tpu.memory_space<vmem>>, %arg3: memref<1x128xf32, #tpu.memory_space<vmem>>, %arg4: memref<64x128xf32, #tpu.memory_space<vmem>>, %arg5: memref<1x128xf32, #tpu.memory_space<vmem>>, %arg6: memref<288x64xf32, #tpu.memory_space<vmem>>, %arg7: memref<576x1xf32, #tpu.memory_space<vmem>>, %arg8: memref<2x1xf32, #tpu.memory_space<vmem>>) attributes {dimension_semantics = [], scalar_prefetch = 0 : i64, scratch_operands = 0 : i64, tpu.core_type = #tpu.core_type<tc>} {
    %c0 = arith.constant 0 : index
    %c0_0 = arith.constant 0 : index
    %c0_1 = arith.constant 0 : index
    %0 = vector.load %arg0[%c0, %c0_0, %c0_1] : memref<8x2x1xf32, #tpu.memory_space<vmem>>, vector<8x2x1xf32>
    %c0_2 = arith.constant 0 : index
    %c0_3 = arith.constant 0 : index
    %1 = vector.load %arg1[%c0_2, %c0_3] : memref<1x128xf32, #tpu.memory_space<vmem>>, vector<1x128xf32>
    %c0_4 = arith.constant 0 : index
    %c0_5 = arith.constant 0 : index
    %2 = vector.load %arg2[%c0_4, %c0_5] : memref<32x128xf32, #tpu.memory_space<vmem>>, vector<32x128xf32>
    %c0_6 = arith.constant 0 : index
    %c0_7 = arith.constant 0 : index
    %3 = vector.load %arg3[%c0_6, %c0_7] : memref<1x128xf32, #tpu.memory_space<vmem>>, vector<1x128xf32>
    %c0_8 = arith.constant 0 : index
    %c0_9 = arith.constant 0 : index
    %4 = vector.load %arg4[%c0_8, %c0_9] : memref<64x128xf32, #tpu.memory_space<vmem>>, vector<64x128xf32>
    %c0_10 = arith.constant 0 : index
    %c0_11 = arith.constant 0 : index
    %5 = vector.load %arg5[%c0_10, %c0_11] : memref<1x128xf32, #tpu.memory_space<vmem>>, vector<1x128xf32>
    %cst = arith.constant 0.000000e+00 : f32
    %6 = vector.broadcast %cst : f32 to vector<2x32xf32>
    %cst_12 = arith.constant 0.000000e+00 : f32
    %7 = vector.broadcast %cst_12 : f32 to vector<2x32xf32>
    %cst_13 = arith.constant 0.000000e+00 : f32
    %8 = vector.broadcast %cst_13 : f32 to vector<2x32xf32>
    %cst_14 = arith.constant 0.000000e+00 : f32
    %9 = vector.broadcast %cst_14 : f32 to vector<2x32xf32>
    %10 = vector.extract_strided_slice %0 {offsets = [0, 0, 0], sizes = [1, 2, 1], strides = [1, 1, 1]} : vector<8x2x1xf32> to vector<1x2x1xf32>
    %11 = vector.shape_cast %10 : vector<1x2x1xf32> to vector<2x1xf32>
    %12 = vector.broadcast %11 : vector<2x1xf32> to vector<2x128xf32>
    %13 = vector.broadcast %1 : vector<1x128xf32> to vector<2x128xf32>
    %14 = arith.mulf %12, %13 : vector<2x128xf32>
    %cst_15 = arith.constant dense<0.000000e+00> : vector<2x128xf32>
    %15 = tpu.matmul %6, %2, %cst_15 {dimension_numbers = #tpu.dot_dimension_numbers<[1], [0], [0], [1], [0, 0, 1, 1], [], []>} : vector<2x32xf32>, vector<32x128xf32>, vector<2x128xf32> -> vector<2x128xf32>
    %16 = arith.addf %14, %15 : vector<2x128xf32>
    %17 = vector.broadcast %3 : vector<1x128xf32> to vector<2x128xf32>
    %18 = arith.addf %16, %17 : vector<2x128xf32>
    %19 = vector.extract_strided_slice %18 {offsets = [0, 0], sizes = [2, 96], strides = [1, 1]} : vector<2x128xf32> to vector<2x96xf32>
    %20 = arith.negf %19 : vector<2x96xf32>
    %21 = math.exp %20 : vector<2x96xf32>
    %cst_16 = arith.constant 1.000000e+00 : f32
    %22 = vector.broadcast %cst_16 : f32 to vector<2x96xf32>
    %23 = arith.addf %22, %21 : vector<2x96xf32>
    %24 = arith.divf %22, %23 : vector<2x96xf32>
    %25 = vector.extract_strided_slice %18 {offsets = [0, 96], sizes = [2, 32], strides = [1, 1]} : vector<2x128xf32> to vector<2x32xf32>
    %26 = math.tanh %25 : vector<2x32xf32>
    %27 = vector.extract_strided_slice %24 {offsets = [0, 0], sizes = [2, 32], strides = [1, 1]} : vector<2x96xf32> to vector<2x32xf32>
    %28 = vector.extract_strided_slice %24 {offsets = [0, 32], sizes = [2, 32], strides = [1, 1]} : vector<2x96xf32> to vector<2x32xf32>
    %29 = vector.extract_strided_slice %24 {offsets = [0, 64], sizes = [2, 32], strides = [1, 1]} : vector<2x96xf32> to vector<2x32xf32>
    %30 = arith.mulf %28, %7 : vector<2x32xf32>
    %31 = arith.mulf %27, %26 : vector<2x32xf32>
    %32 = arith.addf %30, %31 : vector<2x32xf32>
    %33 = math.tanh %32 : vector<2x32xf32>
    %34 = arith.mulf %29, %33 : vector<2x32xf32>
    %35 = tpu.concatenate %34, %8 in 1 : vector<2x32xf32>, vector<2x32xf32> -> vector<2x64xf32>
    %cst_17 = arith.constant dense<0.000000e+00> : vector<2x128xf32>
    %36 = tpu.matmul %35, %4, %cst_17 {dimension_numbers = #tpu.dot_dimension_numbers<[1], [0], [0], [1], [0, 0, 1, 1], [], []>} : vector<2x64xf32>, vector<64x128xf32>, vector<2x128xf32> -> vector<2x128xf32>
    %37 = vector.broadcast %5 : vector<1x128xf32> to vector<2x128xf32>
    %38 = arith.addf %36, %37 : vector<2x128xf32>
    %39 = vector.extract_strided_slice %38 {offsets = [0, 0], sizes = [2, 96], strides = [1, 1]} : vector<2x128xf32> to vector<2x96xf32>
    %40 = arith.negf %39 : vector<2x96xf32>
    %41 = math.exp %40 : vector<2x96xf32>
    %cst_18 = arith.constant 1.000000e+00 : f32
    %42 = vector.broadcast %cst_18 : f32 to vector<2x96xf32>
    %43 = arith.addf %42, %41 : vector<2x96xf32>
    %44 = arith.divf %42, %43 : vector<2x96xf32>
    %45 = vector.extract_strided_slice %38 {offsets = [0, 96], sizes = [2, 32], strides = [1, 1]} : vector<2x128xf32> to vector<2x32xf32>
    %46 = math.tanh %45 : vector<2x32xf32>
    %47 = vector.extract_strided_slice %44 {offsets = [0, 0], sizes = [2, 32], strides = [1, 1]} : vector<2x96xf32> to vector<2x32xf32>
    %48 = vector.extract_strided_slice %44 {offsets = [0, 32], sizes = [2, 32], strides = [1, 1]} : vector<2x96xf32> to vector<2x32xf32>
    %49 = vector.extract_strided_slice %44 {offsets = [0, 64], sizes = [2, 32], strides = [1, 1]} : vector<2x96xf32> to vector<2x32xf32>
    %50 = arith.mulf %48, %9 : vector<2x32xf32>
    %51 = arith.mulf %47, %46 : vector<2x32xf32>
    %52 = arith.addf %50, %51 : vector<2x32xf32>
    %53 = math.tanh %52 : vector<2x32xf32>
    %54 = arith.mulf %49, %53 : vector<2x32xf32>
    %55 = vector.extract_strided_slice %0 {offsets = [1, 0, 0], sizes = [1, 2, 1], strides = [1, 1, 1]} : vector<8x2x1xf32> to vector<1x2x1xf32>
    %56 = vector.shape_cast %55 : vector<1x2x1xf32> to vector<2x1xf32>
    %57 = vector.broadcast %56 : vector<2x1xf32> to vector<2x128xf32>
    %58 = vector.broadcast %1 : vector<1x128xf32> to vector<2x128xf32>
    %59 = arith.mulf %57, %58 : vector<2x128xf32>
    %cst_19 = arith.constant dense<0.000000e+00> : vector<2x128xf32>
    %60 = tpu.matmul %34, %2, %cst_19 {dimension_numbers = #tpu.dot_dimension_numbers<[1], [0], [0], [1], [0, 0, 1, 1], [], []>} : vector<2x32xf32>, vector<32x128xf32>, vector<2x128xf32> -> vector<2x128xf32>
    %61 = arith.addf %59, %60 : vector<2x128xf32>
    %62 = vector.broadcast %3 : vector<1x128xf32> to vector<2x128xf32>
    %63 = arith.addf %61, %62 : vector<2x128xf32>
    %64 = vector.extract_strided_slice %63 {offsets = [0, 0], sizes = [2, 96], strides = [1, 1]} : vector<2x128xf32> to vector<2x96xf32>
    %65 = arith.negf %64 : vector<2x96xf32>
    %66 = math.exp %65 : vector<2x96xf32>
    %cst_20 = arith.constant 1.000000e+00 : f32
    %67 = vector.broadcast %cst_20 : f32 to vector<2x96xf32>
    %68 = arith.addf %67, %66 : vector<2x96xf32>
    %69 = arith.divf %67, %68 : vector<2x96xf32>
    %70 = vector.extract_strided_slice %63 {offsets = [0, 96], sizes = [2, 32], strides = [1, 1]} : vector<2x128xf32> to vector<2x32xf32>
    %71 = math.tanh %70 : vector<2x32xf32>
    %72 = vector.extract_strided_slice %69 {offsets = [0, 0], sizes = [2, 32], strides = [1, 1]} : vector<2x96xf32> to vector<2x32xf32>
    %73 = vector.extract_strided_slice %69 {offsets = [0, 32], sizes = [2, 32], strides = [1, 1]} : vector<2x96xf32> to vector<2x32xf32>
    %74 = vector.extract_strided_slice %69 {offsets = [0, 64], sizes = [2, 32], strides = [1, 1]} : vector<2x96xf32> to vector<2x32xf32>
    %75 = arith.mulf %73, %32 : vector<2x32xf32>
    %76 = arith.mulf %72, %71 : vector<2x32xf32>
    %77 = arith.addf %75, %76 : vector<2x32xf32>
    %78 = math.tanh %77 : vector<2x32xf32>
    %79 = arith.mulf %74, %78 : vector<2x32xf32>
    %80 = tpu.concatenate %79, %54 in 1 : vector<2x32xf32>, vector<2x32xf32> -> vector<2x64xf32>
    %cst_21 = arith.constant dense<0.000000e+00> : vector<2x128xf32>
    %81 = tpu.matmul %80, %4, %cst_21 {dimension_numbers = #tpu.dot_dimension_numbers<[1], [0], [0], [1], [0, 0, 1, 1], [], []>} : vector<2x64xf32>, vector<64x128xf32>, vector<2x128xf32> -> vector<2x128xf32>
    %82 = vector.broadcast %5 : vector<1x128xf32> to vector<2x128xf32>
    %83 = arith.addf %81, %82 : vector<2x128xf32>
    %84 = vector.extract_strided_slice %83 {offsets = [0, 0], sizes = [2, 96], strides = [1, 1]} : vector<2x128xf32> to vector<2x96xf32>
    %85 = arith.negf %84 : vector<2x96xf32>
    %86 = math.exp %85 : vector<2x96xf32>
    %cst_22 = arith.constant 1.000000e+00 : f32
    %87 = vector.broadcast %cst_22 : f32 to vector<2x96xf32>
    %88 = arith.addf %87, %86 : vector<2x96xf32>
    %89 = arith.divf %87, %88 : vector<2x96xf32>
    %90 = vector.extract_strided_slice %83 {offsets = [0, 96], sizes = [2, 32], strides = [1, 1]} : vector<2x128xf32> to vector<2x32xf32>
    %91 = math.tanh %90 : vector<2x32xf32>
    %92 = vector.extract_strided_slice %89 {offsets = [0, 0], sizes = [2, 32], strides = [1, 1]} : vector<2x96xf32> to vector<2x32xf32>
    %93 = vector.extract_strided_slice %89 {offsets = [0, 32], sizes = [2, 32], strides = [1, 1]} : vector<2x96xf32> to vector<2x32xf32>
    %94 = vector.extract_strided_slice %89 {offsets = [0, 64], sizes = [2, 32], strides = [1, 1]} : vector<2x96xf32> to vector<2x32xf32>
    %95 = arith.mulf %93, %52 : vector<2x32xf32>
    %96 = arith.mulf %92, %91 : vector<2x32xf32>
    %97 = arith.addf %95, %96 : vector<2x32xf32>
    %98 = math.tanh %97 : vector<2x32xf32>
    %99 = arith.mulf %94, %98 : vector<2x32xf32>
    %100 = vector.extract_strided_slice %0 {offsets = [2, 0, 0], sizes = [1, 2, 1], strides = [1, 1, 1]} : vector<8x2x1xf32> to vector<1x2x1xf32>
    %101 = vector.shape_cast %100 : vector<1x2x1xf32> to vector<2x1xf32>
    %102 = vector.broadcast %101 : vector<2x1xf32> to vector<2x128xf32>
    %103 = vector.broadcast %1 : vector<1x128xf32> to vector<2x128xf32>
    %104 = arith.mulf %102, %103 : vector<2x128xf32>
    %cst_23 = arith.constant dense<0.000000e+00> : vector<2x128xf32>
    %105 = tpu.matmul %79, %2, %cst_23 {dimension_numbers = #tpu.dot_dimension_numbers<[1], [0], [0], [1], [0, 0, 1, 1], [], []>} : vector<2x32xf32>, vector<32x128xf32>, vector<2x128xf32> -> vector<2x128xf32>
    %106 = arith.addf %104, %105 : vector<2x128xf32>
    %107 = vector.broadcast %3 : vector<1x128xf32> to vector<2x128xf32>
    %108 = arith.addf %106, %107 : vector<2x128xf32>
    %109 = vector.extract_strided_slice %108 {offsets = [0, 0], sizes = [2, 96], strides = [1, 1]} : vector<2x128xf32> to vector<2x96xf32>
    %110 = arith.negf %109 : vector<2x96xf32>
    %111 = math.exp %110 : vector<2x96xf32>
    %cst_24 = arith.constant 1.000000e+00 : f32
    %112 = vector.broadcast %cst_24 : f32 to vector<2x96xf32>
    %113 = arith.addf %112, %111 : vector<2x96xf32>
    %114 = arith.divf %112, %113 : vector<2x96xf32>
    %115 = vector.extract_strided_slice %108 {offsets = [0, 96], sizes = [2, 32], strides = [1, 1]} : vector<2x128xf32> to vector<2x32xf32>
    %116 = math.tanh %115 : vector<2x32xf32>
    %117 = vector.extract_strided_slice %114 {offsets = [0, 0], sizes = [2, 32], strides = [1, 1]} : vector<2x96xf32> to vector<2x32xf32>
    %118 = vector.extract_strided_slice %114 {offsets = [0, 32], sizes = [2, 32], strides = [1, 1]} : vector<2x96xf32> to vector<2x32xf32>
    %119 = vector.extract_strided_slice %114 {offsets = [0, 64], sizes = [2, 32], strides = [1, 1]} : vector<2x96xf32> to vector<2x32xf32>
    %120 = arith.mulf %118, %77 : vector<2x32xf32>
    %121 = arith.mulf %117, %116 : vector<2x32xf32>
    %122 = arith.addf %120, %121 : vector<2x32xf32>
    %123 = math.tanh %122 : vector<2x32xf32>
    %124 = arith.mulf %119, %123 : vector<2x32xf32>
    %125 = tpu.concatenate %124, %99 in 1 : vector<2x32xf32>, vector<2x32xf32> -> vector<2x64xf32>
    %cst_25 = arith.constant dense<0.000000e+00> : vector<2x128xf32>
    %126 = tpu.matmul %125, %4, %cst_25 {dimension_numbers = #tpu.dot_dimension_numbers<[1], [0], [0], [1], [0, 0, 1, 1], [], []>} : vector<2x64xf32>, vector<64x128xf32>, vector<2x128xf32> -> vector<2x128xf32>
    %127 = vector.broadcast %5 : vector<1x128xf32> to vector<2x128xf32>
    %128 = arith.addf %126, %127 : vector<2x128xf32>
    %129 = vector.extract_strided_slice %128 {offsets = [0, 0], sizes = [2, 96], strides = [1, 1]} : vector<2x128xf32> to vector<2x96xf32>
    %130 = arith.negf %129 : vector<2x96xf32>
    %131 = math.exp %130 : vector<2x96xf32>
    %cst_26 = arith.constant 1.000000e+00 : f32
    %132 = vector.broadcast %cst_26 : f32 to vector<2x96xf32>
    %133 = arith.addf %132, %131 : vector<2x96xf32>
    %134 = arith.divf %132, %133 : vector<2x96xf32>
    %135 = vector.extract_strided_slice %128 {offsets = [0, 96], sizes = [2, 32], strides = [1, 1]} : vector<2x128xf32> to vector<2x32xf32>
    %136 = math.tanh %135 : vector<2x32xf32>
    %137 = vector.extract_strided_slice %134 {offsets = [0, 0], sizes = [2, 32], strides = [1, 1]} : vector<2x96xf32> to vector<2x32xf32>
    %138 = vector.extract_strided_slice %134 {offsets = [0, 32], sizes = [2, 32], strides = [1, 1]} : vector<2x96xf32> to vector<2x32xf32>
    %139 = vector.extract_strided_slice %134 {offsets = [0, 64], sizes = [2, 32], strides = [1, 1]} : vector<2x96xf32> to vector<2x32xf32>
    %140 = arith.mulf %138, %97 : vector<2x32xf32>
    %141 = arith.mulf %137, %136 : vector<2x32xf32>
    %142 = arith.addf %140, %141 : vector<2x32xf32>
    %143 = math.tanh %142 : vector<2x32xf32>
    %144 = arith.mulf %139, %143 : vector<2x32xf32>
    %145 = vector.extract_strided_slice %0 {offsets = [3, 0, 0], sizes = [1, 2, 1], strides = [1, 1, 1]} : vector<8x2x1xf32> to vector<1x2x1xf32>
    %146 = vector.shape_cast %145 : vector<1x2x1xf32> to vector<2x1xf32>
    %147 = vector.broadcast %146 : vector<2x1xf32> to vector<2x128xf32>
    %148 = vector.broadcast %1 : vector<1x128xf32> to vector<2x128xf32>
    %149 = arith.mulf %147, %148 : vector<2x128xf32>
    %cst_27 = arith.constant dense<0.000000e+00> : vector<2x128xf32>
    %150 = tpu.matmul %124, %2, %cst_27 {dimension_numbers = #tpu.dot_dimension_numbers<[1], [0], [0], [1], [0, 0, 1, 1], [], []>} : vector<2x32xf32>, vector<32x128xf32>, vector<2x128xf32> -> vector<2x128xf32>
    %151 = arith.addf %149, %150 : vector<2x128xf32>
    %152 = vector.broadcast %3 : vector<1x128xf32> to vector<2x128xf32>
    %153 = arith.addf %151, %152 : vector<2x128xf32>
    %154 = vector.extract_strided_slice %153 {offsets = [0, 0], sizes = [2, 96], strides = [1, 1]} : vector<2x128xf32> to vector<2x96xf32>
    %155 = arith.negf %154 : vector<2x96xf32>
    %156 = math.exp %155 : vector<2x96xf32>
    %cst_28 = arith.constant 1.000000e+00 : f32
    %157 = vector.broadcast %cst_28 : f32 to vector<2x96xf32>
    %158 = arith.addf %157, %156 : vector<2x96xf32>
    %159 = arith.divf %157, %158 : vector<2x96xf32>
    %160 = vector.extract_strided_slice %153 {offsets = [0, 96], sizes = [2, 32], strides = [1, 1]} : vector<2x128xf32> to vector<2x32xf32>
    %161 = math.tanh %160 : vector<2x32xf32>
    %162 = vector.extract_strided_slice %159 {offsets = [0, 0], sizes = [2, 32], strides = [1, 1]} : vector<2x96xf32> to vector<2x32xf32>
    %163 = vector.extract_strided_slice %159 {offsets = [0, 32], sizes = [2, 32], strides = [1, 1]} : vector<2x96xf32> to vector<2x32xf32>
    %164 = vector.extract_strided_slice %159 {offsets = [0, 64], sizes = [2, 32], strides = [1, 1]} : vector<2x96xf32> to vector<2x32xf32>
    %165 = arith.mulf %163, %122 : vector<2x32xf32>
    %166 = arith.mulf %162, %161 : vector<2x32xf32>
    %167 = arith.addf %165, %166 : vector<2x32xf32>
    %168 = math.tanh %167 : vector<2x32xf32>
    %169 = arith.mulf %164, %168 : vector<2x32xf32>
    %170 = tpu.concatenate %169, %144 in 1 : vector<2x32xf32>, vector<2x32xf32> -> vector<2x64xf32>
    %cst_29 = arith.constant dense<0.000000e+00> : vector<2x128xf32>
    %171 = tpu.matmul %170, %4, %cst_29 {dimension_numbers = #tpu.dot_dimension_numbers<[1], [0], [0], [1], [0, 0, 1, 1], [], []>} : vector<2x64xf32>, vector<64x128xf32>, vector<2x128xf32> -> vector<2x128xf32>
    %172 = vector.broadcast %5 : vector<1x128xf32> to vector<2x128xf32>
    %173 = arith.addf %171, %172 : vector<2x128xf32>
    %174 = vector.extract_strided_slice %173 {offsets = [0, 0], sizes = [2, 96], strides = [1, 1]} : vector<2x128xf32> to vector<2x96xf32>
    %175 = arith.negf %174 : vector<2x96xf32>
    %176 = math.exp %175 : vector<2x96xf32>
    %cst_30 = arith.constant 1.000000e+00 : f32
    %177 = vector.broadcast %cst_30 : f32 to vector<2x96xf32>
    %178 = arith.addf %177, %176 : vector<2x96xf32>
    %179 = arith.divf %177, %178 : vector<2x96xf32>
    %180 = vector.extract_strided_slice %173 {offsets = [0, 96], sizes = [2, 32], strides = [1, 1]} : vector<2x128xf32> to vector<2x32xf32>
    %181 = math.tanh %180 : vector<2x32xf32>
    %182 = vector.extract_strided_slice %179 {offsets = [0, 0], sizes = [2, 32], strides = [1, 1]} : vector<2x96xf32> to vector<2x32xf32>
    %183 = vector.extract_strided_slice %179 {offsets = [0, 32], sizes = [2, 32], strides = [1, 1]} : vector<2x96xf32> to vector<2x32xf32>
    %184 = vector.extract_strided_slice %179 {offsets = [0, 64], sizes = [2, 32], strides = [1, 1]} : vector<2x96xf32> to vector<2x32xf32>
    %185 = arith.mulf %183, %142 : vector<2x32xf32>
    %186 = arith.mulf %182, %181 : vector<2x32xf32>
    %187 = arith.addf %185, %186 : vector<2x32xf32>
    %188 = math.tanh %187 : vector<2x32xf32>
    %189 = arith.mulf %184, %188 : vector<2x32xf32>
    %190 = vector.extract_strided_slice %0 {offsets = [4, 0, 0], sizes = [1, 2, 1], strides = [1, 1, 1]} : vector<8x2x1xf32> to vector<1x2x1xf32>
    %191 = vector.shape_cast %190 : vector<1x2x1xf32> to vector<2x1xf32>
    %192 = vector.broadcast %191 : vector<2x1xf32> to vector<2x128xf32>
    %193 = vector.broadcast %1 : vector<1x128xf32> to vector<2x128xf32>
    %194 = arith.mulf %192, %193 : vector<2x128xf32>
    %cst_31 = arith.constant dense<0.000000e+00> : vector<2x128xf32>
    %195 = tpu.matmul %169, %2, %cst_31 {dimension_numbers = #tpu.dot_dimension_numbers<[1], [0], [0], [1], [0, 0, 1, 1], [], []>} : vector<2x32xf32>, vector<32x128xf32>, vector<2x128xf32> -> vector<2x128xf32>
    %196 = arith.addf %194, %195 : vector<2x128xf32>
    %197 = vector.broadcast %3 : vector<1x128xf32> to vector<2x128xf32>
    %198 = arith.addf %196, %197 : vector<2x128xf32>
    %199 = vector.extract_strided_slice %198 {offsets = [0, 0], sizes = [2, 96], strides = [1, 1]} : vector<2x128xf32> to vector<2x96xf32>
    %200 = arith.negf %199 : vector<2x96xf32>
    %201 = math.exp %200 : vector<2x96xf32>
    %cst_32 = arith.constant 1.000000e+00 : f32
    %202 = vector.broadcast %cst_32 : f32 to vector<2x96xf32>
    %203 = arith.addf %202, %201 : vector<2x96xf32>
    %204 = arith.divf %202, %203 : vector<2x96xf32>
    %205 = vector.extract_strided_slice %198 {offsets = [0, 96], sizes = [2, 32], strides = [1, 1]} : vector<2x128xf32> to vector<2x32xf32>
    %206 = math.tanh %205 : vector<2x32xf32>
    %207 = vector.extract_strided_slice %204 {offsets = [0, 0], sizes = [2, 32], strides = [1, 1]} : vector<2x96xf32> to vector<2x32xf32>
    %208 = vector.extract_strided_slice %204 {offsets = [0, 32], sizes = [2, 32], strides = [1, 1]} : vector<2x96xf32> to vector<2x32xf32>
    %209 = vector.extract_strided_slice %204 {offsets = [0, 64], sizes = [2, 32], strides = [1, 1]} : vector<2x96xf32> to vector<2x32xf32>
    %210 = arith.mulf %208, %167 : vector<2x32xf32>
    %211 = arith.mulf %207, %206 : vector<2x32xf32>
    %212 = arith.addf %210, %211 : vector<2x32xf32>
    %213 = math.tanh %212 : vector<2x32xf32>
    %214 = arith.mulf %209, %213 : vector<2x32xf32>
    %215 = tpu.concatenate %214, %189 in 1 : vector<2x32xf32>, vector<2x32xf32> -> vector<2x64xf32>
    %cst_33 = arith.constant dense<0.000000e+00> : vector<2x128xf32>
    %216 = tpu.matmul %215, %4, %cst_33 {dimension_numbers = #tpu.dot_dimension_numbers<[1], [0], [0], [1], [0, 0, 1, 1], [], []>} : vector<2x64xf32>, vector<64x128xf32>, vector<2x128xf32> -> vector<2x128xf32>
    %217 = vector.broadcast %5 : vector<1x128xf32> to vector<2x128xf32>
    %218 = arith.addf %216, %217 : vector<2x128xf32>
    %219 = vector.extract_strided_slice %218 {offsets = [0, 0], sizes = [2, 96], strides = [1, 1]} : vector<2x128xf32> to vector<2x96xf32>
    %220 = arith.negf %219 : vector<2x96xf32>
    %221 = math.exp %220 : vector<2x96xf32>
    %cst_34 = arith.constant 1.000000e+00 : f32
    %222 = vector.broadcast %cst_34 : f32 to vector<2x96xf32>
    %223 = arith.addf %222, %221 : vector<2x96xf32>
    %224 = arith.divf %222, %223 : vector<2x96xf32>
    %225 = vector.extract_strided_slice %218 {offsets = [0, 96], sizes = [2, 32], strides = [1, 1]} : vector<2x128xf32> to vector<2x32xf32>
    %226 = math.tanh %225 : vector<2x32xf32>
    %227 = vector.extract_strided_slice %224 {offsets = [0, 0], sizes = [2, 32], strides = [1, 1]} : vector<2x96xf32> to vector<2x32xf32>
    %228 = vector.extract_strided_slice %224 {offsets = [0, 32], sizes = [2, 32], strides = [1, 1]} : vector<2x96xf32> to vector<2x32xf32>
    %229 = vector.extract_strided_slice %224 {offsets = [0, 64], sizes = [2, 32], strides = [1, 1]} : vector<2x96xf32> to vector<2x32xf32>
    %230 = arith.mulf %228, %187 : vector<2x32xf32>
    %231 = arith.mulf %227, %226 : vector<2x32xf32>
    %232 = arith.addf %230, %231 : vector<2x32xf32>
    %233 = math.tanh %232 : vector<2x32xf32>
    %234 = arith.mulf %229, %233 : vector<2x32xf32>
    %235 = vector.extract_strided_slice %0 {offsets = [5, 0, 0], sizes = [1, 2, 1], strides = [1, 1, 1]} : vector<8x2x1xf32> to vector<1x2x1xf32>
    %236 = vector.shape_cast %235 : vector<1x2x1xf32> to vector<2x1xf32>
    %237 = vector.broadcast %236 : vector<2x1xf32> to vector<2x128xf32>
    %238 = vector.broadcast %1 : vector<1x128xf32> to vector<2x128xf32>
    %239 = arith.mulf %237, %238 : vector<2x128xf32>
    %cst_35 = arith.constant dense<0.000000e+00> : vector<2x128xf32>
    %240 = tpu.matmul %214, %2, %cst_35 {dimension_numbers = #tpu.dot_dimension_numbers<[1], [0], [0], [1], [0, 0, 1, 1], [], []>} : vector<2x32xf32>, vector<32x128xf32>, vector<2x128xf32> -> vector<2x128xf32>
    %241 = arith.addf %239, %240 : vector<2x128xf32>
    %242 = vector.broadcast %3 : vector<1x128xf32> to vector<2x128xf32>
    %243 = arith.addf %241, %242 : vector<2x128xf32>
    %244 = vector.extract_strided_slice %243 {offsets = [0, 0], sizes = [2, 96], strides = [1, 1]} : vector<2x128xf32> to vector<2x96xf32>
    %245 = arith.negf %244 : vector<2x96xf32>
    %246 = math.exp %245 : vector<2x96xf32>
    %cst_36 = arith.constant 1.000000e+00 : f32
    %247 = vector.broadcast %cst_36 : f32 to vector<2x96xf32>
    %248 = arith.addf %247, %246 : vector<2x96xf32>
    %249 = arith.divf %247, %248 : vector<2x96xf32>
    %250 = vector.extract_strided_slice %243 {offsets = [0, 96], sizes = [2, 32], strides = [1, 1]} : vector<2x128xf32> to vector<2x32xf32>
    %251 = math.tanh %250 : vector<2x32xf32>
    %252 = vector.extract_strided_slice %249 {offsets = [0, 0], sizes = [2, 32], strides = [1, 1]} : vector<2x96xf32> to vector<2x32xf32>
    %253 = vector.extract_strided_slice %249 {offsets = [0, 32], sizes = [2, 32], strides = [1, 1]} : vector<2x96xf32> to vector<2x32xf32>
    %254 = vector.extract_strided_slice %249 {offsets = [0, 64], sizes = [2, 32], strides = [1, 1]} : vector<2x96xf32> to vector<2x32xf32>
    %255 = arith.mulf %253, %212 : vector<2x32xf32>
    %256 = arith.mulf %252, %251 : vector<2x32xf32>
    %257 = arith.addf %255, %256 : vector<2x32xf32>
    %258 = math.tanh %257 : vector<2x32xf32>
    %259 = arith.mulf %254, %258 : vector<2x32xf32>
    %260 = tpu.concatenate %259, %234 in 1 : vector<2x32xf32>, vector<2x32xf32> -> vector<2x64xf32>
    %cst_37 = arith.constant dense<0.000000e+00> : vector<2x128xf32>
    %261 = tpu.matmul %260, %4, %cst_37 {dimension_numbers = #tpu.dot_dimension_numbers<[1], [0], [0], [1], [0, 0, 1, 1], [], []>} : vector<2x64xf32>, vector<64x128xf32>, vector<2x128xf32> -> vector<2x128xf32>
    %262 = vector.broadcast %5 : vector<1x128xf32> to vector<2x128xf32>
    %263 = arith.addf %261, %262 : vector<2x128xf32>
    %264 = vector.extract_strided_slice %263 {offsets = [0, 0], sizes = [2, 96], strides = [1, 1]} : vector<2x128xf32> to vector<2x96xf32>
    %265 = arith.negf %264 : vector<2x96xf32>
    %266 = math.exp %265 : vector<2x96xf32>
    %cst_38 = arith.constant 1.000000e+00 : f32
    %267 = vector.broadcast %cst_38 : f32 to vector<2x96xf32>
    %268 = arith.addf %267, %266 : vector<2x96xf32>
    %269 = arith.divf %267, %268 : vector<2x96xf32>
    %270 = vector.extract_strided_slice %263 {offsets = [0, 96], sizes = [2, 32], strides = [1, 1]} : vector<2x128xf32> to vector<2x32xf32>
    %271 = math.tanh %270 : vector<2x32xf32>
    %272 = vector.extract_strided_slice %269 {offsets = [0, 0], sizes = [2, 32], strides = [1, 1]} : vector<2x96xf32> to vector<2x32xf32>
    %273 = vector.extract_strided_slice %269 {offsets = [0, 32], sizes = [2, 32], strides = [1, 1]} : vector<2x96xf32> to vector<2x32xf32>
    %274 = vector.extract_strided_slice %269 {offsets = [0, 64], sizes = [2, 32], strides = [1, 1]} : vector<2x96xf32> to vector<2x32xf32>
    %275 = arith.mulf %273, %232 : vector<2x32xf32>
    %276 = arith.mulf %272, %271 : vector<2x32xf32>
    %277 = arith.addf %275, %276 : vector<2x32xf32>
    %278 = math.tanh %277 : vector<2x32xf32>
    %279 = arith.mulf %274, %278 : vector<2x32xf32>
    %280 = vector.extract_strided_slice %0 {offsets = [6, 0, 0], sizes = [1, 2, 1], strides = [1, 1, 1]} : vector<8x2x1xf32> to vector<1x2x1xf32>
    %281 = vector.shape_cast %280 : vector<1x2x1xf32> to vector<2x1xf32>
    %282 = vector.broadcast %281 : vector<2x1xf32> to vector<2x128xf32>
    %283 = vector.broadcast %1 : vector<1x128xf32> to vector<2x128xf32>
    %284 = arith.mulf %282, %283 : vector<2x128xf32>
    %cst_39 = arith.constant dense<0.000000e+00> : vector<2x128xf32>
    %285 = tpu.matmul %259, %2, %cst_39 {dimension_numbers = #tpu.dot_dimension_numbers<[1], [0], [0], [1], [0, 0, 1, 1], [], []>} : vector<2x32xf32>, vector<32x128xf32>, vector<2x128xf32> -> vector<2x128xf32>
    %286 = arith.addf %284, %285 : vector<2x128xf32>
    %287 = vector.broadcast %3 : vector<1x128xf32> to vector<2x128xf32>
    %288 = arith.addf %286, %287 : vector<2x128xf32>
    %289 = vector.extract_strided_slice %288 {offsets = [0, 0], sizes = [2, 96], strides = [1, 1]} : vector<2x128xf32> to vector<2x96xf32>
    %290 = arith.negf %289 : vector<2x96xf32>
    %291 = math.exp %290 : vector<2x96xf32>
    %cst_40 = arith.constant 1.000000e+00 : f32
    %292 = vector.broadcast %cst_40 : f32 to vector<2x96xf32>
    %293 = arith.addf %292, %291 : vector<2x96xf32>
    %294 = arith.divf %292, %293 : vector<2x96xf32>
    %295 = vector.extract_strided_slice %288 {offsets = [0, 96], sizes = [2, 32], strides = [1, 1]} : vector<2x128xf32> to vector<2x32xf32>
    %296 = math.tanh %295 : vector<2x32xf32>
    %297 = vector.extract_strided_slice %294 {offsets = [0, 0], sizes = [2, 32], strides = [1, 1]} : vector<2x96xf32> to vector<2x32xf32>
    %298 = vector.extract_strided_slice %294 {offsets = [0, 32], sizes = [2, 32], strides = [1, 1]} : vector<2x96xf32> to vector<2x32xf32>
    %299 = vector.extract_strided_slice %294 {offsets = [0, 64], sizes = [2, 32], strides = [1, 1]} : vector<2x96xf32> to vector<2x32xf32>
    %300 = arith.mulf %298, %257 : vector<2x32xf32>
    %301 = arith.mulf %297, %296 : vector<2x32xf32>
    %302 = arith.addf %300, %301 : vector<2x32xf32>
    %303 = math.tanh %302 : vector<2x32xf32>
    %304 = arith.mulf %299, %303 : vector<2x32xf32>
    %305 = tpu.concatenate %304, %279 in 1 : vector<2x32xf32>, vector<2x32xf32> -> vector<2x64xf32>
    %cst_41 = arith.constant dense<0.000000e+00> : vector<2x128xf32>
    %306 = tpu.matmul %305, %4, %cst_41 {dimension_numbers = #tpu.dot_dimension_numbers<[1], [0], [0], [1], [0, 0, 1, 1], [], []>} : vector<2x64xf32>, vector<64x128xf32>, vector<2x128xf32> -> vector<2x128xf32>
    %307 = vector.broadcast %5 : vector<1x128xf32> to vector<2x128xf32>
    %308 = arith.addf %306, %307 : vector<2x128xf32>
    %309 = vector.extract_strided_slice %308 {offsets = [0, 0], sizes = [2, 96], strides = [1, 1]} : vector<2x128xf32> to vector<2x96xf32>
    %310 = arith.negf %309 : vector<2x96xf32>
    %311 = math.exp %310 : vector<2x96xf32>
    %cst_42 = arith.constant 1.000000e+00 : f32
    %312 = vector.broadcast %cst_42 : f32 to vector<2x96xf32>
    %313 = arith.addf %312, %311 : vector<2x96xf32>
    %314 = arith.divf %312, %313 : vector<2x96xf32>
    %315 = vector.extract_strided_slice %308 {offsets = [0, 96], sizes = [2, 32], strides = [1, 1]} : vector<2x128xf32> to vector<2x32xf32>
    %316 = math.tanh %315 : vector<2x32xf32>
    %317 = vector.extract_strided_slice %314 {offsets = [0, 0], sizes = [2, 32], strides = [1, 1]} : vector<2x96xf32> to vector<2x32xf32>
    %318 = vector.extract_strided_slice %314 {offsets = [0, 32], sizes = [2, 32], strides = [1, 1]} : vector<2x96xf32> to vector<2x32xf32>
    %319 = vector.extract_strided_slice %314 {offsets = [0, 64], sizes = [2, 32], strides = [1, 1]} : vector<2x96xf32> to vector<2x32xf32>
    %320 = arith.mulf %318, %277 : vector<2x32xf32>
    %321 = arith.mulf %317, %316 : vector<2x32xf32>
    %322 = arith.addf %320, %321 : vector<2x32xf32>
    %323 = math.tanh %322 : vector<2x32xf32>
    %324 = arith.mulf %319, %323 : vector<2x32xf32>
    %325 = vector.extract_strided_slice %0 {offsets = [7, 0, 0], sizes = [1, 2, 1], strides = [1, 1, 1]} : vector<8x2x1xf32> to vector<1x2x1xf32>
    %326 = vector.shape_cast %325 : vector<1x2x1xf32> to vector<2x1xf32>
    %327 = vector.broadcast %326 : vector<2x1xf32> to vector<2x128xf32>
    %328 = vector.broadcast %1 : vector<1x128xf32> to vector<2x128xf32>
    %329 = arith.mulf %327, %328 : vector<2x128xf32>
    %cst_43 = arith.constant dense<0.000000e+00> : vector<2x128xf32>
    %330 = tpu.matmul %304, %2, %cst_43 {dimension_numbers = #tpu.dot_dimension_numbers<[1], [0], [0], [1], [0, 0, 1, 1], [], []>} : vector<2x32xf32>, vector<32x128xf32>, vector<2x128xf32> -> vector<2x128xf32>
    %331 = arith.addf %329, %330 : vector<2x128xf32>
    %332 = vector.broadcast %3 : vector<1x128xf32> to vector<2x128xf32>
    %333 = arith.addf %331, %332 : vector<2x128xf32>
    %334 = vector.extract_strided_slice %333 {offsets = [0, 0], sizes = [2, 96], strides = [1, 1]} : vector<2x128xf32> to vector<2x96xf32>
    %335 = arith.negf %334 : vector<2x96xf32>
    %336 = math.exp %335 : vector<2x96xf32>
    %cst_44 = arith.constant 1.000000e+00 : f32
    %337 = vector.broadcast %cst_44 : f32 to vector<2x96xf32>
    %338 = arith.addf %337, %336 : vector<2x96xf32>
    %339 = arith.divf %337, %338 : vector<2x96xf32>
    %340 = vector.extract_strided_slice %333 {offsets = [0, 96], sizes = [2, 32], strides = [1, 1]} : vector<2x128xf32> to vector<2x32xf32>
    %341 = math.tanh %340 : vector<2x32xf32>
    %342 = vector.extract_strided_slice %339 {offsets = [0, 0], sizes = [2, 32], strides = [1, 1]} : vector<2x96xf32> to vector<2x32xf32>
    %343 = vector.extract_strided_slice %339 {offsets = [0, 32], sizes = [2, 32], strides = [1, 1]} : vector<2x96xf32> to vector<2x32xf32>
    %344 = vector.extract_strided_slice %339 {offsets = [0, 64], sizes = [2, 32], strides = [1, 1]} : vector<2x96xf32> to vector<2x32xf32>
    %345 = arith.mulf %343, %302 : vector<2x32xf32>
    %346 = arith.mulf %342, %341 : vector<2x32xf32>
    %347 = arith.addf %345, %346 : vector<2x32xf32>
    %348 = math.tanh %347 : vector<2x32xf32>
    %349 = arith.mulf %344, %348 : vector<2x32xf32>
    %350 = tpu.concatenate %349, %324 in 1 : vector<2x32xf32>, vector<2x32xf32> -> vector<2x64xf32>
    %cst_45 = arith.constant dense<0.000000e+00> : vector<2x128xf32>
    %351 = tpu.matmul %350, %4, %cst_45 {dimension_numbers = #tpu.dot_dimension_numbers<[1], [0], [0], [1], [0, 0, 1, 1], [], []>} : vector<2x64xf32>, vector<64x128xf32>, vector<2x128xf32> -> vector<2x128xf32>
    %352 = vector.broadcast %5 : vector<1x128xf32> to vector<2x128xf32>
    %353 = arith.addf %351, %352 : vector<2x128xf32>
    %354 = vector.extract_strided_slice %353 {offsets = [0, 0], sizes = [2, 96], strides = [1, 1]} : vector<2x128xf32> to vector<2x96xf32>
    %355 = arith.negf %354 : vector<2x96xf32>
    %356 = math.exp %355 : vector<2x96xf32>
    %cst_46 = arith.constant 1.000000e+00 : f32
    %357 = vector.broadcast %cst_46 : f32 to vector<2x96xf32>
    %358 = arith.addf %357, %356 : vector<2x96xf32>
    %359 = arith.divf %357, %358 : vector<2x96xf32>
    %360 = vector.extract_strided_slice %353 {offsets = [0, 96], sizes = [2, 32], strides = [1, 1]} : vector<2x128xf32> to vector<2x32xf32>
    %361 = math.tanh %360 : vector<2x32xf32>
    %362 = vector.extract_strided_slice %359 {offsets = [0, 0], sizes = [2, 32], strides = [1, 1]} : vector<2x96xf32> to vector<2x32xf32>
    %363 = vector.extract_strided_slice %359 {offsets = [0, 32], sizes = [2, 32], strides = [1, 1]} : vector<2x96xf32> to vector<2x32xf32>
    %364 = vector.extract_strided_slice %359 {offsets = [0, 64], sizes = [2, 32], strides = [1, 1]} : vector<2x96xf32> to vector<2x32xf32>
    %365 = arith.mulf %363, %322 : vector<2x32xf32>
    %366 = arith.mulf %362, %361 : vector<2x32xf32>
    %367 = arith.addf %365, %366 : vector<2x32xf32>
    %368 = math.tanh %367 : vector<2x32xf32>
    %369 = arith.mulf %364, %368 : vector<2x32xf32>
    %370 = arith.negf %369 : vector<2x32xf32>
    %371 = math.exp %370 : vector<2x32xf32>
    %cst_47 = arith.constant 1.000000e+00 : f32
    %372 = vector.broadcast %cst_47 : f32 to vector<2x32xf32>
    %373 = arith.addf %372, %371 : vector<2x32xf32>
    %374 = arith.divf %372, %373 : vector<2x32xf32>
    %375 = arith.mulf %369, %374 : vector<2x32xf32>
    %cst_48 = arith.constant -2.200000e+00 : f32
    %376 = vector.broadcast %cst_48 : f32 to vector<2x32xf32>
    %377 = arith.cmpf oge, %369, %376 : vector<2x32xf32>
    %cst_49 = arith.constant -1.800000e+00 : f32
    %378 = vector.broadcast %cst_49 : f32 to vector<2x32xf32>
    %379 = arith.cmpf olt, %369, %378 : vector<2x32xf32>
    %380 = arith.andi %377, %379 : vector<2x32xi1>
    %381 = arith.extui %380 : vector<2x32xi1> to vector<2x32xi32>
    %382 = arith.sitofp %381 : vector<2x32xi32> to vector<2x32xf32>
    %cst_50 = arith.constant -1.800000e+00 : f32
    %383 = vector.broadcast %cst_50 : f32 to vector<2x32xf32>
    %384 = arith.cmpf oge, %369, %383 : vector<2x32xf32>
    %cst_51 = arith.constant -1.400000e+00 : f32
    %385 = vector.broadcast %cst_51 : f32 to vector<2x32xf32>
    %386 = arith.cmpf olt, %369, %385 : vector<2x32xf32>
    %387 = arith.andi %384, %386 : vector<2x32xi1>
    %388 = arith.extui %387 : vector<2x32xi1> to vector<2x32xi32>
    %389 = arith.sitofp %388 : vector<2x32xi32> to vector<2x32xf32>
    %cst_52 = arith.constant -1.400000e+00 : f32
    %390 = vector.broadcast %cst_52 : f32 to vector<2x32xf32>
    %391 = arith.cmpf oge, %369, %390 : vector<2x32xf32>
    %cst_53 = arith.constant -1.000000e+00 : f32
    %392 = vector.broadcast %cst_53 : f32 to vector<2x32xf32>
    %393 = arith.cmpf olt, %369, %392 : vector<2x32xf32>
    %394 = arith.andi %391, %393 : vector<2x32xi1>
    %395 = arith.extui %394 : vector<2x32xi1> to vector<2x32xi32>
    %396 = arith.sitofp %395 : vector<2x32xi32> to vector<2x32xf32>
    %cst_54 = arith.constant -1.000000e+00 : f32
    %397 = vector.broadcast %cst_54 : f32 to vector<2x32xf32>
    %398 = arith.cmpf oge, %369, %397 : vector<2x32xf32>
    %cst_55 = arith.constant -6.000000e-01 : f32
    %399 = vector.broadcast %cst_55 : f32 to vector<2x32xf32>
    %400 = arith.cmpf olt, %369, %399 : vector<2x32xf32>
    %401 = arith.andi %398, %400 : vector<2x32xi1>
    %402 = arith.extui %401 : vector<2x32xi1> to vector<2x32xi32>
    %403 = arith.sitofp %402 : vector<2x32xi32> to vector<2x32xf32>
    %cst_56 = arith.constant -6.000000e-01 : f32
    %404 = vector.broadcast %cst_56 : f32 to vector<2x32xf32>
    %405 = arith.cmpf oge, %369, %404 : vector<2x32xf32>
    %cst_57 = arith.constant -2.000000e-01 : f32
    %406 = vector.broadcast %cst_57 : f32 to vector<2x32xf32>
    %407 = arith.cmpf olt, %369, %406 : vector<2x32xf32>
    %408 = arith.andi %405, %407 : vector<2x32xi1>
    %409 = arith.extui %408 : vector<2x32xi1> to vector<2x32xi32>
    %410 = arith.sitofp %409 : vector<2x32xi32> to vector<2x32xf32>
    %cst_58 = arith.constant -2.000000e-01 : f32
    %411 = vector.broadcast %cst_58 : f32 to vector<2x32xf32>
    %412 = arith.cmpf oge, %369, %411 : vector<2x32xf32>
    %cst_59 = arith.constant 2.000000e-01 : f32
    %413 = vector.broadcast %cst_59 : f32 to vector<2x32xf32>
    %414 = arith.cmpf olt, %369, %413 : vector<2x32xf32>
    %415 = arith.andi %412, %414 : vector<2x32xi1>
    %416 = arith.extui %415 : vector<2x32xi1> to vector<2x32xi32>
    %417 = arith.sitofp %416 : vector<2x32xi32> to vector<2x32xf32>
    %cst_60 = arith.constant 2.000000e-01 : f32
    %418 = vector.broadcast %cst_60 : f32 to vector<2x32xf32>
    %419 = arith.cmpf oge, %369, %418 : vector<2x32xf32>
    %cst_61 = arith.constant 6.000000e-01 : f32
    %420 = vector.broadcast %cst_61 : f32 to vector<2x32xf32>
    %421 = arith.cmpf olt, %369, %420 : vector<2x32xf32>
    %422 = arith.andi %419, %421 : vector<2x32xi1>
    %423 = arith.extui %422 : vector<2x32xi1> to vector<2x32xi32>
    %424 = arith.sitofp %423 : vector<2x32xi32> to vector<2x32xf32>
    %cst_62 = arith.constant 6.000000e-01 : f32
    %425 = vector.broadcast %cst_62 : f32 to vector<2x32xf32>
    %426 = arith.cmpf oge, %369, %425 : vector<2x32xf32>
    %cst_63 = arith.constant 1.000000e+00 : f32
    %427 = vector.broadcast %cst_63 : f32 to vector<2x32xf32>
    %428 = arith.cmpf olt, %369, %427 : vector<2x32xf32>
    %429 = arith.andi %426, %428 : vector<2x32xi1>
    %430 = arith.extui %429 : vector<2x32xi1> to vector<2x32xi32>
    %431 = arith.sitofp %430 : vector<2x32xi32> to vector<2x32xf32>
    %cst_64 = arith.constant 1.000000e+00 : f32
    %432 = vector.broadcast %cst_64 : f32 to vector<2x32xf32>
    %433 = arith.cmpf oge, %369, %432 : vector<2x32xf32>
    %cst_65 = arith.constant 1.400000e+00 : f32
    %434 = vector.broadcast %cst_65 : f32 to vector<2x32xf32>
    %435 = arith.cmpf olt, %369, %434 : vector<2x32xf32>
    %436 = arith.andi %433, %435 : vector<2x32xi1>
    %437 = arith.extui %436 : vector<2x32xi1> to vector<2x32xi32>
    %438 = arith.sitofp %437 : vector<2x32xi32> to vector<2x32xf32>
    %cst_66 = arith.constant 1.400000e+00 : f32
    %439 = vector.broadcast %cst_66 : f32 to vector<2x32xf32>
    %440 = arith.cmpf oge, %369, %439 : vector<2x32xf32>
    %cst_67 = arith.constant 1.800000e+00 : f32
    %441 = vector.broadcast %cst_67 : f32 to vector<2x32xf32>
    %442 = arith.cmpf olt, %369, %441 : vector<2x32xf32>
    %443 = arith.andi %440, %442 : vector<2x32xi1>
    %444 = arith.extui %443 : vector<2x32xi1> to vector<2x32xi32>
    %445 = arith.sitofp %444 : vector<2x32xi32> to vector<2x32xf32>
    %cst_68 = arith.constant 1.800000e+00 : f32
    %446 = vector.broadcast %cst_68 : f32 to vector<2x32xf32>
    %447 = arith.cmpf oge, %369, %446 : vector<2x32xf32>
    %cst_69 = arith.constant 2.200000e+00 : f32
    %448 = vector.broadcast %cst_69 : f32 to vector<2x32xf32>
    %449 = arith.cmpf olt, %369, %448 : vector<2x32xf32>
    %450 = arith.andi %447, %449 : vector<2x32xi1>
    %451 = arith.extui %450 : vector<2x32xi1> to vector<2x32xi32>
    %452 = arith.sitofp %451 : vector<2x32xi32> to vector<2x32xf32>
    %cst_70 = arith.constant -2.200000e+00 : f32
    %453 = vector.broadcast %cst_70 : f32 to vector<2x32xf32>
    %454 = arith.subf %369, %453 : vector<2x32xf32>
    %cst_71 = arith.constant 4.000000e-01 : f32
    %455 = vector.broadcast %cst_71 : f32 to vector<2x32xf32>
    %456 = arith.divf %454, %455 : vector<2x32xf32>
    %457 = arith.mulf %456, %382 : vector<2x32xf32>
    %cst_72 = arith.constant -1.400000e+00 : f32
    %458 = vector.broadcast %cst_72 : f32 to vector<2x32xf32>
    %459 = arith.subf %458, %369 : vector<2x32xf32>
    %cst_73 = arith.constant 4.000000e-01 : f32
    %460 = vector.broadcast %cst_73 : f32 to vector<2x32xf32>
    %461 = arith.divf %459, %460 : vector<2x32xf32>
    %462 = arith.mulf %461, %389 : vector<2x32xf32>
    %463 = arith.addf %457, %462 : vector<2x32xf32>
    %cst_74 = arith.constant -1.800000e+00 : f32
    %464 = vector.broadcast %cst_74 : f32 to vector<2x32xf32>
    %465 = arith.subf %369, %464 : vector<2x32xf32>
    %cst_75 = arith.constant 4.000000e-01 : f32
    %466 = vector.broadcast %cst_75 : f32 to vector<2x32xf32>
    %467 = arith.divf %465, %466 : vector<2x32xf32>
    %468 = arith.mulf %467, %389 : vector<2x32xf32>
    %cst_76 = arith.constant -1.000000e+00 : f32
    %469 = vector.broadcast %cst_76 : f32 to vector<2x32xf32>
    %470 = arith.subf %469, %369 : vector<2x32xf32>
    %cst_77 = arith.constant 4.000000e-01 : f32
    %471 = vector.broadcast %cst_77 : f32 to vector<2x32xf32>
    %472 = arith.divf %470, %471 : vector<2x32xf32>
    %473 = arith.mulf %472, %396 : vector<2x32xf32>
    %474 = arith.addf %468, %473 : vector<2x32xf32>
    %cst_78 = arith.constant -1.400000e+00 : f32
    %475 = vector.broadcast %cst_78 : f32 to vector<2x32xf32>
    %476 = arith.subf %369, %475 : vector<2x32xf32>
    %cst_79 = arith.constant 4.000000e-01 : f32
    %477 = vector.broadcast %cst_79 : f32 to vector<2x32xf32>
    %478 = arith.divf %476, %477 : vector<2x32xf32>
    %479 = arith.mulf %478, %396 : vector<2x32xf32>
    %cst_80 = arith.constant -6.000000e-01 : f32
    %480 = vector.broadcast %cst_80 : f32 to vector<2x32xf32>
    %481 = arith.subf %480, %369 : vector<2x32xf32>
    %cst_81 = arith.constant 4.000000e-01 : f32
    %482 = vector.broadcast %cst_81 : f32 to vector<2x32xf32>
    %483 = arith.divf %481, %482 : vector<2x32xf32>
    %484 = arith.mulf %483, %403 : vector<2x32xf32>
    %485 = arith.addf %479, %484 : vector<2x32xf32>
    %cst_82 = arith.constant -1.000000e+00 : f32
    %486 = vector.broadcast %cst_82 : f32 to vector<2x32xf32>
    %487 = arith.subf %369, %486 : vector<2x32xf32>
    %cst_83 = arith.constant 4.000000e-01 : f32
    %488 = vector.broadcast %cst_83 : f32 to vector<2x32xf32>
    %489 = arith.divf %487, %488 : vector<2x32xf32>
    %490 = arith.mulf %489, %403 : vector<2x32xf32>
    %cst_84 = arith.constant -2.000000e-01 : f32
    %491 = vector.broadcast %cst_84 : f32 to vector<2x32xf32>
    %492 = arith.subf %491, %369 : vector<2x32xf32>
    %cst_85 = arith.constant 4.000000e-01 : f32
    %493 = vector.broadcast %cst_85 : f32 to vector<2x32xf32>
    %494 = arith.divf %492, %493 : vector<2x32xf32>
    %495 = arith.mulf %494, %410 : vector<2x32xf32>
    %496 = arith.addf %490, %495 : vector<2x32xf32>
    %cst_86 = arith.constant -6.000000e-01 : f32
    %497 = vector.broadcast %cst_86 : f32 to vector<2x32xf32>
    %498 = arith.subf %369, %497 : vector<2x32xf32>
    %cst_87 = arith.constant 4.000000e-01 : f32
    %499 = vector.broadcast %cst_87 : f32 to vector<2x32xf32>
    %500 = arith.divf %498, %499 : vector<2x32xf32>
    %501 = arith.mulf %500, %410 : vector<2x32xf32>
    %cst_88 = arith.constant 2.000000e-01 : f32
    %502 = vector.broadcast %cst_88 : f32 to vector<2x32xf32>
    %503 = arith.subf %502, %369 : vector<2x32xf32>
    %cst_89 = arith.constant 4.000000e-01 : f32
    %504 = vector.broadcast %cst_89 : f32 to vector<2x32xf32>
    %505 = arith.divf %503, %504 : vector<2x32xf32>
    %506 = arith.mulf %505, %417 : vector<2x32xf32>
    %507 = arith.addf %501, %506 : vector<2x32xf32>
    %cst_90 = arith.constant -2.000000e-01 : f32
    %508 = vector.broadcast %cst_90 : f32 to vector<2x32xf32>
    %509 = arith.subf %369, %508 : vector<2x32xf32>
    %cst_91 = arith.constant 4.000000e-01 : f32
    %510 = vector.broadcast %cst_91 : f32 to vector<2x32xf32>
    %511 = arith.divf %509, %510 : vector<2x32xf32>
    %512 = arith.mulf %511, %417 : vector<2x32xf32>
    %cst_92 = arith.constant 6.000000e-01 : f32
    %513 = vector.broadcast %cst_92 : f32 to vector<2x32xf32>
    %514 = arith.subf %513, %369 : vector<2x32xf32>
    %cst_93 = arith.constant 4.000000e-01 : f32
    %515 = vector.broadcast %cst_93 : f32 to vector<2x32xf32>
    %516 = arith.divf %514, %515 : vector<2x32xf32>
    %517 = arith.mulf %516, %424 : vector<2x32xf32>
    %518 = arith.addf %512, %517 : vector<2x32xf32>
    %cst_94 = arith.constant 2.000000e-01 : f32
    %519 = vector.broadcast %cst_94 : f32 to vector<2x32xf32>
    %520 = arith.subf %369, %519 : vector<2x32xf32>
    %cst_95 = arith.constant 4.000000e-01 : f32
    %521 = vector.broadcast %cst_95 : f32 to vector<2x32xf32>
    %522 = arith.divf %520, %521 : vector<2x32xf32>
    %523 = arith.mulf %522, %424 : vector<2x32xf32>
    %cst_96 = arith.constant 1.000000e+00 : f32
    %524 = vector.broadcast %cst_96 : f32 to vector<2x32xf32>
    %525 = arith.subf %524, %369 : vector<2x32xf32>
    %cst_97 = arith.constant 4.000000e-01 : f32
    %526 = vector.broadcast %cst_97 : f32 to vector<2x32xf32>
    %527 = arith.divf %525, %526 : vector<2x32xf32>
    %528 = arith.mulf %527, %431 : vector<2x32xf32>
    %529 = arith.addf %523, %528 : vector<2x32xf32>
    %cst_98 = arith.constant 6.000000e-01 : f32
    %530 = vector.broadcast %cst_98 : f32 to vector<2x32xf32>
    %531 = arith.subf %369, %530 : vector<2x32xf32>
    %cst_99 = arith.constant 4.000000e-01 : f32
    %532 = vector.broadcast %cst_99 : f32 to vector<2x32xf32>
    %533 = arith.divf %531, %532 : vector<2x32xf32>
    %534 = arith.mulf %533, %431 : vector<2x32xf32>
    %cst_100 = arith.constant 1.400000e+00 : f32
    %535 = vector.broadcast %cst_100 : f32 to vector<2x32xf32>
    %536 = arith.subf %535, %369 : vector<2x32xf32>
    %cst_101 = arith.constant 4.000000e-01 : f32
    %537 = vector.broadcast %cst_101 : f32 to vector<2x32xf32>
    %538 = arith.divf %536, %537 : vector<2x32xf32>
    %539 = arith.mulf %538, %438 : vector<2x32xf32>
    %540 = arith.addf %534, %539 : vector<2x32xf32>
    %cst_102 = arith.constant 1.000000e+00 : f32
    %541 = vector.broadcast %cst_102 : f32 to vector<2x32xf32>
    %542 = arith.subf %369, %541 : vector<2x32xf32>
    %cst_103 = arith.constant 4.000000e-01 : f32
    %543 = vector.broadcast %cst_103 : f32 to vector<2x32xf32>
    %544 = arith.divf %542, %543 : vector<2x32xf32>
    %545 = arith.mulf %544, %438 : vector<2x32xf32>
    %cst_104 = arith.constant 1.800000e+00 : f32
    %546 = vector.broadcast %cst_104 : f32 to vector<2x32xf32>
    %547 = arith.subf %546, %369 : vector<2x32xf32>
    %cst_105 = arith.constant 4.000000e-01 : f32
    %548 = vector.broadcast %cst_105 : f32 to vector<2x32xf32>
    %549 = arith.divf %547, %548 : vector<2x32xf32>
    %550 = arith.mulf %549, %445 : vector<2x32xf32>
    %551 = arith.addf %545, %550 : vector<2x32xf32>
    %cst_106 = arith.constant 1.400000e+00 : f32
    %552 = vector.broadcast %cst_106 : f32 to vector<2x32xf32>
    %553 = arith.subf %369, %552 : vector<2x32xf32>
    %cst_107 = arith.constant 4.000000e-01 : f32
    %554 = vector.broadcast %cst_107 : f32 to vector<2x32xf32>
    %555 = arith.divf %553, %554 : vector<2x32xf32>
    %556 = arith.mulf %555, %445 : vector<2x32xf32>
    %cst_108 = arith.constant 2.200000e+00 : f32
    %557 = vector.broadcast %cst_108 : f32 to vector<2x32xf32>
    %558 = arith.subf %557, %369 : vector<2x32xf32>
    %cst_109 = arith.constant 4.000000e-01 : f32
    %559 = vector.broadcast %cst_109 : f32 to vector<2x32xf32>
    %560 = arith.divf %558, %559 : vector<2x32xf32>
    %561 = arith.mulf %560, %452 : vector<2x32xf32>
    %562 = arith.addf %556, %561 : vector<2x32xf32>
    %cst_110 = arith.constant -2.200000e+00 : f32
    %563 = vector.broadcast %cst_110 : f32 to vector<2x32xf32>
    %564 = arith.subf %369, %563 : vector<2x32xf32>
    %cst_111 = arith.constant 8.000000e-01 : f32
    %565 = vector.broadcast %cst_111 : f32 to vector<2x32xf32>
    %566 = arith.divf %564, %565 : vector<2x32xf32>
    %567 = arith.mulf %566, %463 : vector<2x32xf32>
    %cst_112 = arith.constant -1.000000e+00 : f32
    %568 = vector.broadcast %cst_112 : f32 to vector<2x32xf32>
    %569 = arith.subf %568, %369 : vector<2x32xf32>
    %cst_113 = arith.constant 8.000000e-01 : f32
    %570 = vector.broadcast %cst_113 : f32 to vector<2x32xf32>
    %571 = arith.divf %569, %570 : vector<2x32xf32>
    %572 = arith.mulf %571, %474 : vector<2x32xf32>
    %573 = arith.addf %567, %572 : vector<2x32xf32>
    %cst_114 = arith.constant -1.800000e+00 : f32
    %574 = vector.broadcast %cst_114 : f32 to vector<2x32xf32>
    %575 = arith.subf %369, %574 : vector<2x32xf32>
    %cst_115 = arith.constant 8.000000e-01 : f32
    %576 = vector.broadcast %cst_115 : f32 to vector<2x32xf32>
    %577 = arith.divf %575, %576 : vector<2x32xf32>
    %578 = arith.mulf %577, %474 : vector<2x32xf32>
    %cst_116 = arith.constant -6.000000e-01 : f32
    %579 = vector.broadcast %cst_116 : f32 to vector<2x32xf32>
    %580 = arith.subf %579, %369 : vector<2x32xf32>
    %cst_117 = arith.constant 8.000000e-01 : f32
    %581 = vector.broadcast %cst_117 : f32 to vector<2x32xf32>
    %582 = arith.divf %580, %581 : vector<2x32xf32>
    %583 = arith.mulf %582, %485 : vector<2x32xf32>
    %584 = arith.addf %578, %583 : vector<2x32xf32>
    %cst_118 = arith.constant -1.400000e+00 : f32
    %585 = vector.broadcast %cst_118 : f32 to vector<2x32xf32>
    %586 = arith.subf %369, %585 : vector<2x32xf32>
    %cst_119 = arith.constant 8.000000e-01 : f32
    %587 = vector.broadcast %cst_119 : f32 to vector<2x32xf32>
    %588 = arith.divf %586, %587 : vector<2x32xf32>
    %589 = arith.mulf %588, %485 : vector<2x32xf32>
    %cst_120 = arith.constant -2.000000e-01 : f32
    %590 = vector.broadcast %cst_120 : f32 to vector<2x32xf32>
    %591 = arith.subf %590, %369 : vector<2x32xf32>
    %cst_121 = arith.constant 8.000000e-01 : f32
    %592 = vector.broadcast %cst_121 : f32 to vector<2x32xf32>
    %593 = arith.divf %591, %592 : vector<2x32xf32>
    %594 = arith.mulf %593, %496 : vector<2x32xf32>
    %595 = arith.addf %589, %594 : vector<2x32xf32>
    %cst_122 = arith.constant -1.000000e+00 : f32
    %596 = vector.broadcast %cst_122 : f32 to vector<2x32xf32>
    %597 = arith.subf %369, %596 : vector<2x32xf32>
    %cst_123 = arith.constant 8.000000e-01 : f32
    %598 = vector.broadcast %cst_123 : f32 to vector<2x32xf32>
    %599 = arith.divf %597, %598 : vector<2x32xf32>
    %600 = arith.mulf %599, %496 : vector<2x32xf32>
    %cst_124 = arith.constant 2.000000e-01 : f32
    %601 = vector.broadcast %cst_124 : f32 to vector<2x32xf32>
    %602 = arith.subf %601, %369 : vector<2x32xf32>
    %cst_125 = arith.constant 8.000000e-01 : f32
    %603 = vector.broadcast %cst_125 : f32 to vector<2x32xf32>
    %604 = arith.divf %602, %603 : vector<2x32xf32>
    %605 = arith.mulf %604, %507 : vector<2x32xf32>
    %606 = arith.addf %600, %605 : vector<2x32xf32>
    %cst_126 = arith.constant -6.000000e-01 : f32
    %607 = vector.broadcast %cst_126 : f32 to vector<2x32xf32>
    %608 = arith.subf %369, %607 : vector<2x32xf32>
    %cst_127 = arith.constant 8.000000e-01 : f32
    %609 = vector.broadcast %cst_127 : f32 to vector<2x32xf32>
    %610 = arith.divf %608, %609 : vector<2x32xf32>
    %611 = arith.mulf %610, %507 : vector<2x32xf32>
    %cst_128 = arith.constant 6.000000e-01 : f32
    %612 = vector.broadcast %cst_128 : f32 to vector<2x32xf32>
    %613 = arith.subf %612, %369 : vector<2x32xf32>
    %cst_129 = arith.constant 8.000000e-01 : f32
    %614 = vector.broadcast %cst_129 : f32 to vector<2x32xf32>
    %615 = arith.divf %613, %614 : vector<2x32xf32>
    %616 = arith.mulf %615, %518 : vector<2x32xf32>
    %617 = arith.addf %611, %616 : vector<2x32xf32>
    %cst_130 = arith.constant -2.000000e-01 : f32
    %618 = vector.broadcast %cst_130 : f32 to vector<2x32xf32>
    %619 = arith.subf %369, %618 : vector<2x32xf32>
    %cst_131 = arith.constant 8.000000e-01 : f32
    %620 = vector.broadcast %cst_131 : f32 to vector<2x32xf32>
    %621 = arith.divf %619, %620 : vector<2x32xf32>
    %622 = arith.mulf %621, %518 : vector<2x32xf32>
    %cst_132 = arith.constant 1.000000e+00 : f32
    %623 = vector.broadcast %cst_132 : f32 to vector<2x32xf32>
    %624 = arith.subf %623, %369 : vector<2x32xf32>
    %cst_133 = arith.constant 8.000000e-01 : f32
    %625 = vector.broadcast %cst_133 : f32 to vector<2x32xf32>
    %626 = arith.divf %624, %625 : vector<2x32xf32>
    %627 = arith.mulf %626, %529 : vector<2x32xf32>
    %628 = arith.addf %622, %627 : vector<2x32xf32>
    %cst_134 = arith.constant 2.000000e-01 : f32
    %629 = vector.broadcast %cst_134 : f32 to vector<2x32xf32>
    %630 = arith.subf %369, %629 : vector<2x32xf32>
    %cst_135 = arith.constant 8.000000e-01 : f32
    %631 = vector.broadcast %cst_135 : f32 to vector<2x32xf32>
    %632 = arith.divf %630, %631 : vector<2x32xf32>
    %633 = arith.mulf %632, %529 : vector<2x32xf32>
    %cst_136 = arith.constant 1.400000e+00 : f32
    %634 = vector.broadcast %cst_136 : f32 to vector<2x32xf32>
    %635 = arith.subf %634, %369 : vector<2x32xf32>
    %cst_137 = arith.constant 8.000000e-01 : f32
    %636 = vector.broadcast %cst_137 : f32 to vector<2x32xf32>
    %637 = arith.divf %635, %636 : vector<2x32xf32>
    %638 = arith.mulf %637, %540 : vector<2x32xf32>
    %639 = arith.addf %633, %638 : vector<2x32xf32>
    %cst_138 = arith.constant 6.000000e-01 : f32
    %640 = vector.broadcast %cst_138 : f32 to vector<2x32xf32>
    %641 = arith.subf %369, %640 : vector<2x32xf32>
    %cst_139 = arith.constant 8.000000e-01 : f32
    %642 = vector.broadcast %cst_139 : f32 to vector<2x32xf32>
    %643 = arith.divf %641, %642 : vector<2x32xf32>
    %644 = arith.mulf %643, %540 : vector<2x32xf32>
    %cst_140 = arith.constant 1.800000e+00 : f32
    %645 = vector.broadcast %cst_140 : f32 to vector<2x32xf32>
    %646 = arith.subf %645, %369 : vector<2x32xf32>
    %cst_141 = arith.constant 8.000000e-01 : f32
    %647 = vector.broadcast %cst_141 : f32 to vector<2x32xf32>
    %648 = arith.divf %646, %647 : vector<2x32xf32>
    %649 = arith.mulf %648, %551 : vector<2x32xf32>
    %650 = arith.addf %644, %649 : vector<2x32xf32>
    %cst_142 = arith.constant 1.000000e+00 : f32
    %651 = vector.broadcast %cst_142 : f32 to vector<2x32xf32>
    %652 = arith.subf %369, %651 : vector<2x32xf32>
    %cst_143 = arith.constant 8.000000e-01 : f32
    %653 = vector.broadcast %cst_143 : f32 to vector<2x32xf32>
    %654 = arith.divf %652, %653 : vector<2x32xf32>
    %655 = arith.mulf %654, %551 : vector<2x32xf32>
    %cst_144 = arith.constant 2.200000e+00 : f32
    %656 = vector.broadcast %cst_144 : f32 to vector<2x32xf32>
    %657 = arith.subf %656, %369 : vector<2x32xf32>
    %cst_145 = arith.constant 8.000000e-01 : f32
    %658 = vector.broadcast %cst_145 : f32 to vector<2x32xf32>
    %659 = arith.divf %657, %658 : vector<2x32xf32>
    %660 = arith.mulf %659, %562 : vector<2x32xf32>
    %661 = arith.addf %655, %660 : vector<2x32xf32>
    %cst_146 = arith.constant -2.200000e+00 : f32
    %662 = vector.broadcast %cst_146 : f32 to vector<2x32xf32>
    %663 = arith.subf %369, %662 : vector<2x32xf32>
    %cst_147 = arith.constant 1.200000e+00 : f32
    %664 = vector.broadcast %cst_147 : f32 to vector<2x32xf32>
    %665 = arith.divf %663, %664 : vector<2x32xf32>
    %666 = arith.mulf %665, %573 : vector<2x32xf32>
    %cst_148 = arith.constant -6.000000e-01 : f32
    %667 = vector.broadcast %cst_148 : f32 to vector<2x32xf32>
    %668 = arith.subf %667, %369 : vector<2x32xf32>
    %cst_149 = arith.constant 1.200000e+00 : f32
    %669 = vector.broadcast %cst_149 : f32 to vector<2x32xf32>
    %670 = arith.divf %668, %669 : vector<2x32xf32>
    %671 = arith.mulf %670, %584 : vector<2x32xf32>
    %672 = arith.addf %666, %671 : vector<2x32xf32>
    %cst_150 = arith.constant -1.800000e+00 : f32
    %673 = vector.broadcast %cst_150 : f32 to vector<2x32xf32>
    %674 = arith.subf %369, %673 : vector<2x32xf32>
    %cst_151 = arith.constant 1.200000e+00 : f32
    %675 = vector.broadcast %cst_151 : f32 to vector<2x32xf32>
    %676 = arith.divf %674, %675 : vector<2x32xf32>
    %677 = arith.mulf %676, %584 : vector<2x32xf32>
    %cst_152 = arith.constant -2.000000e-01 : f32
    %678 = vector.broadcast %cst_152 : f32 to vector<2x32xf32>
    %679 = arith.subf %678, %369 : vector<2x32xf32>
    %cst_153 = arith.constant 1.200000e+00 : f32
    %680 = vector.broadcast %cst_153 : f32 to vector<2x32xf32>
    %681 = arith.divf %679, %680 : vector<2x32xf32>
    %682 = arith.mulf %681, %595 : vector<2x32xf32>
    %683 = arith.addf %677, %682 : vector<2x32xf32>
    %cst_154 = arith.constant -1.400000e+00 : f32
    %684 = vector.broadcast %cst_154 : f32 to vector<2x32xf32>
    %685 = arith.subf %369, %684 : vector<2x32xf32>
    %cst_155 = arith.constant 1.200000e+00 : f32
    %686 = vector.broadcast %cst_155 : f32 to vector<2x32xf32>
    %687 = arith.divf %685, %686 : vector<2x32xf32>
    %688 = arith.mulf %687, %595 : vector<2x32xf32>
    %cst_156 = arith.constant 2.000000e-01 : f32
    %689 = vector.broadcast %cst_156 : f32 to vector<2x32xf32>
    %690 = arith.subf %689, %369 : vector<2x32xf32>
    %cst_157 = arith.constant 1.200000e+00 : f32
    %691 = vector.broadcast %cst_157 : f32 to vector<2x32xf32>
    %692 = arith.divf %690, %691 : vector<2x32xf32>
    %693 = arith.mulf %692, %606 : vector<2x32xf32>
    %694 = arith.addf %688, %693 : vector<2x32xf32>
    %cst_158 = arith.constant -1.000000e+00 : f32
    %695 = vector.broadcast %cst_158 : f32 to vector<2x32xf32>
    %696 = arith.subf %369, %695 : vector<2x32xf32>
    %cst_159 = arith.constant 1.200000e+00 : f32
    %697 = vector.broadcast %cst_159 : f32 to vector<2x32xf32>
    %698 = arith.divf %696, %697 : vector<2x32xf32>
    %699 = arith.mulf %698, %606 : vector<2x32xf32>
    %cst_160 = arith.constant 6.000000e-01 : f32
    %700 = vector.broadcast %cst_160 : f32 to vector<2x32xf32>
    %701 = arith.subf %700, %369 : vector<2x32xf32>
    %cst_161 = arith.constant 1.200000e+00 : f32
    %702 = vector.broadcast %cst_161 : f32 to vector<2x32xf32>
    %703 = arith.divf %701, %702 : vector<2x32xf32>
    %704 = arith.mulf %703, %617 : vector<2x32xf32>
    %705 = arith.addf %699, %704 : vector<2x32xf32>
    %cst_162 = arith.constant -6.000000e-01 : f32
    %706 = vector.broadcast %cst_162 : f32 to vector<2x32xf32>
    %707 = arith.subf %369, %706 : vector<2x32xf32>
    %cst_163 = arith.constant 1.200000e+00 : f32
    %708 = vector.broadcast %cst_163 : f32 to vector<2x32xf32>
    %709 = arith.divf %707, %708 : vector<2x32xf32>
    %710 = arith.mulf %709, %617 : vector<2x32xf32>
    %cst_164 = arith.constant 1.000000e+00 : f32
    %711 = vector.broadcast %cst_164 : f32 to vector<2x32xf32>
    %712 = arith.subf %711, %369 : vector<2x32xf32>
    %cst_165 = arith.constant 1.200000e+00 : f32
    %713 = vector.broadcast %cst_165 : f32 to vector<2x32xf32>
    %714 = arith.divf %712, %713 : vector<2x32xf32>
    %715 = arith.mulf %714, %628 : vector<2x32xf32>
    %716 = arith.addf %710, %715 : vector<2x32xf32>
    %cst_166 = arith.constant -2.000000e-01 : f32
    %717 = vector.broadcast %cst_166 : f32 to vector<2x32xf32>
    %718 = arith.subf %369, %717 : vector<2x32xf32>
    %cst_167 = arith.constant 1.200000e+00 : f32
    %719 = vector.broadcast %cst_167 : f32 to vector<2x32xf32>
    %720 = arith.divf %718, %719 : vector<2x32xf32>
    %721 = arith.mulf %720, %628 : vector<2x32xf32>
    %cst_168 = arith.constant 1.400000e+00 : f32
    %722 = vector.broadcast %cst_168 : f32 to vector<2x32xf32>
    %723 = arith.subf %722, %369 : vector<2x32xf32>
    %cst_169 = arith.constant 1.200000e+00 : f32
    %724 = vector.broadcast %cst_169 : f32 to vector<2x32xf32>
    %725 = arith.divf %723, %724 : vector<2x32xf32>
    %726 = arith.mulf %725, %639 : vector<2x32xf32>
    %727 = arith.addf %721, %726 : vector<2x32xf32>
    %cst_170 = arith.constant 2.000000e-01 : f32
    %728 = vector.broadcast %cst_170 : f32 to vector<2x32xf32>
    %729 = arith.subf %369, %728 : vector<2x32xf32>
    %cst_171 = arith.constant 1.200000e+00 : f32
    %730 = vector.broadcast %cst_171 : f32 to vector<2x32xf32>
    %731 = arith.divf %729, %730 : vector<2x32xf32>
    %732 = arith.mulf %731, %639 : vector<2x32xf32>
    %cst_172 = arith.constant 1.800000e+00 : f32
    %733 = vector.broadcast %cst_172 : f32 to vector<2x32xf32>
    %734 = arith.subf %733, %369 : vector<2x32xf32>
    %cst_173 = arith.constant 1.200000e+00 : f32
    %735 = vector.broadcast %cst_173 : f32 to vector<2x32xf32>
    %736 = arith.divf %734, %735 : vector<2x32xf32>
    %737 = arith.mulf %736, %650 : vector<2x32xf32>
    %738 = arith.addf %732, %737 : vector<2x32xf32>
    %cst_174 = arith.constant 6.000000e-01 : f32
    %739 = vector.broadcast %cst_174 : f32 to vector<2x32xf32>
    %740 = arith.subf %369, %739 : vector<2x32xf32>
    %cst_175 = arith.constant 1.200000e+00 : f32
    %741 = vector.broadcast %cst_175 : f32 to vector<2x32xf32>
    %742 = arith.divf %740, %741 : vector<2x32xf32>
    %743 = arith.mulf %742, %650 : vector<2x32xf32>
    %cst_176 = arith.constant 2.200000e+00 : f32
    %744 = vector.broadcast %cst_176 : f32 to vector<2x32xf32>
    %745 = arith.subf %744, %369 : vector<2x32xf32>
    %cst_177 = arith.constant 1.200000e+00 : f32
    %746 = vector.broadcast %cst_177 : f32 to vector<2x32xf32>
    %747 = arith.divf %745, %746 : vector<2x32xf32>
    %748 = arith.mulf %747, %661 : vector<2x32xf32>
    %749 = arith.addf %743, %748 : vector<2x32xf32>
    %750 = tpu.concatenate %375, %672, %683, %694, %705, %716, %727, %738, %749 in 1 : vector<2x32xf32>, vector<2x32xf32>, vector<2x32xf32>, vector<2x32xf32>, vector<2x32xf32>, vector<2x32xf32>, vector<2x32xf32>, vector<2x32xf32>, vector<2x32xf32> -> vector<2x288xf32>
    %c0_178 = arith.constant 0 : index
    %c0_179 = arith.constant 0 : index
    %751 = vector.load %arg6[%c0_178, %c0_179] : memref<288x64xf32, #tpu.memory_space<vmem>>, vector<288x64xf32>
    %cst_180 = arith.constant dense<0.000000e+00> : vector<2x64xf32>
    %752 = tpu.matmul %750, %751, %cst_180 {dimension_numbers = #tpu.dot_dimension_numbers<[1], [0], [0], [1], [0, 0, 1, 1], [], []>} : vector<2x288xf32>, vector<288x64xf32>, vector<2x64xf32> -> vector<2x64xf32>
    %753 = arith.negf %752 : vector<2x64xf32>
    %754 = math.exp %753 : vector<2x64xf32>
    %cst_181 = arith.constant 1.000000e+00 : f32
    %755 = vector.broadcast %cst_181 : f32 to vector<2x64xf32>
    %756 = arith.addf %755, %754 : vector<2x64xf32>
    %757 = arith.divf %755, %756 : vector<2x64xf32>
    %758 = arith.mulf %752, %757 : vector<2x64xf32>
    %cst_182 = arith.constant -2.200000e+00 : f32
    %759 = vector.broadcast %cst_182 : f32 to vector<2x64xf32>
    %760 = arith.cmpf oge, %752, %759 : vector<2x64xf32>
    %cst_183 = arith.constant -1.800000e+00 : f32
    %761 = vector.broadcast %cst_183 : f32 to vector<2x64xf32>
    %762 = arith.cmpf olt, %752, %761 : vector<2x64xf32>
    %763 = arith.andi %760, %762 : vector<2x64xi1>
    %764 = arith.extui %763 : vector<2x64xi1> to vector<2x64xi32>
    %765 = arith.sitofp %764 : vector<2x64xi32> to vector<2x64xf32>
    %cst_184 = arith.constant -1.800000e+00 : f32
    %766 = vector.broadcast %cst_184 : f32 to vector<2x64xf32>
    %767 = arith.cmpf oge, %752, %766 : vector<2x64xf32>
    %cst_185 = arith.constant -1.400000e+00 : f32
    %768 = vector.broadcast %cst_185 : f32 to vector<2x64xf32>
    %769 = arith.cmpf olt, %752, %768 : vector<2x64xf32>
    %770 = arith.andi %767, %769 : vector<2x64xi1>
    %771 = arith.extui %770 : vector<2x64xi1> to vector<2x64xi32>
    %772 = arith.sitofp %771 : vector<2x64xi32> to vector<2x64xf32>
    %cst_186 = arith.constant -1.400000e+00 : f32
    %773 = vector.broadcast %cst_186 : f32 to vector<2x64xf32>
    %774 = arith.cmpf oge, %752, %773 : vector<2x64xf32>
    %cst_187 = arith.constant -1.000000e+00 : f32
    %775 = vector.broadcast %cst_187 : f32 to vector<2x64xf32>
    %776 = arith.cmpf olt, %752, %775 : vector<2x64xf32>
    %777 = arith.andi %774, %776 : vector<2x64xi1>
    %778 = arith.extui %777 : vector<2x64xi1> to vector<2x64xi32>
    %779 = arith.sitofp %778 : vector<2x64xi32> to vector<2x64xf32>
    %cst_188 = arith.constant -1.000000e+00 : f32
    %780 = vector.broadcast %cst_188 : f32 to vector<2x64xf32>
    %781 = arith.cmpf oge, %752, %780 : vector<2x64xf32>
    %cst_189 = arith.constant -6.000000e-01 : f32
    %782 = vector.broadcast %cst_189 : f32 to vector<2x64xf32>
    %783 = arith.cmpf olt, %752, %782 : vector<2x64xf32>
    %784 = arith.andi %781, %783 : vector<2x64xi1>
    %785 = arith.extui %784 : vector<2x64xi1> to vector<2x64xi32>
    %786 = arith.sitofp %785 : vector<2x64xi32> to vector<2x64xf32>
    %cst_190 = arith.constant -6.000000e-01 : f32
    %787 = vector.broadcast %cst_190 : f32 to vector<2x64xf32>
    %788 = arith.cmpf oge, %752, %787 : vector<2x64xf32>
    %cst_191 = arith.constant -2.000000e-01 : f32
    %789 = vector.broadcast %cst_191 : f32 to vector<2x64xf32>
    %790 = arith.cmpf olt, %752, %789 : vector<2x64xf32>
    %791 = arith.andi %788, %790 : vector<2x64xi1>
    %792 = arith.extui %791 : vector<2x64xi1> to vector<2x64xi32>
    %793 = arith.sitofp %792 : vector<2x64xi32> to vector<2x64xf32>
    %cst_192 = arith.constant -2.000000e-01 : f32
    %794 = vector.broadcast %cst_192 : f32 to vector<2x64xf32>
    %795 = arith.cmpf oge, %752, %794 : vector<2x64xf32>
    %cst_193 = arith.constant 2.000000e-01 : f32
    %796 = vector.broadcast %cst_193 : f32 to vector<2x64xf32>
    %797 = arith.cmpf olt, %752, %796 : vector<2x64xf32>
    %798 = arith.andi %795, %797 : vector<2x64xi1>
    %799 = arith.extui %798 : vector<2x64xi1> to vector<2x64xi32>
    %800 = arith.sitofp %799 : vector<2x64xi32> to vector<2x64xf32>
    %cst_194 = arith.constant 2.000000e-01 : f32
    %801 = vector.broadcast %cst_194 : f32 to vector<2x64xf32>
    %802 = arith.cmpf oge, %752, %801 : vector<2x64xf32>
    %cst_195 = arith.constant 6.000000e-01 : f32
    %803 = vector.broadcast %cst_195 : f32 to vector<2x64xf32>
    %804 = arith.cmpf olt, %752, %803 : vector<2x64xf32>
    %805 = arith.andi %802, %804 : vector<2x64xi1>
    %806 = arith.extui %805 : vector<2x64xi1> to vector<2x64xi32>
    %807 = arith.sitofp %806 : vector<2x64xi32> to vector<2x64xf32>
    %cst_196 = arith.constant 6.000000e-01 : f32
    %808 = vector.broadcast %cst_196 : f32 to vector<2x64xf32>
    %809 = arith.cmpf oge, %752, %808 : vector<2x64xf32>
    %cst_197 = arith.constant 1.000000e+00 : f32
    %810 = vector.broadcast %cst_197 : f32 to vector<2x64xf32>
    %811 = arith.cmpf olt, %752, %810 : vector<2x64xf32>
    %812 = arith.andi %809, %811 : vector<2x64xi1>
    %813 = arith.extui %812 : vector<2x64xi1> to vector<2x64xi32>
    %814 = arith.sitofp %813 : vector<2x64xi32> to vector<2x64xf32>
    %cst_198 = arith.constant 1.000000e+00 : f32
    %815 = vector.broadcast %cst_198 : f32 to vector<2x64xf32>
    %816 = arith.cmpf oge, %752, %815 : vector<2x64xf32>
    %cst_199 = arith.constant 1.400000e+00 : f32
    %817 = vector.broadcast %cst_199 : f32 to vector<2x64xf32>
    %818 = arith.cmpf olt, %752, %817 : vector<2x64xf32>
    %819 = arith.andi %816, %818 : vector<2x64xi1>
    %820 = arith.extui %819 : vector<2x64xi1> to vector<2x64xi32>
    %821 = arith.sitofp %820 : vector<2x64xi32> to vector<2x64xf32>
    %cst_200 = arith.constant 1.400000e+00 : f32
    %822 = vector.broadcast %cst_200 : f32 to vector<2x64xf32>
    %823 = arith.cmpf oge, %752, %822 : vector<2x64xf32>
    %cst_201 = arith.constant 1.800000e+00 : f32
    %824 = vector.broadcast %cst_201 : f32 to vector<2x64xf32>
    %825 = arith.cmpf olt, %752, %824 : vector<2x64xf32>
    %826 = arith.andi %823, %825 : vector<2x64xi1>
    %827 = arith.extui %826 : vector<2x64xi1> to vector<2x64xi32>
    %828 = arith.sitofp %827 : vector<2x64xi32> to vector<2x64xf32>
    %cst_202 = arith.constant 1.800000e+00 : f32
    %829 = vector.broadcast %cst_202 : f32 to vector<2x64xf32>
    %830 = arith.cmpf oge, %752, %829 : vector<2x64xf32>
    %cst_203 = arith.constant 2.200000e+00 : f32
    %831 = vector.broadcast %cst_203 : f32 to vector<2x64xf32>
    %832 = arith.cmpf olt, %752, %831 : vector<2x64xf32>
    %833 = arith.andi %830, %832 : vector<2x64xi1>
    %834 = arith.extui %833 : vector<2x64xi1> to vector<2x64xi32>
    %835 = arith.sitofp %834 : vector<2x64xi32> to vector<2x64xf32>
    %cst_204 = arith.constant -2.200000e+00 : f32
    %836 = vector.broadcast %cst_204 : f32 to vector<2x64xf32>
    %837 = arith.subf %752, %836 : vector<2x64xf32>
    %cst_205 = arith.constant 4.000000e-01 : f32
    %838 = vector.broadcast %cst_205 : f32 to vector<2x64xf32>
    %839 = arith.divf %837, %838 : vector<2x64xf32>
    %840 = arith.mulf %839, %765 : vector<2x64xf32>
    %cst_206 = arith.constant -1.400000e+00 : f32
    %841 = vector.broadcast %cst_206 : f32 to vector<2x64xf32>
    %842 = arith.subf %841, %752 : vector<2x64xf32>
    %cst_207 = arith.constant 4.000000e-01 : f32
    %843 = vector.broadcast %cst_207 : f32 to vector<2x64xf32>
    %844 = arith.divf %842, %843 : vector<2x64xf32>
    %845 = arith.mulf %844, %772 : vector<2x64xf32>
    %846 = arith.addf %840, %845 : vector<2x64xf32>
    %cst_208 = arith.constant -1.800000e+00 : f32
    %847 = vector.broadcast %cst_208 : f32 to vector<2x64xf32>
    %848 = arith.subf %752, %847 : vector<2x64xf32>
    %cst_209 = arith.constant 4.000000e-01 : f32
    %849 = vector.broadcast %cst_209 : f32 to vector<2x64xf32>
    %850 = arith.divf %848, %849 : vector<2x64xf32>
    %851 = arith.mulf %850, %772 : vector<2x64xf32>
    %cst_210 = arith.constant -1.000000e+00 : f32
    %852 = vector.broadcast %cst_210 : f32 to vector<2x64xf32>
    %853 = arith.subf %852, %752 : vector<2x64xf32>
    %cst_211 = arith.constant 4.000000e-01 : f32
    %854 = vector.broadcast %cst_211 : f32 to vector<2x64xf32>
    %855 = arith.divf %853, %854 : vector<2x64xf32>
    %856 = arith.mulf %855, %779 : vector<2x64xf32>
    %857 = arith.addf %851, %856 : vector<2x64xf32>
    %cst_212 = arith.constant -1.400000e+00 : f32
    %858 = vector.broadcast %cst_212 : f32 to vector<2x64xf32>
    %859 = arith.subf %752, %858 : vector<2x64xf32>
    %cst_213 = arith.constant 4.000000e-01 : f32
    %860 = vector.broadcast %cst_213 : f32 to vector<2x64xf32>
    %861 = arith.divf %859, %860 : vector<2x64xf32>
    %862 = arith.mulf %861, %779 : vector<2x64xf32>
    %cst_214 = arith.constant -6.000000e-01 : f32
    %863 = vector.broadcast %cst_214 : f32 to vector<2x64xf32>
    %864 = arith.subf %863, %752 : vector<2x64xf32>
    %cst_215 = arith.constant 4.000000e-01 : f32
    %865 = vector.broadcast %cst_215 : f32 to vector<2x64xf32>
    %866 = arith.divf %864, %865 : vector<2x64xf32>
    %867 = arith.mulf %866, %786 : vector<2x64xf32>
    %868 = arith.addf %862, %867 : vector<2x64xf32>
    %cst_216 = arith.constant -1.000000e+00 : f32
    %869 = vector.broadcast %cst_216 : f32 to vector<2x64xf32>
    %870 = arith.subf %752, %869 : vector<2x64xf32>
    %cst_217 = arith.constant 4.000000e-01 : f32
    %871 = vector.broadcast %cst_217 : f32 to vector<2x64xf32>
    %872 = arith.divf %870, %871 : vector<2x64xf32>
    %873 = arith.mulf %872, %786 : vector<2x64xf32>
    %cst_218 = arith.constant -2.000000e-01 : f32
    %874 = vector.broadcast %cst_218 : f32 to vector<2x64xf32>
    %875 = arith.subf %874, %752 : vector<2x64xf32>
    %cst_219 = arith.constant 4.000000e-01 : f32
    %876 = vector.broadcast %cst_219 : f32 to vector<2x64xf32>
    %877 = arith.divf %875, %876 : vector<2x64xf32>
    %878 = arith.mulf %877, %793 : vector<2x64xf32>
    %879 = arith.addf %873, %878 : vector<2x64xf32>
    %cst_220 = arith.constant -6.000000e-01 : f32
    %880 = vector.broadcast %cst_220 : f32 to vector<2x64xf32>
    %881 = arith.subf %752, %880 : vector<2x64xf32>
    %cst_221 = arith.constant 4.000000e-01 : f32
    %882 = vector.broadcast %cst_221 : f32 to vector<2x64xf32>
    %883 = arith.divf %881, %882 : vector<2x64xf32>
    %884 = arith.mulf %883, %793 : vector<2x64xf32>
    %cst_222 = arith.constant 2.000000e-01 : f32
    %885 = vector.broadcast %cst_222 : f32 to vector<2x64xf32>
    %886 = arith.subf %885, %752 : vector<2x64xf32>
    %cst_223 = arith.constant 4.000000e-01 : f32
    %887 = vector.broadcast %cst_223 : f32 to vector<2x64xf32>
    %888 = arith.divf %886, %887 : vector<2x64xf32>
    %889 = arith.mulf %888, %800 : vector<2x64xf32>
    %890 = arith.addf %884, %889 : vector<2x64xf32>
    %cst_224 = arith.constant -2.000000e-01 : f32
    %891 = vector.broadcast %cst_224 : f32 to vector<2x64xf32>
    %892 = arith.subf %752, %891 : vector<2x64xf32>
    %cst_225 = arith.constant 4.000000e-01 : f32
    %893 = vector.broadcast %cst_225 : f32 to vector<2x64xf32>
    %894 = arith.divf %892, %893 : vector<2x64xf32>
    %895 = arith.mulf %894, %800 : vector<2x64xf32>
    %cst_226 = arith.constant 6.000000e-01 : f32
    %896 = vector.broadcast %cst_226 : f32 to vector<2x64xf32>
    %897 = arith.subf %896, %752 : vector<2x64xf32>
    %cst_227 = arith.constant 4.000000e-01 : f32
    %898 = vector.broadcast %cst_227 : f32 to vector<2x64xf32>
    %899 = arith.divf %897, %898 : vector<2x64xf32>
    %900 = arith.mulf %899, %807 : vector<2x64xf32>
    %901 = arith.addf %895, %900 : vector<2x64xf32>
    %cst_228 = arith.constant 2.000000e-01 : f32
    %902 = vector.broadcast %cst_228 : f32 to vector<2x64xf32>
    %903 = arith.subf %752, %902 : vector<2x64xf32>
    %cst_229 = arith.constant 4.000000e-01 : f32
    %904 = vector.broadcast %cst_229 : f32 to vector<2x64xf32>
    %905 = arith.divf %903, %904 : vector<2x64xf32>
    %906 = arith.mulf %905, %807 : vector<2x64xf32>
    %cst_230 = arith.constant 1.000000e+00 : f32
    %907 = vector.broadcast %cst_230 : f32 to vector<2x64xf32>
    %908 = arith.subf %907, %752 : vector<2x64xf32>
    %cst_231 = arith.constant 4.000000e-01 : f32
    %909 = vector.broadcast %cst_231 : f32 to vector<2x64xf32>
    %910 = arith.divf %908, %909 : vector<2x64xf32>
    %911 = arith.mulf %910, %814 : vector<2x64xf32>
    %912 = arith.addf %906, %911 : vector<2x64xf32>
    %cst_232 = arith.constant 6.000000e-01 : f32
    %913 = vector.broadcast %cst_232 : f32 to vector<2x64xf32>
    %914 = arith.subf %752, %913 : vector<2x64xf32>
    %cst_233 = arith.constant 4.000000e-01 : f32
    %915 = vector.broadcast %cst_233 : f32 to vector<2x64xf32>
    %916 = arith.divf %914, %915 : vector<2x64xf32>
    %917 = arith.mulf %916, %814 : vector<2x64xf32>
    %cst_234 = arith.constant 1.400000e+00 : f32
    %918 = vector.broadcast %cst_234 : f32 to vector<2x64xf32>
    %919 = arith.subf %918, %752 : vector<2x64xf32>
    %cst_235 = arith.constant 4.000000e-01 : f32
    %920 = vector.broadcast %cst_235 : f32 to vector<2x64xf32>
    %921 = arith.divf %919, %920 : vector<2x64xf32>
    %922 = arith.mulf %921, %821 : vector<2x64xf32>
    %923 = arith.addf %917, %922 : vector<2x64xf32>
    %cst_236 = arith.constant 1.000000e+00 : f32
    %924 = vector.broadcast %cst_236 : f32 to vector<2x64xf32>
    %925 = arith.subf %752, %924 : vector<2x64xf32>
    %cst_237 = arith.constant 4.000000e-01 : f32
    %926 = vector.broadcast %cst_237 : f32 to vector<2x64xf32>
    %927 = arith.divf %925, %926 : vector<2x64xf32>
    %928 = arith.mulf %927, %821 : vector<2x64xf32>
    %cst_238 = arith.constant 1.800000e+00 : f32
    %929 = vector.broadcast %cst_238 : f32 to vector<2x64xf32>
    %930 = arith.subf %929, %752 : vector<2x64xf32>
    %cst_239 = arith.constant 4.000000e-01 : f32
    %931 = vector.broadcast %cst_239 : f32 to vector<2x64xf32>
    %932 = arith.divf %930, %931 : vector<2x64xf32>
    %933 = arith.mulf %932, %828 : vector<2x64xf32>
    %934 = arith.addf %928, %933 : vector<2x64xf32>
    %cst_240 = arith.constant 1.400000e+00 : f32
    %935 = vector.broadcast %cst_240 : f32 to vector<2x64xf32>
    %936 = arith.subf %752, %935 : vector<2x64xf32>
    %cst_241 = arith.constant 4.000000e-01 : f32
    %937 = vector.broadcast %cst_241 : f32 to vector<2x64xf32>
    %938 = arith.divf %936, %937 : vector<2x64xf32>
    %939 = arith.mulf %938, %828 : vector<2x64xf32>
    %cst_242 = arith.constant 2.200000e+00 : f32
    %940 = vector.broadcast %cst_242 : f32 to vector<2x64xf32>
    %941 = arith.subf %940, %752 : vector<2x64xf32>
    %cst_243 = arith.constant 4.000000e-01 : f32
    %942 = vector.broadcast %cst_243 : f32 to vector<2x64xf32>
    %943 = arith.divf %941, %942 : vector<2x64xf32>
    %944 = arith.mulf %943, %835 : vector<2x64xf32>
    %945 = arith.addf %939, %944 : vector<2x64xf32>
    %cst_244 = arith.constant -2.200000e+00 : f32
    %946 = vector.broadcast %cst_244 : f32 to vector<2x64xf32>
    %947 = arith.subf %752, %946 : vector<2x64xf32>
    %cst_245 = arith.constant 8.000000e-01 : f32
    %948 = vector.broadcast %cst_245 : f32 to vector<2x64xf32>
    %949 = arith.divf %947, %948 : vector<2x64xf32>
    %950 = arith.mulf %949, %846 : vector<2x64xf32>
    %cst_246 = arith.constant -1.000000e+00 : f32
    %951 = vector.broadcast %cst_246 : f32 to vector<2x64xf32>
    %952 = arith.subf %951, %752 : vector<2x64xf32>
    %cst_247 = arith.constant 8.000000e-01 : f32
    %953 = vector.broadcast %cst_247 : f32 to vector<2x64xf32>
    %954 = arith.divf %952, %953 : vector<2x64xf32>
    %955 = arith.mulf %954, %857 : vector<2x64xf32>
    %956 = arith.addf %950, %955 : vector<2x64xf32>
    %cst_248 = arith.constant -1.800000e+00 : f32
    %957 = vector.broadcast %cst_248 : f32 to vector<2x64xf32>
    %958 = arith.subf %752, %957 : vector<2x64xf32>
    %cst_249 = arith.constant 8.000000e-01 : f32
    %959 = vector.broadcast %cst_249 : f32 to vector<2x64xf32>
    %960 = arith.divf %958, %959 : vector<2x64xf32>
    %961 = arith.mulf %960, %857 : vector<2x64xf32>
    %cst_250 = arith.constant -6.000000e-01 : f32
    %962 = vector.broadcast %cst_250 : f32 to vector<2x64xf32>
    %963 = arith.subf %962, %752 : vector<2x64xf32>
    %cst_251 = arith.constant 8.000000e-01 : f32
    %964 = vector.broadcast %cst_251 : f32 to vector<2x64xf32>
    %965 = arith.divf %963, %964 : vector<2x64xf32>
    %966 = arith.mulf %965, %868 : vector<2x64xf32>
    %967 = arith.addf %961, %966 : vector<2x64xf32>
    %cst_252 = arith.constant -1.400000e+00 : f32
    %968 = vector.broadcast %cst_252 : f32 to vector<2x64xf32>
    %969 = arith.subf %752, %968 : vector<2x64xf32>
    %cst_253 = arith.constant 8.000000e-01 : f32
    %970 = vector.broadcast %cst_253 : f32 to vector<2x64xf32>
    %971 = arith.divf %969, %970 : vector<2x64xf32>
    %972 = arith.mulf %971, %868 : vector<2x64xf32>
    %cst_254 = arith.constant -2.000000e-01 : f32
    %973 = vector.broadcast %cst_254 : f32 to vector<2x64xf32>
    %974 = arith.subf %973, %752 : vector<2x64xf32>
    %cst_255 = arith.constant 8.000000e-01 : f32
    %975 = vector.broadcast %cst_255 : f32 to vector<2x64xf32>
    %976 = arith.divf %974, %975 : vector<2x64xf32>
    %977 = arith.mulf %976, %879 : vector<2x64xf32>
    %978 = arith.addf %972, %977 : vector<2x64xf32>
    %cst_256 = arith.constant -1.000000e+00 : f32
    %979 = vector.broadcast %cst_256 : f32 to vector<2x64xf32>
    %980 = arith.subf %752, %979 : vector<2x64xf32>
    %cst_257 = arith.constant 8.000000e-01 : f32
    %981 = vector.broadcast %cst_257 : f32 to vector<2x64xf32>
    %982 = arith.divf %980, %981 : vector<2x64xf32>
    %983 = arith.mulf %982, %879 : vector<2x64xf32>
    %cst_258 = arith.constant 2.000000e-01 : f32
    %984 = vector.broadcast %cst_258 : f32 to vector<2x64xf32>
    %985 = arith.subf %984, %752 : vector<2x64xf32>
    %cst_259 = arith.constant 8.000000e-01 : f32
    %986 = vector.broadcast %cst_259 : f32 to vector<2x64xf32>
    %987 = arith.divf %985, %986 : vector<2x64xf32>
    %988 = arith.mulf %987, %890 : vector<2x64xf32>
    %989 = arith.addf %983, %988 : vector<2x64xf32>
    %cst_260 = arith.constant -6.000000e-01 : f32
    %990 = vector.broadcast %cst_260 : f32 to vector<2x64xf32>
    %991 = arith.subf %752, %990 : vector<2x64xf32>
    %cst_261 = arith.constant 8.000000e-01 : f32
    %992 = vector.broadcast %cst_261 : f32 to vector<2x64xf32>
    %993 = arith.divf %991, %992 : vector<2x64xf32>
    %994 = arith.mulf %993, %890 : vector<2x64xf32>
    %cst_262 = arith.constant 6.000000e-01 : f32
    %995 = vector.broadcast %cst_262 : f32 to vector<2x64xf32>
    %996 = arith.subf %995, %752 : vector<2x64xf32>
    %cst_263 = arith.constant 8.000000e-01 : f32
    %997 = vector.broadcast %cst_263 : f32 to vector<2x64xf32>
    %998 = arith.divf %996, %997 : vector<2x64xf32>
    %999 = arith.mulf %998, %901 : vector<2x64xf32>
    %1000 = arith.addf %994, %999 : vector<2x64xf32>
    %cst_264 = arith.constant -2.000000e-01 : f32
    %1001 = vector.broadcast %cst_264 : f32 to vector<2x64xf32>
    %1002 = arith.subf %752, %1001 : vector<2x64xf32>
    %cst_265 = arith.constant 8.000000e-01 : f32
    %1003 = vector.broadcast %cst_265 : f32 to vector<2x64xf32>
    %1004 = arith.divf %1002, %1003 : vector<2x64xf32>
    %1005 = arith.mulf %1004, %901 : vector<2x64xf32>
    %cst_266 = arith.constant 1.000000e+00 : f32
    %1006 = vector.broadcast %cst_266 : f32 to vector<2x64xf32>
    %1007 = arith.subf %1006, %752 : vector<2x64xf32>
    %cst_267 = arith.constant 8.000000e-01 : f32
    %1008 = vector.broadcast %cst_267 : f32 to vector<2x64xf32>
    %1009 = arith.divf %1007, %1008 : vector<2x64xf32>
    %1010 = arith.mulf %1009, %912 : vector<2x64xf32>
    %1011 = arith.addf %1005, %1010 : vector<2x64xf32>
    %cst_268 = arith.constant 2.000000e-01 : f32
    %1012 = vector.broadcast %cst_268 : f32 to vector<2x64xf32>
    %1013 = arith.subf %752, %1012 : vector<2x64xf32>
    %cst_269 = arith.constant 8.000000e-01 : f32
    %1014 = vector.broadcast %cst_269 : f32 to vector<2x64xf32>
    %1015 = arith.divf %1013, %1014 : vector<2x64xf32>
    %1016 = arith.mulf %1015, %912 : vector<2x64xf32>
    %cst_270 = arith.constant 1.400000e+00 : f32
    %1017 = vector.broadcast %cst_270 : f32 to vector<2x64xf32>
    %1018 = arith.subf %1017, %752 : vector<2x64xf32>
    %cst_271 = arith.constant 8.000000e-01 : f32
    %1019 = vector.broadcast %cst_271 : f32 to vector<2x64xf32>
    %1020 = arith.divf %1018, %1019 : vector<2x64xf32>
    %1021 = arith.mulf %1020, %923 : vector<2x64xf32>
    %1022 = arith.addf %1016, %1021 : vector<2x64xf32>
    %cst_272 = arith.constant 6.000000e-01 : f32
    %1023 = vector.broadcast %cst_272 : f32 to vector<2x64xf32>
    %1024 = arith.subf %752, %1023 : vector<2x64xf32>
    %cst_273 = arith.constant 8.000000e-01 : f32
    %1025 = vector.broadcast %cst_273 : f32 to vector<2x64xf32>
    %1026 = arith.divf %1024, %1025 : vector<2x64xf32>
    %1027 = arith.mulf %1026, %923 : vector<2x64xf32>
    %cst_274 = arith.constant 1.800000e+00 : f32
    %1028 = vector.broadcast %cst_274 : f32 to vector<2x64xf32>
    %1029 = arith.subf %1028, %752 : vector<2x64xf32>
    %cst_275 = arith.constant 8.000000e-01 : f32
    %1030 = vector.broadcast %cst_275 : f32 to vector<2x64xf32>
    %1031 = arith.divf %1029, %1030 : vector<2x64xf32>
    %1032 = arith.mulf %1031, %934 : vector<2x64xf32>
    %1033 = arith.addf %1027, %1032 : vector<2x64xf32>
    %cst_276 = arith.constant 1.000000e+00 : f32
    %1034 = vector.broadcast %cst_276 : f32 to vector<2x64xf32>
    %1035 = arith.subf %752, %1034 : vector<2x64xf32>
    %cst_277 = arith.constant 8.000000e-01 : f32
    %1036 = vector.broadcast %cst_277 : f32 to vector<2x64xf32>
    %1037 = arith.divf %1035, %1036 : vector<2x64xf32>
    %1038 = arith.mulf %1037, %934 : vector<2x64xf32>
    %cst_278 = arith.constant 2.200000e+00 : f32
    %1039 = vector.broadcast %cst_278 : f32 to vector<2x64xf32>
    %1040 = arith.subf %1039, %752 : vector<2x64xf32>
    %cst_279 = arith.constant 8.000000e-01 : f32
    %1041 = vector.broadcast %cst_279 : f32 to vector<2x64xf32>
    %1042 = arith.divf %1040, %1041 : vector<2x64xf32>
    %1043 = arith.mulf %1042, %945 : vector<2x64xf32>
    %1044 = arith.addf %1038, %1043 : vector<2x64xf32>
    %cst_280 = arith.constant -2.200000e+00 : f32
    %1045 = vector.broadcast %cst_280 : f32 to vector<2x64xf32>
    %1046 = arith.subf %752, %1045 : vector<2x64xf32>
    %cst_281 = arith.constant 1.200000e+00 : f32
    %1047 = vector.broadcast %cst_281 : f32 to vector<2x64xf32>
    %1048 = arith.divf %1046, %1047 : vector<2x64xf32>
    %1049 = arith.mulf %1048, %956 : vector<2x64xf32>
    %cst_282 = arith.constant -6.000000e-01 : f32
    %1050 = vector.broadcast %cst_282 : f32 to vector<2x64xf32>
    %1051 = arith.subf %1050, %752 : vector<2x64xf32>
    %cst_283 = arith.constant 1.200000e+00 : f32
    %1052 = vector.broadcast %cst_283 : f32 to vector<2x64xf32>
    %1053 = arith.divf %1051, %1052 : vector<2x64xf32>
    %1054 = arith.mulf %1053, %967 : vector<2x64xf32>
    %1055 = arith.addf %1049, %1054 : vector<2x64xf32>
    %cst_284 = arith.constant -1.800000e+00 : f32
    %1056 = vector.broadcast %cst_284 : f32 to vector<2x64xf32>
    %1057 = arith.subf %752, %1056 : vector<2x64xf32>
    %cst_285 = arith.constant 1.200000e+00 : f32
    %1058 = vector.broadcast %cst_285 : f32 to vector<2x64xf32>
    %1059 = arith.divf %1057, %1058 : vector<2x64xf32>
    %1060 = arith.mulf %1059, %967 : vector<2x64xf32>
    %cst_286 = arith.constant -2.000000e-01 : f32
    %1061 = vector.broadcast %cst_286 : f32 to vector<2x64xf32>
    %1062 = arith.subf %1061, %752 : vector<2x64xf32>
    %cst_287 = arith.constant 1.200000e+00 : f32
    %1063 = vector.broadcast %cst_287 : f32 to vector<2x64xf32>
    %1064 = arith.divf %1062, %1063 : vector<2x64xf32>
    %1065 = arith.mulf %1064, %978 : vector<2x64xf32>
    %1066 = arith.addf %1060, %1065 : vector<2x64xf32>
    %cst_288 = arith.constant -1.400000e+00 : f32
    %1067 = vector.broadcast %cst_288 : f32 to vector<2x64xf32>
    %1068 = arith.subf %752, %1067 : vector<2x64xf32>
    %cst_289 = arith.constant 1.200000e+00 : f32
    %1069 = vector.broadcast %cst_289 : f32 to vector<2x64xf32>
    %1070 = arith.divf %1068, %1069 : vector<2x64xf32>
    %1071 = arith.mulf %1070, %978 : vector<2x64xf32>
    %cst_290 = arith.constant 2.000000e-01 : f32
    %1072 = vector.broadcast %cst_290 : f32 to vector<2x64xf32>
    %1073 = arith.subf %1072, %752 : vector<2x64xf32>
    %cst_291 = arith.constant 1.200000e+00 : f32
    %1074 = vector.broadcast %cst_291 : f32 to vector<2x64xf32>
    %1075 = arith.divf %1073, %1074 : vector<2x64xf32>
    %1076 = arith.mulf %1075, %989 : vector<2x64xf32>
    %1077 = arith.addf %1071, %1076 : vector<2x64xf32>
    %cst_292 = arith.constant -1.000000e+00 : f32
    %1078 = vector.broadcast %cst_292 : f32 to vector<2x64xf32>
    %1079 = arith.subf %752, %1078 : vector<2x64xf32>
    %cst_293 = arith.constant 1.200000e+00 : f32
    %1080 = vector.broadcast %cst_293 : f32 to vector<2x64xf32>
    %1081 = arith.divf %1079, %1080 : vector<2x64xf32>
    %1082 = arith.mulf %1081, %989 : vector<2x64xf32>
    %cst_294 = arith.constant 6.000000e-01 : f32
    %1083 = vector.broadcast %cst_294 : f32 to vector<2x64xf32>
    %1084 = arith.subf %1083, %752 : vector<2x64xf32>
    %cst_295 = arith.constant 1.200000e+00 : f32
    %1085 = vector.broadcast %cst_295 : f32 to vector<2x64xf32>
    %1086 = arith.divf %1084, %1085 : vector<2x64xf32>
    %1087 = arith.mulf %1086, %1000 : vector<2x64xf32>
    %1088 = arith.addf %1082, %1087 : vector<2x64xf32>
    %cst_296 = arith.constant -6.000000e-01 : f32
    %1089 = vector.broadcast %cst_296 : f32 to vector<2x64xf32>
    %1090 = arith.subf %752, %1089 : vector<2x64xf32>
    %cst_297 = arith.constant 1.200000e+00 : f32
    %1091 = vector.broadcast %cst_297 : f32 to vector<2x64xf32>
    %1092 = arith.divf %1090, %1091 : vector<2x64xf32>
    %1093 = arith.mulf %1092, %1000 : vector<2x64xf32>
    %cst_298 = arith.constant 1.000000e+00 : f32
    %1094 = vector.broadcast %cst_298 : f32 to vector<2x64xf32>
    %1095 = arith.subf %1094, %752 : vector<2x64xf32>
    %cst_299 = arith.constant 1.200000e+00 : f32
    %1096 = vector.broadcast %cst_299 : f32 to vector<2x64xf32>
    %1097 = arith.divf %1095, %1096 : vector<2x64xf32>
    %1098 = arith.mulf %1097, %1011 : vector<2x64xf32>
    %1099 = arith.addf %1093, %1098 : vector<2x64xf32>
    %cst_300 = arith.constant -2.000000e-01 : f32
    %1100 = vector.broadcast %cst_300 : f32 to vector<2x64xf32>
    %1101 = arith.subf %752, %1100 : vector<2x64xf32>
    %cst_301 = arith.constant 1.200000e+00 : f32
    %1102 = vector.broadcast %cst_301 : f32 to vector<2x64xf32>
    %1103 = arith.divf %1101, %1102 : vector<2x64xf32>
    %1104 = arith.mulf %1103, %1011 : vector<2x64xf32>
    %cst_302 = arith.constant 1.400000e+00 : f32
    %1105 = vector.broadcast %cst_302 : f32 to vector<2x64xf32>
    %1106 = arith.subf %1105, %752 : vector<2x64xf32>
    %cst_303 = arith.constant 1.200000e+00 : f32
    %1107 = vector.broadcast %cst_303 : f32 to vector<2x64xf32>
    %1108 = arith.divf %1106, %1107 : vector<2x64xf32>
    %1109 = arith.mulf %1108, %1022 : vector<2x64xf32>
    %1110 = arith.addf %1104, %1109 : vector<2x64xf32>
    %cst_304 = arith.constant 2.000000e-01 : f32
    %1111 = vector.broadcast %cst_304 : f32 to vector<2x64xf32>
    %1112 = arith.subf %752, %1111 : vector<2x64xf32>
    %cst_305 = arith.constant 1.200000e+00 : f32
    %1113 = vector.broadcast %cst_305 : f32 to vector<2x64xf32>
    %1114 = arith.divf %1112, %1113 : vector<2x64xf32>
    %1115 = arith.mulf %1114, %1022 : vector<2x64xf32>
    %cst_306 = arith.constant 1.800000e+00 : f32
    %1116 = vector.broadcast %cst_306 : f32 to vector<2x64xf32>
    %1117 = arith.subf %1116, %752 : vector<2x64xf32>
    %cst_307 = arith.constant 1.200000e+00 : f32
    %1118 = vector.broadcast %cst_307 : f32 to vector<2x64xf32>
    %1119 = arith.divf %1117, %1118 : vector<2x64xf32>
    %1120 = arith.mulf %1119, %1033 : vector<2x64xf32>
    %1121 = arith.addf %1115, %1120 : vector<2x64xf32>
    %cst_308 = arith.constant 6.000000e-01 : f32
    %1122 = vector.broadcast %cst_308 : f32 to vector<2x64xf32>
    %1123 = arith.subf %752, %1122 : vector<2x64xf32>
    %cst_309 = arith.constant 1.200000e+00 : f32
    %1124 = vector.broadcast %cst_309 : f32 to vector<2x64xf32>
    %1125 = arith.divf %1123, %1124 : vector<2x64xf32>
    %1126 = arith.mulf %1125, %1033 : vector<2x64xf32>
    %cst_310 = arith.constant 2.200000e+00 : f32
    %1127 = vector.broadcast %cst_310 : f32 to vector<2x64xf32>
    %1128 = arith.subf %1127, %752 : vector<2x64xf32>
    %cst_311 = arith.constant 1.200000e+00 : f32
    %1129 = vector.broadcast %cst_311 : f32 to vector<2x64xf32>
    %1130 = arith.divf %1128, %1129 : vector<2x64xf32>
    %1131 = arith.mulf %1130, %1044 : vector<2x64xf32>
    %1132 = arith.addf %1126, %1131 : vector<2x64xf32>
    %1133 = tpu.concatenate %758, %1055, %1066, %1077, %1088, %1099, %1110, %1121, %1132 in 1 : vector<2x64xf32>, vector<2x64xf32>, vector<2x64xf32>, vector<2x64xf32>, vector<2x64xf32>, vector<2x64xf32>, vector<2x64xf32>, vector<2x64xf32>, vector<2x64xf32> -> vector<2x576xf32>
    %c0_312 = arith.constant 0 : index
    %c0_313 = arith.constant 0 : index
    %1134 = vector.load %arg7[%c0_312, %c0_313] : memref<576x1xf32, #tpu.memory_space<vmem>>, vector<576x1xf32>
    %cst_314 = arith.constant dense<0.000000e+00> : vector<2x1xf32>
    %1135 = tpu.matmul %1133, %1134, %cst_314 {dimension_numbers = #tpu.dot_dimension_numbers<[1], [0], [0], [1], [0, 0, 1, 1], [], []>} : vector<2x576xf32>, vector<576x1xf32>, vector<2x1xf32> -> vector<2x1xf32>
    %c0_315 = arith.constant 0 : index
    %c0_316 = arith.constant 0 : index
    %1136 = vector.load %arg8[%c0_315, %c0_316] : memref<2x1xf32, #tpu.memory_space<vmem>>, vector<2x1xf32>
    tpu.vector_store %arg8[%c0_315, %c0_316], %1135 {strides = array<i32>} : memref<2x1xf32, #tpu.memory_space<vmem>>, vector<2x1xf32>,
    return
  }
}

</mosaic_0001>

<llo_original>
// kernel: tpu_custom_call.1
$region0: #{tpu_custom_call.1}
  #allocation0 [shape = 'u32[]', space=smem, size = 0x4, offset = 0x4, fixed_abs, tag = 'smem constant byte address 0x4 - core index']
  #allocation1 [shape = 'u32[72,128]{1,0:T(1,128)}', space=vmem, size = 0x9000, scoped, tag = 'internal scratch']
  %s0 = inlined_call_operand.vmem [shape: f32[8,2,1], index: 0, kind: input, shape index: {}]
  %s1 = inlined_call_operand.vmem [shape: f32[1,128], index: 1, kind: input, shape index: {}]
  %s2 = inlined_call_operand.vmem [shape: f32[32,128], index: 2, kind: input, shape index: {}]
  %s3 = inlined_call_operand.vmem [shape: f32[1,128], index: 3, kind: input, shape index: {}]
  %s4 = inlined_call_operand.vmem [shape: f32[64,128], index: 4, kind: input, shape index: {}]
  %s5 = inlined_call_operand.vmem [shape: f32[1,128], index: 5, kind: input, shape index: {}]
  %s6 = inlined_call_operand.vmem [shape: f32[288,64], index: 6, kind: input, shape index: {}]
  %s7 = inlined_call_operand.vmem [shape: f32[576,1], index: 7, kind: input, shape index: {}]
  %s8 = inlined_call_operand.vmem [shape: f32[2,1], index: 8, kind: output, shape index: {}]
  %s9 = sld [smem:[#allocation0]]
  $region42: #{tpu_custom_call.1} parent=0
    _
  %s11 = ssub.s32 1, %s9
  %s12 = scalar_select 0, %s11, %s9
  // Predicated region
  $region2: #{tpu_custom_call.1} parent=0 // pred_check
    _
  $region3: #{tpu_custom_call.1} parent=0 // pred_check_branch
    %14 = sbr.rel (0) target = $region5
  $region4: #{tpu_custom_call.1} parent=0 // pred_region
    _
  $region5: #{tpu_custom_call.1} parent=0 // pred_fallthru
    _
  // Predicated region
  $region6: #{tpu_custom_call.1} parent=0 // pred_check
    _
  $region7: #{tpu_custom_call.1} parent=0 // pred_check_branch
    %16 = sbr.rel (0) target = $region9
  $region8: #{tpu_custom_call.1} parent=0 // pred_region
    _
  $region9: #{tpu_custom_call.1} parent=0 // pred_fallthru
    _
  // Predicated region
  $region10: #{tpu_custom_call.1} parent=0 // pred_check
    _
  $region11: #{tpu_custom_call.1} parent=0 // pred_check_branch
    %18 = sbr.rel (0) target = $region13
  $region12: #{tpu_custom_call.1} parent=0 // pred_region
    _
  $region13: #{tpu_custom_call.1} parent=0 // pred_fallthru
    _
  // Predicated region
  $region14: #{tpu_custom_call.1} parent=0 // pred_check
    _
  $region15: #{tpu_custom_call.1} parent=0 // pred_check_branch
    %20 = sbr.rel (0) target = $region17
  $region16: #{tpu_custom_call.1} parent=0 // pred_region
    _
  $region17: #{tpu_custom_call.1} parent=0 // pred_fallthru
    _
  // Predicated region
  $region18: #{tpu_custom_call.1} parent=0 // pred_check
    _
  $region19: #{tpu_custom_call.1} parent=0 // pred_check_branch
    %22 = sbr.rel (0) target = $region21
  $region20: #{tpu_custom_call.1} parent=0 // pred_region
    _
  $region21: #{tpu_custom_call.1} parent=0 // pred_fallthru
    _
  // Predicated region
  $region22: #{tpu_custom_call.1} parent=0 // pred_check
    _
  $region23: #{tpu_custom_call.1} parent=0 // pred_check_branch
    %24 = sbr.rel (0) target = $region25
  $region24: #{tpu_custom_call.1} parent=0 // pred_region
    _
  $region25: #{tpu_custom_call.1} parent=0 // pred_fallthru
    _
  // Predicated region
  $region26: #{tpu_custom_call.1} parent=0 // pred_check
    _
  $region27: #{tpu_custom_call.1} parent=0 // pred_check_branch
    %26 = sbr.rel (0) target = $region29
  $region28: #{tpu_custom_call.1} parent=0 // pred_region
    _
  $region29: #{tpu_custom_call.1} parent=0 // pred_fallthru
    _
  // Predicated region
  $region30: #{tpu_custom_call.1} parent=0 // pred_check
    _
  $region31: #{tpu_custom_call.1} parent=0 // pred_check_branch
    %28 = sbr.rel (0) target = $region33
  $region32: #{tpu_custom_call.1} parent=0 // pred_region
    _
  $region33: #{tpu_custom_call.1} parent=0 // pred_fallthru
    _
  %v29 = vld [vmem:[%s0] sm:$0x3]
  %v30 = vld [vmem:[%s0 + $0x2] sm:$0x3]
  %v31 = vld [vmem:[%s0 + $0x4] sm:$0x3]
  %v32 = vld [vmem:[%s0 + $0x6] sm:$0x3]
  %v33 = vld [vmem:[%s0 + $0x8] sm:$0x3]
  %v34 = vld [vmem:[%s0 + $0xa] sm:$0x3]
  %v35 = vld [vmem:[%s0 + $0xc] sm:$0x3]
  %v36 = vld [vmem:[%s0 + $0xe] sm:$0x3]
  %v37 = vld [vmem:[%s1] sm:$0x1]
  %v38 = vld [vmem:[%s2] sm:$0xff]
  %v39 = vld [vmem:[%s2 + $0x8] sm:$0xff]
  %v40 = vld [vmem:[%s2 + $0x10] sm:$0xff]
  %v41 = vld [vmem:[%s2 + $0x18] sm:$0xff]
  %v42 = vld [vmem:[%s3] sm:$0x1]
  %v43 = vld [vmem:[%s4] sm:$0xff]
  %v44 = vld [vmem:[%s4 + $0x8] sm:$0xff]
  %v45 = vld [vmem:[%s4 + $0x10] sm:$0xff]
  %v46 = vld [vmem:[%s4 + $0x18] sm:$0xff]
  %v47 = vld [vmem:[%s4 + $0x20] sm:$0xff]
  %v48 = vld [vmem:[%s4 + $0x28] sm:$0xff]
  %v49 = vld [vmem:[%s4 + $0x30] sm:$0xff]
  %v50 = vld [vmem:[%s4 + $0x38] sm:$0xff]
  %v51 = vld [vmem:[%s5] sm:$0x1]
  %53 = vset.pattern.permute.xlu0 0
  %54 = vperm.xlu0 %53, %v29
  %v55 = vpop.permute.xlu0 %54
  %v58 = vperm.slane %v37, 0
  %v60 = vmul.f32 %v55, %v58
  %vm61 = vcmask 261120
  %v63 = vsel %vm61, 0.0, 0
  %65 = vmatpush.msra.mxu0 0.0
  %66 = vmatpush.msra.mxu0 0.0
  %67 = vmatpush.msra.mxu0 0.0
  %68 = vmatpush.msra.mxu0 0.0
  %69 = vmatpush.msra.mxu0 0.0
  %70 = vmatpush.msra.mxu0 0.0
  %71 = vmatpush.msra.mxu0 0.0
  %72 = vmatpush.msra.mxu0 0.0
  %73 = vmatpush.msra.mxu0 0.0
  %74 = vmatpush.msra.mxu0 0.0
  %75 = vmatpush.msra.mxu0 0.0
  %76 = vmatpush.msra.mxu0 0.0
  %77 = vmatpush.msra.mxu0 %v41
  %78 = vmatpush.msra.mxu0 %v40
  %79 = vmatpush.msra.mxu0 %v39
  %80 = vmatpush.msra.mxu0 %v38
  %81 = vmatmul.f32.gmra.mxu0 %v63
  %v82 = vpop.f32.mrf.mxu0
  %v83 = vadd.f32 0.0, %v82
  %84 = vdwg.mxu0
  %v85 = vadd.f32 %v60, %v83
  %v87 = vperm.slane %v42, 0
  %v89 = vadd.f32 %v85, %v87
  %v90 = vxor.u32 %v89, 2147483648
  %v91 = vmul.f32 %v90, 1.442695
  %v92 = vpow.pop %v91
  %v93 = vadd.f32 %v92, 1.0
  %v94 = vrcp.pop %v93
  %v95 = vmul.f32 %v93, %v94
  %v96 = vsub.f32 1.0, %v95
  %v97 = vmul.f32 %v94, %v96
  %v98 = vadd.f32 %v94, %v97
  %vm99 = vweird.f32 %v93
  %vm100 = vweird.f32 %v94
  %vm101 = vmor %vm99, %vm100
  %v102 = vsel %vm101, %v94, %v98
  %v103 = vand.u32 2147483647, %v93
  %vm104 = vcmp.eq.f32.partialorder %v103, 8.507059e+37
  %v105 = vand.u32 %v93, 2147483648
  %v106 = vor.u32 1.1754944e-38, %v105
  %v107 = vsel %vm104, %v106, %v102
  %v108 = vmul.f32 1.0, %v107
  %v109 = vtanh.pop %v89
  %v110 = vmul.f32 %v108, 0.0
  %112 = vrot.lane.b32.xlu0 %v109, 32
  %v113 = vpop.permute.xlu0 %112
  %v115 = vmul.f32 %v108, %v113
  %117 = vrot.lane.b32.xlu0 %v115, 32
  %v118 = vpop.permute.xlu0 %117
  %v120 = vadd.f32 %v110, %v118
  %v121 = vtanh.pop %v120
  %123 = vrot.lane.b32.xlu0 %v121, 32
  %v124 = vpop.permute.xlu0 %123
  %v126 = vmul.f32 %v108, %v124
  %128 = vrot.lane.b32.xlu0 %v126, 64
  %v129 = vpop.permute.xlu0 %128
  %v131 = vsel %vm61, %v129, 0.0
  %v133 = vperm.slane %v51, 0
  %vm135 = vcmask 523264
  %v137 = vsel %vm135, %v131, 0
  %139 = vmatpush.msra.mxu0 0.0
  %140 = vmatpush.msra.mxu0 0.0
  %141 = vmatpush.msra.mxu0 0.0
  %142 = vmatpush.msra.mxu0 0.0
  %143 = vmatpush.msra.mxu0 0.0
  %144 = vmatpush.msra.mxu0 0.0
  %145 = vmatpush.msra.mxu0 0.0
  %146 = vmatpush.msra.mxu0 0.0
  %147 = vmatpush.msra.mxu0 %v50
  %148 = vmatpush.msra.mxu0 %v49
  %149 = vmatpush.msra.mxu0 %v48
  %150 = vmatpush.msra.mxu0 %v47
  %151 = vmatpush.msra.mxu0 %v46
  %152 = vmatpush.msra.mxu0 %v45
  %153 = vmatpush.msra.mxu0 %v44
  %154 = vmatpush.msra.mxu0 %v43
  %155 = vmatmul.f32.gmra.mxu0 %v137
  %v156 = vpop.f32.mrf.mxu0
  %v157 = vadd.f32 %v133, %v156
  %158 = vdwg.mxu0
  %v159 = vxor.u32 %v157, 2147483648
  %v160 = vmul.f32 %v159, 1.442695
  %v161 = vpow.pop %v160
  %v162 = vadd.f32 %v161, 1.0
  %v163 = vrcp.pop %v162
  %v164 = vmul.f32 %v162, %v163
  %v165 = vsub.f32 1.0, %v164
  %v166 = vmul.f32 %v163, %v165
  %v167 = vadd.f32 %v163, %v166
  %vm168 = vweird.f32 %v162
  %vm169 = vweird.f32 %v163
  %vm170 = vmor %vm168, %vm169
  %v171 = vsel %vm170, %v163, %v167
  %v172 = vand.u32 2147483647, %v162
  %vm173 = vcmp.eq.f32.partialorder %v172, 8.507059e+37
  %v174 = vand.u32 %v162, 2147483648
  %v175 = vor.u32 1.1754944e-38, %v174
  %v176 = vsel %vm173, %v175, %v171
  %v177 = vmul.f32 1.0, %v176
  %v178 = vtanh.pop %v157
  %v179 = vmul.f32 %v177, 0.0
  %181 = vrot.lane.b32.xlu0 %v178, 32
  %v182 = vpop.permute.xlu0 %181
  %v184 = vmul.f32 %v177, %v182
  %186 = vrot.lane.b32.xlu0 %v184, 32
  %v187 = vpop.permute.xlu0 %186
  %v189 = vadd.f32 %v179, %v187
  %v190 = vtanh.pop %v189
  %192 = vrot.lane.b32.xlu0 %v190, 32
  %v193 = vpop.permute.xlu0 %192
  %v195 = vmul.f32 %v177, %v193
  %197 = vset.pattern.permute.xlu0 0
  %198 = vperm.xlu0 %197, %v30
  %v199 = vpop.permute.xlu0 %198
  %v201 = vmul.f32 %v199, %v58
  %v202 = vsel %vm61, %v129, 0
  %204 = vmatpush.msra.mxu0 0.0
  %205 = vmatpush.msra.mxu0 0.0
  %206 = vmatpush.msra.mxu0 0.0
  %207 = vmatpush.msra.mxu0 0.0
  %208 = vmatpush.msra.mxu0 0.0
  %209 = vmatpush.msra.mxu0 0.0
  %210 = vmatpush.msra.mxu0 0.0
  %211 = vmatpush.msra.mxu0 0.0
  %212 = vmatpush.msra.mxu0 0.0
  %213 = vmatpush.msra.mxu0 0.0
  %214 = vmatpush.msra.mxu0 0.0
  %215 = vmatpush.msra.mxu0 0.0
  %216 = vmatpush.msra.mxu0 %v41
  %217 = vmatpush.msra.mxu0 %v40
  %218 = vmatpush.msra.mxu0 %v39
  %219 = vmatpush.msra.mxu0 %v38
  %220 = vmatmul.f32.gmra.mxu0 %v202
  %v221 = vpop.f32.mrf.mxu0
  %v222 = vadd.f32 0.0, %v221
  %223 = vdwg.mxu0
  %v224 = vadd.f32 %v201, %v222
  %v225 = vadd.f32 %v224, %v87
  %v226 = vxor.u32 %v225, 2147483648
  %v227 = vmul.f32 %v226, 1.442695
  %v228 = vpow.pop %v227
  %v229 = vadd.f32 %v228, 1.0
  %v230 = vrcp.pop %v229
  %v231 = vmul.f32 %v229, %v230
  %v232 = vsub.f32 1.0, %v231
  %v233 = vmul.f32 %v230, %v232
  %v234 = vadd.f32 %v230, %v233
  %vm235 = vweird.f32 %v229
  %vm236 = vweird.f32 %v230
  %vm237 = vmor %vm235, %vm236
  %v238 = vsel %vm237, %v230, %v234
  %v239 = vand.u32 2147483647, %v229
  %vm240 = vcmp.eq.f32.partialorder %v239, 8.507059e+37
  %v241 = vand.u32 %v229, 2147483648
  %v242 = vor.u32 1.1754944e-38, %v241
  %v243 = vsel %vm240, %v242, %v238
  %v244 = vmul.f32 1.0, %v243
  %v245 = vtanh.pop %v225
  %v246 = vmul.f32 %v244, %v120
  %248 = vrot.lane.b32.xlu0 %v245, 32
  %v249 = vpop.permute.xlu0 %248
  %v251 = vmul.f32 %v244, %v249
  %253 = vrot.lane.b32.xlu0 %v251, 32
  %v254 = vpop.permute.xlu0 %253
  %v256 = vadd.f32 %v246, %v254
  %v257 = vtanh.pop %v256
  %259 = vrot.lane.b32.xlu0 %v257, 32
  %v260 = vpop.permute.xlu0 %259
  %v262 = vmul.f32 %v244, %v260
  %264 = vrot.lane.b32.xlu0 %v262, 64
  %v265 = vpop.permute.xlu0 %264
  %268 = vrot.lane.b32.xlu0 %v195, 96
  %v269 = vpop.permute.xlu0 %268
  %v271 = vsel %vm61, %v265, %v269
  %v273 = vsel %vm135, %v271, 0
  %275 = vmatpush.msra.mxu0 0.0
  %276 = vmatpush.msra.mxu0 0.0
  %277 = vmatpush.msra.mxu0 0.0
  %278 = vmatpush.msra.mxu0 0.0
  %279 = vmatpush.msra.mxu0 0.0
  %280 = vmatpush.msra.mxu0 0.0
  %281 = vmatpush.msra.mxu0 0.0
  %282 = vmatpush.msra.mxu0 0.0
  %283 = vmatpush.msra.mxu0 %v50
  %284 = vmatpush.msra.mxu0 %v49
  %285 = vmatpush.msra.mxu0 %v48
  %286 = vmatpush.msra.mxu0 %v47
  %287 = vmatpush.msra.mxu0 %v46
  %288 = vmatpush.msra.mxu0 %v45
  %289 = vmatpush.msra.mxu0 %v44
  %290 = vmatpush.msra.mxu0 %v43
  %291 = vmatmul.f32.gmra.mxu0 %v273
  %v292 = vpop.f32.mrf.mxu0
  %v293 = vadd.f32 %v133, %v292
  %294 = vdwg.mxu0
  %v295 = vxor.u32 %v293, 2147483648
  %v296 = vmul.f32 %v295, 1.442695
  %v297 = vpow.pop %v296
  %v298 = vadd.f32 %v297, 1.0
  %v299 = vrcp.pop %v298
  %v300 = vmul.f32 %v298, %v299
  %v301 = vsub.f32 1.0, %v300
  %v302 = vmul.f32 %v299, %v301
  %v303 = vadd.f32 %v299, %v302
  %vm304 = vweird.f32 %v298
  %vm305 = vweird.f32 %v299
  %vm306 = vmor %vm304, %vm305
  %v307 = vsel %vm306, %v299, %v303
  %v308 = vand.u32 2147483647, %v298
  %vm309 = vcmp.eq.f32.partialorder %v308, 8.507059e+37
  %v310 = vand.u32 %v298, 2147483648
  %v311 = vor.u32 1.1754944e-38, %v310
  %v312 = vsel %vm309, %v311, %v307
  %v313 = vmul.f32 1.0, %v312
  %v314 = vtanh.pop %v293
  %v315 = vmul.f32 %v313, %v189
  %317 = vrot.lane.b32.xlu0 %v314, 32
  %v318 = vpop.permute.xlu0 %317
  %v320 = vmul.f32 %v313, %v318
  %322 = vrot.lane.b32.xlu0 %v320, 32
  %v323 = vpop.permute.xlu0 %322
  %v325 = vadd.f32 %v315, %v323
  %v326 = vtanh.pop %v325
  %328 = vrot.lane.b32.xlu0 %v326, 32
  %v329 = vpop.permute.xlu0 %328
  %v331 = vmul.f32 %v313, %v329
  %333 = vset.pattern.permute.xlu0 0
  %334 = vperm.xlu0 %333, %v31
  %v335 = vpop.permute.xlu0 %334
  %v337 = vmul.f32 %v335, %v58
  %v338 = vsel %vm61, %v265, 0
  %340 = vmatpush.msra.mxu0 0.0
  %341 = vmatpush.msra.mxu0 0.0
  %342 = vmatpush.msra.mxu0 0.0
  %343 = vmatpush.msra.mxu0 0.0
  %344 = vmatpush.msra.mxu0 0.0
  %345 = vmatpush.msra.mxu0 0.0
  %346 = vmatpush.msra.mxu0 0.0
  %347 = vmatpush.msra.mxu0 0.0
  %348 = vmatpush.msra.mxu0 0.0
  %349 = vmatpush.msra.mxu0 0.0
  %350 = vmatpush.msra.mxu0 0.0
  %351 = vmatpush.msra.mxu0 0.0
  %352 = vmatpush.msra.mxu0 %v41
  %353 = vmatpush.msra.mxu0 %v40
  %354 = vmatpush.msra.mxu0 %v39
  %355 = vmatpush.msra.mxu0 %v38
  %356 = vmatmul.f32.gmra.mxu0 %v338
  %v357 = vpop.f32.mrf.mxu0
  %v358 = vadd.f32 0.0, %v357
  %359 = vdwg.mxu0
  %v360 = vadd.f32 %v337, %v358
  %v361 = vadd.f32 %v360, %v87
  %v362 = vxor.u32 %v361, 2147483648
  %v363 = vmul.f32 %v362, 1.442695
  %v364 = vpow.pop %v363
  %v365 = vadd.f32 %v364, 1.0
  %v366 = vrcp.pop %v365
  %v367 = vmul.f32 %v365, %v366
  %v368 = vsub.f32 1.0, %v367
  %v369 = vmul.f32 %v366, %v368
  %v370 = vadd.f32 %v366, %v369
  %vm371 = vweird.f32 %v365
  %vm372 = vweird.f32 %v366
  %vm373 = vmor %vm371, %vm372
  %v374 = vsel %vm373, %v366, %v370
  %v375 = vand.u32 2147483647, %v365
  %vm376 = vcmp.eq.f32.partialorder %v375, 8.507059e+37
  %v377 = vand.u32 %v365, 2147483648
  %v378 = vor.u32 1.1754944e-38, %v377
  %v379 = vsel %vm376, %v378, %v374
  %v380 = vmul.f32 1.0, %v379
  %v381 = vtanh.pop %v361
  %v382 = vmul.f32 %v380, %v256
  %384 = vrot.lane.b32.xlu0 %v381, 32
  %v385 = vpop.permute.xlu0 %384
  %v387 = vmul.f32 %v380, %v385
  %389 = vrot.lane.b32.xlu0 %v387, 32
  %v390 = vpop.permute.xlu0 %389
  %v392 = vadd.f32 %v382, %v390
  %v393 = vtanh.pop %v392
  %395 = vrot.lane.b32.xlu0 %v393, 32
  %v396 = vpop.permute.xlu0 %395
  %v398 = vmul.f32 %v380, %v396
  %400 = vrot.lane.b32.xlu0 %v398, 64
  %v401 = vpop.permute.xlu0 %400
  %404 = vrot.lane.b32.xlu0 %v331, 96
  %v405 = vpop.permute.xlu0 %404
  %v407 = vsel %vm61, %v401, %v405
  %v409 = vsel %vm135, %v407, 0
  %411 = vmatpush.msra.mxu0 0.0
  %412 = vmatpush.msra.mxu0 0.0
  %413 = vmatpush.msra.mxu0 0.0
  %414 = vmatpush.msra.mxu0 0.0
  %415 = vmatpush.msra.mxu0 0.0
  %416 = vmatpush.msra.mxu0 0.0
  %417 = vmatpush.msra.mxu0 0.0
  %418 = vmatpush.msra.mxu0 0.0
  %419 = vmatpush.msra.mxu0 %v50
  %420 = vmatpush.msra.mxu0 %v49
  %421 = vmatpush.msra.mxu0 %v48
  %422 = vmatpush.msra.mxu0 %v47
  %423 = vmatpush.msra.mxu0 %v46
  %424 = vmatpush.msra.mxu0 %v45
  %425 = vmatpush.msra.mxu0 %v44
  %426 = vmatpush.msra.mxu0 %v43
  %427 = vmatmul.f32.gmra.mxu0 %v409
  %v428 = vpop.f32.mrf.mxu0
  %v429 = vadd.f32 %v133, %v428
  %430 = vdwg.mxu0
  %v431 = vxor.u32 %v429, 2147483648
  %v432 = vmul.f32 %v431, 1.442695
  %v433 = vpow.pop %v432
  %v434 = vadd.f32 %v433, 1.0
  %v435 = vrcp.pop %v434
  %v436 = vmul.f32 %v434, %v435
  %v437 = vsub.f32 1.0, %v436
  %v438 = vmul.f32 %v435, %v437
  %v439 = vadd.f32 %v435, %v438
  %vm440 = vweird.f32 %v434
  %vm441 = vweird.f32 %v435
  %vm442 = vmor %vm440, %vm441
  %v443 = vsel %vm442, %v435, %v439
  %v444 = vand.u32 2147483647, %v434
  %vm445 = vcmp.eq.f32.partialorder %v444, 8.507059e+37
  %v446 = vand.u32 %v434, 2147483648
  %v447 = vor.u32 1.1754944e-38, %v446
  %v448 = vsel %vm445, %v447, %v443
  %v449 = vmul.f32 1.0, %v448
  %v450 = vtanh.pop %v429
  %v451 = vmul.f32 %v449, %v325
  %453 = vrot.lane.b32.xlu0 %v450, 32
  %v454 = vpop.permute.xlu0 %453
  %v456 = vmul.f32 %v449, %v454
  %458 = vrot.lane.b32.xlu0 %v456, 32
  %v459 = vpop.permute.xlu0 %458
  %v461 = vadd.f32 %v451, %v459
  %v462 = vtanh.pop %v461
  %464 = vrot.lane.b32.xlu0 %v462, 32
  %v465 = vpop.permute.xlu0 %464
  %v467 = vmul.f32 %v449, %v465
  %469 = vset.pattern.permute.xlu0 0
  %470 = vperm.xlu0 %469, %v32
  %v471 = vpop.permute.xlu0 %470
  %v473 = vmul.f32 %v471, %v58
  %v474 = vsel %vm61, %v401, 0
  %476 = vmatpush.msra.mxu0 0.0
  %477 = vmatpush.msra.mxu0 0.0
  %478 = vmatpush.msra.mxu0 0.0
  %479 = vmatpush.msra.mxu0 0.0
  %480 = vmatpush.msra.mxu0 0.0
  %481 = vmatpush.msra.mxu0 0.0
  %482 = vmatpush.msra.mxu0 0.0
  %483 = vmatpush.msra.mxu0 0.0
  %484 = vmatpush.msra.mxu0 0.0
  %485 = vmatpush.msra.mxu0 0.0
  %486 = vmatpush.msra.mxu0 0.0
  %487 = vmatpush.msra.mxu0 0.0
  %488 = vmatpush.msra.mxu0 %v41
  %489 = vmatpush.msra.mxu0 %v40
  %490 = vmatpush.msra.mxu0 %v39
  %491 = vmatpush.msra.mxu0 %v38
  %492 = vmatmul.f32.gmra.mxu0 %v474
  %v493 = vpop.f32.mrf.mxu0
  %v494 = vadd.f32 0.0, %v493
  %495 = vdwg.mxu0
  %v496 = vadd.f32 %v473, %v494
  %v497 = vadd.f32 %v496, %v87
  %v498 = vxor.u32 %v497, 2147483648
  %v499 = vmul.f32 %v498, 1.442695
  %v500 = vpow.pop %v499
  %v501 = vadd.f32 %v500, 1.0
  %v502 = vrcp.pop %v501
  %v503 = vmul.f32 %v501, %v502
  %v504 = vsub.f32 1.0, %v503
  %v505 = vmul.f32 %v502, %v504
  %v506 = vadd.f32 %v502, %v505
  %vm507 = vweird.f32 %v501
  %vm508 = vweird.f32 %v502
  %vm509 = vmor %vm507, %vm508
  %v510 = vsel %vm509, %v502, %v506
  %v511 = vand.u32 2147483647, %v501
  %vm512 = vcmp.eq.f32.partialorder %v511, 8.507059e+37
  %v513 = vand.u32 %v501, 2147483648
  %v514 = vor.u32 1.1754944e-38, %v513
  %v515 = vsel %vm512, %v514, %v510
  %v516 = vmul.f32 1.0, %v515
  %v517 = vtanh.pop %v497
  %v518 = vmul.f32 %v516, %v392
  %520 = vrot.lane.b32.xlu0 %v517, 32
  %v521 = vpop.permute.xlu0 %520
  %v523 = vmul.f32 %v516, %v521
  %525 = vrot.lane.b32.xlu0 %v523, 32
  %v526 = vpop.permute.xlu0 %525
  %v528 = vadd.f32 %v518, %v526
  %v529 = vtanh.pop %v528
  %531 = vrot.lane.b32.xlu0 %v529, 32
  %v532 = vpop.permute.xlu0 %531
  %v534 = vmul.f32 %v516, %v532
  %536 = vrot.lane.b32.xlu0 %v534, 64
  %v537 = vpop.permute.xlu0 %536
  %540 = vrot.lane.b32.xlu0 %v467, 96
  %v541 = vpop.permute.xlu0 %540
  %v543 = vsel %vm61, %v537, %v541
  %v545 = vsel %vm135, %v543, 0
  %547 = vmatpush.msra.mxu0 0.0
  %548 = vmatpush.msra.mxu0 0.0
  %549 = vmatpush.msra.mxu0 0.0
  %550 = vmatpush.msra.mxu0 0.0
  %551 = vmatpush.msra.mxu0 0.0
  %552 = vmatpush.msra.mxu0 0.0
  %553 = vmatpush.msra.mxu0 0.0
  %554 = vmatpush.msra.mxu0 0.0
  %555 = vmatpush.msra.mxu0 %v50
  %556 = vmatpush.msra.mxu0 %v49
  %557 = vmatpush.msra.mxu0 %v48
  %558 = vmatpush.msra.mxu0 %v47
  %559 = vmatpush.msra.mxu0 %v46
  %560 = vmatpush.msra.mxu0 %v45
  %561 = vmatpush.msra.mxu0 %v44
  %562 = vmatpush.msra.mxu0 %v43
  %563 = vmatmul.f32.gmra.mxu0 %v545
  %v564 = vpop.f32.mrf.mxu0
  %v565 = vadd.f32 %v133, %v564
  %566 = vdwg.mxu0
  %v567 = vxor.u32 %v565, 2147483648
  %v568 = vmul.f32 %v567, 1.442695
  %v569 = vpow.pop %v568
  %v570 = vadd.f32 %v569, 1.0
  %v571 = vrcp.pop %v570
  %v572 = vmul.f32 %v570, %v571
  %v573 = vsub.f32 1.0, %v572
  %v574 = vmul.f32 %v571, %v573
  %v575 = vadd.f32 %v571, %v574
  %vm576 = vweird.f32 %v570
  %vm577 = vweird.f32 %v571
  %vm578 = vmor %vm576, %vm577
  %v579 = vsel %vm578, %v571, %v575
  %v580 = vand.u32 2147483647, %v570
  %vm581 = vcmp.eq.f32.partialorder %v580, 8.507059e+37
  %v582 = vand.u32 %v570, 2147483648
  %v583 = vor.u32 1.1754944e-38, %v582
  %v584 = vsel %vm581, %v583, %v579
  %v585 = vmul.f32 1.0, %v584
  %v586 = vtanh.pop %v565
  %v587 = vmul.f32 %v585, %v461
  %589 = vrot.lane.b32.xlu0 %v586, 32
  %v590 = vpop.permute.xlu0 %589
  %v592 = vmul.f32 %v585, %v590
  %594 = vrot.lane.b32.xlu0 %v592, 32
  %v595 = vpop.permute.xlu0 %594
  %v597 = vadd.f32 %v587, %v595
  %v598 = vtanh.pop %v597
  %600 = vrot.lane.b32.xlu0 %v598, 32
  %v601 = vpop.permute.xlu0 %600
  %v603 = vmul.f32 %v585, %v601
  %605 = vset.pattern.permute.xlu0 0
  %606 = vperm.xlu0 %605, %v33
  %v607 = vpop.permute.xlu0 %606
  %v609 = vmul.f32 %v607, %v58
  %v610 = vsel %vm61, %v537, 0
  %612 = vmatpush.msra.mxu0 0.0
  %613 = vmatpush.msra.mxu0 0.0
  %614 = vmatpush.msra.mxu0 0.0
  %615 = vmatpush.msra.mxu0 0.0
  %616 = vmatpush.msra.mxu0 0.0
  %617 = vmatpush.msra.mxu0 0.0
  %618 = vmatpush.msra.mxu0 0.0
  %619 = vmatpush.msra.mxu0 0.0
  %620 = vmatpush.msra.mxu0 0.0
  %621 = vmatpush.msra.mxu0 0.0
  %622 = vmatpush.msra.mxu0 0.0
  %623 = vmatpush.msra.mxu0 0.0
  %624 = vmatpush.msra.mxu0 %v41
  %625 = vmatpush.msra.mxu0 %v40
  %626 = vmatpush.msra.mxu0 %v39
  %627 = vmatpush.msra.mxu0 %v38
  %628 = vmatmul.f32.gmra.mxu0 %v610
  %v629 = vpop.f32.mrf.mxu0
  %v630 = vadd.f32 0.0, %v629
  %631 = vdwg.mxu0
  %v632 = vadd.f32 %v609, %v630
  %v633 = vadd.f32 %v632, %v87
  %v634 = vxor.u32 %v633, 2147483648
  %v635 = vmul.f32 %v634, 1.442695
  %v636 = vpow.pop %v635
  %v637 = vadd.f32 %v636, 1.0
  %v638 = vrcp.pop %v637
  %v639 = vmul.f32 %v637, %v638
  %v640 = vsub.f32 1.0, %v639
  %v641 = vmul.f32 %v638, %v640
  %v642 = vadd.f32 %v638, %v641
  %vm643 = vweird.f32 %v637
  %vm644 = vweird.f32 %v638
  %vm645 = vmor %vm643, %vm644
  %v646 = vsel %vm645, %v638, %v642
  %v647 = vand.u32 2147483647, %v637
  %vm648 = vcmp.eq.f32.partialorder %v647, 8.507059e+37
  %v649 = vand.u32 %v637, 2147483648
  %v650 = vor.u32 1.1754944e-38, %v649
  %v651 = vsel %vm648, %v650, %v646
  %v652 = vmul.f32 1.0, %v651
  %v653 = vtanh.pop %v633
  %v654 = vmul.f32 %v652, %v528
  %656 = vrot.lane.b32.xlu0 %v653, 32
  %v657 = vpop.permute.xlu0 %656
  %v659 = vmul.f32 %v652, %v657
  %661 = vrot.lane.b32.xlu0 %v659, 32
  %v662 = vpop.permute.xlu0 %661
  %v664 = vadd.f32 %v654, %v662
  %v665 = vtanh.pop %v664
  %667 = vrot.lane.b32.xlu0 %v665, 32
  %v668 = vpop.permute.xlu0 %667
  %v670 = vmul.f32 %v652, %v668
  %672 = vrot.lane.b32.xlu0 %v670, 64
  %v673 = vpop.permute.xlu0 %672
  %676 = vrot.lane.b32.xlu0 %v603, 96
  %v677 = vpop.permute.xlu0 %676
  %v679 = vsel %vm61, %v673, %v677
  %v681 = vsel %vm135, %v679, 0
  %683 = vmatpush.msra.mxu0 0.0
  %684 = vmatpush.msra.mxu0 0.0
  %685 = vmatpush.msra.mxu0 0.0
  %686 = vmatpush.msra.mxu0 0.0
  %687 = vmatpush.msra.mxu0 0.0
  %688 = vmatpush.msra.mxu0 0.0
  %689 = vmatpush.msra.mxu0 0.0
  %690 = vmatpush.msra.mxu0 0.0
  %691 = vmatpush.msra.mxu0 %v50
  %692 = vmatpush.msra.mxu0 %v49
  %693 = vmatpush.msra.mxu0 %v48
  %694 = vmatpush.msra.mxu0 %v47
  %695 = vmatpush.msra.mxu0 %v46
  %696 = vmatpush.msra.mxu0 %v45
  %697 = vmatpush.msra.mxu0 %v44
  %698 = vmatpush.msra.mxu0 %v43
  %699 = vmatmul.f32.gmra.mxu0 %v681
  %v700 = vpop.f32.mrf.mxu0
  %v701 = vadd.f32 %v133, %v700
  %702 = vdwg.mxu0
  %v703 = vxor.u32 %v701, 2147483648
  %v704 = vmul.f32 %v703, 1.442695
  %v705 = vpow.pop %v704
  %v706 = vadd.f32 %v705, 1.0
  %v707 = vrcp.pop %v706
  %v708 = vmul.f32 %v706, %v707
  %v709 = vsub.f32 1.0, %v708
  %v710 = vmul.f32 %v707, %v709
  %v711 = vadd.f32 %v707, %v710
  %vm712 = vweird.f32 %v706
  %vm713 = vweird.f32 %v707
  %vm714 = vmor %vm712, %vm713
  %v715 = vsel %vm714, %v707, %v711
  %v716 = vand.u32 2147483647, %v706
  %vm717 = vcmp.eq.f32.partialorder %v716, 8.507059e+37
  %v718 = vand.u32 %v706, 2147483648
  %v719 = vor.u32 1.1754944e-38, %v718
  %v720 = vsel %vm717, %v719, %v715
  %v721 = vmul.f32 1.0, %v720
  %v722 = vtanh.pop %v701
  %v723 = vmul.f32 %v721, %v597
  %725 = vrot.lane.b32.xlu0 %v722, 32
  %v726 = vpop.permute.xlu0 %725
  %v728 = vmul.f32 %v721, %v726
  %730 = vrot.lane.b32.xlu0 %v728, 32
  %v731 = vpop.permute.xlu0 %730
  %v733 = vadd.f32 %v723, %v731
  %v734 = vtanh.pop %v733
  %736 = vrot.lane.b32.xlu0 %v734, 32
  %v737 = vpop.permute.xlu0 %736
  %v739 = vmul.f32 %v721, %v737
  %741 = vset.pattern.permute.xlu0 0
  %742 = vperm.xlu0 %741, %v34
  %v743 = vpop.permute.xlu0 %742
  %v745 = vmul.f32 %v743, %v58
  %v746 = vsel %vm61, %v673, 0
  %748 = vmatpush.msra.mxu0 0.0
  %749 = vmatpush.msra.mxu0 0.0
  %750 = vmatpush.msra.mxu0 0.0
  %751 = vmatpush.msra.mxu0 0.0
  %752 = vmatpush.msra.mxu0 0.0
  %753 = vmatpush.msra.mxu0 0.0
  %754 = vmatpush.msra.mxu0 0.0
  %755 = vmatpush.msra.mxu0 0.0
  %756 = vmatpush.msra.mxu0 0.0
  %757 = vmatpush.msra.mxu0 0.0
  %758 = vmatpush.msra.mxu0 0.0
  %759 = vmatpush.msra.mxu0 0.0
  %760 = vmatpush.msra.mxu0 %v41
  %761 = vmatpush.msra.mxu0 %v40
  %762 = vmatpush.msra.mxu0 %v39
  %763 = vmatpush.msra.mxu0 %v38
  %764 = vmatmul.f32.gmra.mxu0 %v746
  %v765 = vpop.f32.mrf.mxu0
  %v766 = vadd.f32 0.0, %v765
  %767 = vdwg.mxu0
  %v768 = vadd.f32 %v745, %v766
  %v769 = vadd.f32 %v768, %v87
  %v770 = vxor.u32 %v769, 2147483648
  %v771 = vmul.f32 %v770, 1.442695
  %v772 = vpow.pop %v771
  %v773 = vadd.f32 %v772, 1.0
  %v774 = vrcp.pop %v773
  %v775 = vmul.f32 %v773, %v774
  %v776 = vsub.f32 1.0, %v775
  %v777 = vmul.f32 %v774, %v776
  %v778 = vadd.f32 %v774, %v777
  %vm779 = vweird.f32 %v773
  %vm780 = vweird.f32 %v774
  %vm781 = vmor %vm779, %vm780
  %v782 = vsel %vm781, %v774, %v778
  %v783 = vand.u32 2147483647, %v773
  %vm784 = vcmp.eq.f32.partialorder %v783, 8.507059e+37
  %v785 = vand.u32 %v773, 2147483648
  %v786 = vor.u32 1.1754944e-38, %v785
  %v787 = vsel %vm784, %v786, %v782
  %v788 = vmul.f32 1.0, %v787
  %v789 = vtanh.pop %v769
  %v790 = vmul.f32 %v788, %v664
  %792 = vrot.lane.b32.xlu0 %v789, 32
  %v793 = vpop.permute.xlu0 %792
  %v795 = vmul.f32 %v788, %v793
  %797 = vrot.lane.b32.xlu0 %v795, 32
  %v798 = vpop.permute.xlu0 %797
  %v800 = vadd.f32 %v790, %v798
  %v801 = vtanh.pop %v800
  %803 = vrot.lane.b32.xlu0 %v801, 32
  %v804 = vpop.permute.xlu0 %803
  %v806 = vmul.f32 %v788, %v804
  %808 = vrot.lane.b32.xlu0 %v806, 64
  %v809 = vpop.permute.xlu0 %808
  %812 = vrot.lane.b32.xlu0 %v739, 96
  %v813 = vpop.permute.xlu0 %812
  %v815 = vsel %vm61, %v809, %v813
  %v817 = vsel %vm135, %v815, 0
  %819 = vmatpush.msra.mxu0 0.0
  %820 = vmatpush.msra.mxu0 0.0
  %821 = vmatpush.msra.mxu0 0.0
  %822 = vmatpush.msra.mxu0 0.0
  %823 = vmatpush.msra.mxu0 0.0
  %824 = vmatpush.msra.mxu0 0.0
  %825 = vmatpush.msra.mxu0 0.0
  %826 = vmatpush.msra.mxu0 0.0
  %827 = vmatpush.msra.mxu0 %v50
  %828 = vmatpush.msra.mxu0 %v49
  %829 = vmatpush.msra.mxu0 %v48
  %830 = vmatpush.msra.mxu0 %v47
  %831 = vmatpush.msra.mxu0 %v46
  %832 = vmatpush.msra.mxu0 %v45
  %833 = vmatpush.msra.mxu0 %v44
  %834 = vmatpush.msra.mxu0 %v43
  %835 = vmatmul.f32.gmra.mxu0 %v817
  %v836 = vpop.f32.mrf.mxu0
  %v837 = vadd.f32 %v133, %v836
  %838 = vdwg.mxu0
  %v839 = vxor.u32 %v837, 2147483648
  %v840 = vmul.f32 %v839, 1.442695
  %v841 = vpow.pop %v840
  %v842 = vadd.f32 %v841, 1.0
  %v843 = vrcp.pop %v842
  %v844 = vmul.f32 %v842, %v843
  %v845 = vsub.f32 1.0, %v844
  %v846 = vmul.f32 %v843, %v845
  %v847 = vadd.f32 %v843, %v846
  %vm848 = vweird.f32 %v842
  %vm849 = vweird.f32 %v843
  %vm850 = vmor %vm848, %vm849
  %v851 = vsel %vm850, %v843, %v847
  %v852 = vand.u32 2147483647, %v842
  %vm853 = vcmp.eq.f32.partialorder %v852, 8.507059e+37
  %v854 = vand.u32 %v842, 2147483648
  %v855 = vor.u32 1.1754944e-38, %v854
  %v856 = vsel %vm853, %v855, %v851
  %v857 = vmul.f32 1.0, %v856
  %v858 = vtanh.pop %v837
  %v859 = vmul.f32 %v857, %v733
  %861 = vrot.lane.b32.xlu0 %v858, 32
  %v862 = vpop.permute.xlu0 %861
  %v864 = vmul.f32 %v857, %v862
  %866 = vrot.lane.b32.xlu0 %v864, 32
  %v867 = vpop.permute.xlu0 %866
  %v869 = vadd.f32 %v859, %v867
  %v870 = vtanh.pop %v869
  %872 = vrot.lane.b32.xlu0 %v870, 32
  %v873 = vpop.permute.xlu0 %872
  %v875 = vmul.f32 %v857, %v873
  %877 = vset.pattern.permute.xlu0 0
  %878 = vperm.xlu0 %877, %v35
  %v879 = vpop.permute.xlu0 %878
  %v881 = vmul.f32 %v879, %v58
  %v882 = vsel %vm61, %v809, 0
  %884 = vmatpush.msra.mxu0 0.0
  %885 = vmatpush.msra.mxu0 0.0
  %886 = vmatpush.msra.mxu0 0.0
  %887 = vmatpush.msra.mxu0 0.0
  %888 = vmatpush.msra.mxu0 0.0
  %889 = vmatpush.msra.mxu0 0.0
  %890 = vmatpush.msra.mxu0 0.0
  %891 = vmatpush.msra.mxu0 0.0
  %892 = vmatpush.msra.mxu0 0.0
  %893 = vmatpush.msra.mxu0 0.0
  %894 = vmatpush.msra.mxu0 0.0
  %895 = vmatpush.msra.mxu0 0.0
  %896 = vmatpush.msra.mxu0 %v41
  %897 = vmatpush.msra.mxu0 %v40
  %898 = vmatpush.msra.mxu0 %v39
  %899 = vmatpush.msra.mxu0 %v38
  %900 = vmatmul.f32.gmra.mxu0 %v882
  %v901 = vpop.f32.mrf.mxu0
  %v902 = vadd.f32 0.0, %v901
  %903 = vdwg.mxu0
  %v904 = vadd.f32 %v881, %v902
  %v905 = vadd.f32 %v904, %v87
  %v906 = vxor.u32 %v905, 2147483648
  %v907 = vmul.f32 %v906, 1.442695
  %v908 = vpow.pop %v907
  %v909 = vadd.f32 %v908, 1.0
  %v910 = vrcp.pop %v909
  %v911 = vmul.f32 %v909, %v910
  %v912 = vsub.f32 1.0, %v911
  %v913 = vmul.f32 %v910, %v912
  %v914 = vadd.f32 %v910, %v913
  %vm915 = vweird.f32 %v909
  %vm916 = vweird.f32 %v910
  %vm917 = vmor %vm915, %vm916
  %v918 = vsel %vm917, %v910, %v914
  %v919 = vand.u32 2147483647, %v909
  %vm920 = vcmp.eq.f32.partialorder %v919, 8.507059e+37
  %v921 = vand.u32 %v909, 2147483648
  %v922 = vor.u32 1.1754944e-38, %v921
  %v923 = vsel %vm920, %v922, %v918
  %v924 = vmul.f32 1.0, %v923
  %v925 = vtanh.pop %v905
  %v926 = vmul.f32 %v924, %v800
  %928 = vrot.lane.b32.xlu0 %v925, 32
  %v929 = vpop.permute.xlu0 %928
  %v931 = vmul.f32 %v924, %v929
  %933 = vrot.lane.b32.xlu0 %v931, 32
  %v934 = vpop.permute.xlu0 %933
  %v936 = vadd.f32 %v926, %v934
  %v937 = vtanh.pop %v936
  %939 = vrot.lane.b32.xlu0 %v937, 32
  %v940 = vpop.permute.xlu0 %939
  %v942 = vmul.f32 %v924, %v940
  %944 = vrot.lane.b32.xlu0 %v942, 64
  %v945 = vpop.permute.xlu0 %944
  %948 = vrot.lane.b32.xlu0 %v875, 96
  %v949 = vpop.permute.xlu0 %948
  %v951 = vsel %vm61, %v945, %v949
  %v953 = vsel %vm135, %v951, 0
  %955 = vmatpush.msra.mxu0 0.0
  %956 = vmatpush.msra.mxu0 0.0
  %957 = vmatpush.msra.mxu0 0.0
  %958 = vmatpush.msra.mxu0 0.0
  %959 = vmatpush.msra.mxu0 0.0
  %960 = vmatpush.msra.mxu0 0.0
  %961 = vmatpush.msra.mxu0 0.0
  %962 = vmatpush.msra.mxu0 0.0
  %963 = vmatpush.msra.mxu0 %v50
  %964 = vmatpush.msra.mxu0 %v49
  %965 = vmatpush.msra.mxu0 %v48
  %966 = vmatpush.msra.mxu0 %v47
  %967 = vmatpush.msra.mxu0 %v46
  %968 = vmatpush.msra.mxu0 %v45
  %969 = vmatpush.msra.mxu0 %v44
  %970 = vmatpush.msra.mxu0 %v43
  %971 = vmatmul.f32.gmra.mxu0 %v953
  %v972 = vpop.f32.mrf.mxu0
  %v973 = vadd.f32 %v133, %v972
  %974 = vdwg.mxu0
  %v975 = vxor.u32 %v973, 2147483648
  %v976 = vmul.f32 %v975, 1.442695
  %v977 = vpow.pop %v976
  %v978 = vadd.f32 %v977, 1.0
  %v979 = vrcp.pop %v978
  %v980 = vmul.f32 %v978, %v979
  %v981 = vsub.f32 1.0, %v980
  %v982 = vmul.f32 %v979, %v981
  %v983 = vadd.f32 %v979, %v982
  %vm984 = vweird.f32 %v978
  %vm985 = vweird.f32 %v979
  %vm986 = vmor %vm984, %vm985
  %v987 = vsel %vm986, %v979, %v983
  %v988 = vand.u32 2147483647, %v978
  %vm989 = vcmp.eq.f32.partialorder %v988, 8.507059e+37
  %v990 = vand.u32 %v978, 2147483648
  %v991 = vor.u32 1.1754944e-38, %v990
  %v992 = vsel %vm989, %v991, %v987
  %v993 = vmul.f32 1.0, %v992
  %v994 = vtanh.pop %v973
  %v995 = vmul.f32 %v993, %v869
  %997 = vrot.lane.b32.xlu0 %v994, 32
  %v998 = vpop.permute.xlu0 %997
  %v1000 = vmul.f32 %v993, %v998
  %1002 = vrot.lane.b32.xlu0 %v1000, 32
  %v1003 = vpop.permute.xlu0 %1002
  %v1005 = vadd.f32 %v995, %v1003
  %v1006 = vtanh.pop %v1005
  %1008 = vrot.lane.b32.xlu0 %v1006, 32
  %v1009 = vpop.permute.xlu0 %1008
  %v1011 = vmul.f32 %v993, %v1009
  %1013 = vset.pattern.permute.xlu0 0
  %1014 = vperm.xlu0 %1013, %v36
  %v1015 = vpop.permute.xlu0 %1014
  %v1017 = vmul.f32 %v1015, %v58
  %v1018 = vsel %vm61, %v945, 0
  %1020 = vmatpush.msra.mxu0 0.0
  %1021 = vmatpush.msra.mxu0 0.0
  %1022 = vmatpush.msra.mxu0 0.0
  %1023 = vmatpush.msra.mxu0 0.0
  %1024 = vmatpush.msra.mxu0 0.0
  %1025 = vmatpush.msra.mxu0 0.0
  %1026 = vmatpush.msra.mxu0 0.0
  %1027 = vmatpush.msra.mxu0 0.0
  %1028 = vmatpush.msra.mxu0 0.0
  %1029 = vmatpush.msra.mxu0 0.0
  %1030 = vmatpush.msra.mxu0 0.0
  %1031 = vmatpush.msra.mxu0 0.0
  %1032 = vmatpush.msra.mxu0 %v41
  %1033 = vmatpush.msra.mxu0 %v40
  %1034 = vmatpush.msra.mxu0 %v39
  %1035 = vmatpush.msra.mxu0 %v38
  %1036 = vmatmul.f32.gmra.mxu0 %v1018
  %v1037 = vpop.f32.mrf.mxu0
  %v1038 = vadd.f32 0.0, %v1037
  %1039 = vdwg.mxu0
  %v1040 = vadd.f32 %v1017, %v1038
  %v1041 = vadd.f32 %v1040, %v87
  %v1042 = vxor.u32 %v1041, 2147483648
  %v1043 = vmul.f32 %v1042, 1.442695
  %v1044 = vpow.pop %v1043
  %v1045 = vadd.f32 %v1044, 1.0
  %v1046 = vrcp.pop %v1045
  %v1047 = vmul.f32 %v1045, %v1046
  %v1048 = vsub.f32 1.0, %v1047
  %v1049 = vmul.f32 %v1046, %v1048
  %v1050 = vadd.f32 %v1046, %v1049
  %vm1051 = vweird.f32 %v1045
  %vm1052 = vweird.f32 %v1046
  %vm1053 = vmor %vm1051, %vm1052
  %v1054 = vsel %vm1053, %v1046, %v1050
  %v1055 = vand.u32 2147483647, %v1045
  %vm1056 = vcmp.eq.f32.partialorder %v1055, 8.507059e+37
  %v1057 = vand.u32 %v1045, 2147483648
  %v1058 = vor.u32 1.1754944e-38, %v1057
  %v1059 = vsel %vm1056, %v1058, %v1054
  %v1060 = vmul.f32 1.0, %v1059
  %v1061 = vtanh.pop %v1041
  %v1062 = vmul.f32 %v1060, %v936
  %1064 = vrot.lane.b32.xlu0 %v1061, 32
  %v1065 = vpop.permute.xlu0 %1064
  %v1067 = vmul.f32 %v1060, %v1065
  %1069 = vrot.lane.b32.xlu0 %v1067, 32
  %v1070 = vpop.permute.xlu0 %1069
  %v1072 = vadd.f32 %v1062, %v1070
  %v1073 = vtanh.pop %v1072
  %1075 = vrot.lane.b32.xlu0 %v1073, 32
  %v1076 = vpop.permute.xlu0 %1075
  %v1078 = vmul.f32 %v1060, %v1076
  %1080 = vrot.lane.b32.xlu0 %v1078, 64
  %v1081 = vpop.permute.xlu0 %1080
  %1084 = vrot.lane.b32.xlu0 %v1011, 96
  %v1085 = vpop.permute.xlu0 %1084
  %v1087 = vsel %vm61, %v1081, %v1085
  %v1089 = vsel %vm135, %v1087, 0
  %1091 = vmatpush.msra.mxu0 0.0
  %1092 = vmatpush.msra.mxu0 0.0
  %1093 = vmatpush.msra.mxu0 0.0
  %1094 = vmatpush.msra.mxu0 0.0
  %1095 = vmatpush.msra.mxu0 0.0
  %1096 = vmatpush.msra.mxu0 0.0
  %1097 = vmatpush.msra.mxu0 0.0
  %1098 = vmatpush.msra.mxu0 0.0
  %1099 = vmatpush.msra.mxu0 %v50
  %1100 = vmatpush.msra.mxu0 %v49
  %1101 = vmatpush.msra.mxu0 %v48
  %1102 = vmatpush.msra.mxu0 %v47
  %1103 = vmatpush.msra.mxu0 %v46
  %1104 = vmatpush.msra.mxu0 %v45
  %1105 = vmatpush.msra.mxu0 %v44
  %1106 = vmatpush.msra.mxu0 %v43
  %1107 = vmatmul.f32.gmra.mxu0 %v1089
  %v1108 = vpop.f32.mrf.mxu0
  %v1109 = vadd.f32 %v133, %v1108
  %1110 = vdwg.mxu0
  %v1111 = vxor.u32 %v1109, 2147483648
  %v1112 = vmul.f32 %v1111, 1.442695
  %v1113 = vpow.pop %v1112
  %v1114 = vadd.f32 %v1113, 1.0
  %v1115 = vrcp.pop %v1114
  %v1116 = vmul.f32 %v1114, %v1115
  %v1117 = vsub.f32 1.0, %v1116
  %v1118 = vmul.f32 %v1115, %v1117
  %v1119 = vadd.f32 %v1115, %v1118
  %vm1120 = vweird.f32 %v1114
  %vm1121 = vweird.f32 %v1115
  %vm1122 = vmor %vm1120, %vm1121
  %v1123 = vsel %vm1122, %v1115, %v1119
  %v1124 = vand.u32 2147483647, %v1114
  %vm1125 = vcmp.eq.f32.partialorder %v1124, 8.507059e+37
  %v1126 = vand.u32 %v1114, 2147483648
  %v1127 = vor.u32 1.1754944e-38, %v1126
  %v1128 = vsel %vm1125, %v1127, %v1123
  %v1129 = vmul.f32 1.0, %v1128
  %v1130 = vtanh.pop %v1109
  %v1131 = vmul.f32 %v1129, %v1005
  %1133 = vrot.lane.b32.xlu0 %v1130, 32
  %v1134 = vpop.permute.xlu0 %1133
  %v1136 = vmul.f32 %v1129, %v1134
  %1138 = vrot.lane.b32.xlu0 %v1136, 32
  %v1139 = vpop.permute.xlu0 %1138
  %v1141 = vadd.f32 %v1131, %v1139
  %v1142 = vtanh.pop %v1141
  %1144 = vrot.lane.b32.xlu0 %v1142, 32
  %v1145 = vpop.permute.xlu0 %1144
  %v1147 = vmul.f32 %v1129, %v1145
  %v1148 = vxor.u32 %v1147, 2147483648
  %v1149 = vmul.f32 %v1148, 1.442695
  %v1150 = vpow.pop %v1149
  %v1151 = vadd.f32 %v1150, 1.0
  %v1152 = vrcp.pop %v1151
  %v1153 = vmul.f32 %v1151, %v1152
  %v1154 = vsub.f32 1.0, %v1153
  %v1155 = vmul.f32 %v1152, %v1154
  %v1156 = vadd.f32 %v1152, %v1155
  %vm1157 = vweird.f32 %v1151
  %vm1158 = vweird.f32 %v1152
  %vm1159 = vmor %vm1157, %vm1158
  %v1160 = vsel %vm1159, %v1152, %v1156
  %v1161 = vand.u32 2147483647, %v1151
  %vm1162 = vcmp.eq.f32.partialorder %v1161, 8.507059e+37
  %v1163 = vand.u32 %v1151, 2147483648
  %v1164 = vor.u32 1.1754944e-38, %v1163
  %v1165 = vsel %vm1162, %v1164, %v1160
  %v1166 = vmul.f32 1.0, %v1165
  %v1167 = vmul.f32 %v1147, %v1166
  %vm1168 = vcmp.ge.f32.partialorder %v1147, -2.2
  %vm1169 = vcmp.lt.f32.partialorder %v1147, -1.8
  %vm1170 = vmand %vm1168, %vm1169
  %v1171 = vsel %vm1170, 1, 0
  %v1172 = vcvt.s32.f32 %v1171
  %vm1173 = vcmp.ge.f32.partialorder %v1147, -1.8
  %vm1174 = vcmp.lt.f32.partialorder %v1147, -1.4
  %vm1175 = vmand %vm1173, %vm1174
  %v1176 = vsel %vm1175, 1, 0
  %v1177 = vcvt.s32.f32 %v1176
  %vm1178 = vcmp.ge.f32.partialorder %v1147, -1.4
  %vm1179 = vcmp.lt.f32.partialorder %v1147, -1.0
  %vm1180 = vmand %vm1178, %vm1179
  %v1181 = vsel %vm1180, 1, 0
  %v1182 = vcvt.s32.f32 %v1181
  %vm1183 = vcmp.ge.f32.partialorder %v1147, -1.0
  %vm1184 = vcmp.lt.f32.partialorder %v1147, -0.6
  %vm1185 = vmand %vm1183, %vm1184
  %v1186 = vsel %vm1185, 1, 0
  %v1187 = vcvt.s32.f32 %v1186
  %vm1188 = vcmp.ge.f32.partialorder %v1147, -0.6
  %vm1189 = vcmp.lt.f32.partialorder %v1147, -0.2
  %vm1190 = vmand %vm1188, %vm1189
  %v1191 = vsel %vm1190, 1, 0
  %v1192 = vcvt.s32.f32 %v1191
  %vm1193 = vcmp.ge.f32.partialorder %v1147, -0.2
  %vm1194 = vcmp.lt.f32.partialorder %v1147, 0.2
  %vm1195 = vmand %vm1193, %vm1194
  %v1196 = vsel %vm1195, 1, 0
  %v1197 = vcvt.s32.f32 %v1196
  %vm1198 = vcmp.ge.f32.partialorder %v1147, 0.2
  %vm1199 = vcmp.lt.f32.partialorder %v1147, 0.6
  %vm1200 = vmand %vm1198, %vm1199
  %v1201 = vsel %vm1200, 1, 0
  %v1202 = vcvt.s32.f32 %v1201
  %vm1203 = vcmp.ge.f32.partialorder %v1147, 0.6
  %vm1204 = vcmp.lt.f32.partialorder %v1147, 1.0
  %vm1205 = vmand %vm1203, %vm1204
  %v1206 = vsel %vm1205, 1, 0
  %v1207 = vcvt.s32.f32 %v1206
  %vm1208 = vcmp.ge.f32.partialorder %v1147, 1.0
  %vm1209 = vcmp.lt.f32.partialorder %v1147, 1.4
  %vm1210 = vmand %vm1208, %vm1209
  %v1211 = vsel %vm1210, 1, 0
  %v1212 = vcvt.s32.f32 %v1211
  %vm1213 = vcmp.ge.f32.partialorder %v1147, 1.4
  %vm1214 = vcmp.lt.f32.partialorder %v1147, 1.8
  %vm1215 = vmand %vm1213, %vm1214
  %v1216 = vsel %vm1215, 1, 0
  %v1217 = vcvt.s32.f32 %v1216
  %vm1218 = vcmp.ge.f32.partialorder %v1147, 1.8
  %vm1219 = vcmp.lt.f32.partialorder %v1147, 2.2
  %vm1220 = vmand %vm1218, %vm1219
  %v1221 = vsel %vm1220, 1, 0
  %v1222 = vcvt.s32.f32 %v1221
  %v1223 = vsub.f32 %v1147, -2.2
  %v1224 = vrcp.pop 0.4
  %v1225 = vmul.f32 0.4, %v1224
  %v1226 = vsub.f32 1.0, %v1225
  %v1227 = vmul.f32 %v1224, %v1226
  %v1228 = vadd.f32 %v1224, %v1227
  %vm1229 = vweird.f32 %v1224
  %v1230 = vsel %vm1229, %v1224, %v1228
  %v1231 = vmul.f32 %v1223, %v1230
  %v1232 = vmul.f32 %v1231, %v1172
  %v1233 = vsub.f32 -1.4, %v1147
  %v1234 = vmul.f32 %v1233, %v1230
  %v1235 = vmul.f32 %v1234, %v1177
  %v1236 = vadd.f32 %v1232, %v1235
  %v1237 = vsub.f32 %v1147, -1.8
  %v1238 = vmul.f32 %v1237, %v1230
  %v1239 = vmul.f32 %v1238, %v1177
  %v1240 = vsub.f32 -1.0, %v1147
  %v1241 = vmul.f32 %v1240, %v1230
  %v1242 = vmul.f32 %v1241, %v1182
  %v1243 = vadd.f32 %v1239, %v1242
  %v1244 = vsub.f32 %v1147, -1.4
  %v1245 = vmul.f32 %v1244, %v1230
  %v1246 = vmul.f32 %v1245, %v1182
  %v1247 = vsub.f32 -0.6, %v1147
  %v1248 = vmul.f32 %v1247, %v1230
  %v1249 = vmul.f32 %v1248, %v1187
  %v1250 = vadd.f32 %v1246, %v1249
  %v1251 = vsub.f32 %v1147, -1.0
  %v1252 = vmul.f32 %v1251, %v1230
  %v1253 = vmul.f32 %v1252, %v1187
  %v1254 = vsub.f32 -0.2, %v1147
  %v1255 = vmul.f32 %v1254, %v1230
  %v1256 = vmul.f32 %v1255, %v1192
  %v1257 = vadd.f32 %v1253, %v1256
  %v1258 = vsub.f32 %v1147, -0.6
  %v1259 = vmul.f32 %v1258, %v1230
  %v1260 = vmul.f32 %v1259, %v1192
  %v1261 = vsub.f32 0.2, %v1147
  %v1262 = vmul.f32 %v1261, %v1230
  %v1263 = vmul.f32 %v1262, %v1197
  %v1264 = vadd.f32 %v1260, %v1263
  %v1265 = vsub.f32 %v1147, -0.2
  %v1266 = vmul.f32 %v1265, %v1230
  %v1267 = vmul.f32 %v1266, %v1197
  %v1268 = vsub.f32 0.6, %v1147
  %v1269 = vmul.f32 %v1268, %v1230
  %v1270 = vmul.f32 %v1269, %v1202
  %v1271 = vadd.f32 %v1267, %v1270
  %v1272 = vsub.f32 %v1147, 0.2
  %v1273 = vmul.f32 %v1272, %v1230
  %v1274 = vmul.f32 %v1273, %v1202
  %v1275 = vsub.f32 1.0, %v1147
  %v1276 = vmul.f32 %v1275, %v1230
  %v1277 = vmul.f32 %v1276, %v1207
  %v1278 = vadd.f32 %v1274, %v1277
  %v1279 = vsub.f32 %v1147, 0.6
  %v1280 = vmul.f32 %v1279, %v1230
  %v1281 = vmul.f32 %v1280, %v1207
  %v1282 = vsub.f32 1.4, %v1147
  %v1283 = vmul.f32 %v1282, %v1230
  %v1284 = vmul.f32 %v1283, %v1212
  %v1285 = vadd.f32 %v1281, %v1284
  %v1286 = vsub.f32 %v1147, 1.0
  %v1287 = vmul.f32 %v1286, %v1230
  %v1288 = vmul.f32 %v1287, %v1212
  %v1289 = vsub.f32 1.8, %v1147
  %v1290 = vmul.f32 %v1289, %v1230
  %v1291 = vmul.f32 %v1290, %v1217
  %v1292 = vadd.f32 %v1288, %v1291
  %v1293 = vsub.f32 %v1147, 1.4
  %v1294 = vmul.f32 %v1293, %v1230
  %v1295 = vmul.f32 %v1294, %v1217
  %v1296 = vsub.f32 2.2, %v1147
  %v1297 = vmul.f32 %v1296, %v1230
  %v1298 = vmul.f32 %v1297, %v1222
  %v1299 = vadd.f32 %v1295, %v1298
  %v1300 = vrcp.pop 0.8
  %v1301 = vmul.f32 0.8, %v1300
  %v1302 = vsub.f32 1.0, %v1301
  %v1303 = vmul.f32 %v1300, %v1302
  %v1304 = vadd.f32 %v1300, %v1303
  %vm1305 = vweird.f32 %v1300
  %v1306 = vsel %vm1305, %v1300, %v1304
  %v1307 = vmul.f32 %v1223, %v1306
  %v1308 = vmul.f32 %v1307, %v1236
  %v1309 = vmul.f32 %v1240, %v1306
  %v1310 = vmul.f32 %v1309, %v1243
  %v1311 = vadd.f32 %v1308, %v1310
  %v1312 = vmul.f32 %v1237, %v1306
  %v1313 = vmul.f32 %v1312, %v1243
  %v1314 = vmul.f32 %v1247, %v1306
  %v1315 = vmul.f32 %v1314, %v1250
  %v1316 = vadd.f32 %v1313, %v1315
  %v1317 = vmul.f32 %v1244, %v1306
  %v1318 = vmul.f32 %v1317, %v1250
  %v1319 = vmul.f32 %v1254, %v1306
  %v1320 = vmul.f32 %v1319, %v1257
  %v1321 = vadd.f32 %v1318, %v1320
  %v1322 = vmul.f32 %v1251, %v1306
  %v1323 = vmul.f32 %v1322, %v1257
  %v1324 = vmul.f32 %v1261, %v1306
  %v1325 = vmul.f32 %v1324, %v1264
  %v1326 = vadd.f32 %v1323, %v1325
  %v1327 = vmul.f32 %v1258, %v1306
  %v1328 = vmul.f32 %v1327, %v1264
  %v1329 = vmul.f32 %v1268, %v1306
  %v1330 = vmul.f32 %v1329, %v1271
  %v1331 = vadd.f32 %v1328, %v1330
  %v1332 = vmul.f32 %v1265, %v1306
  %v1333 = vmul.f32 %v1332, %v1271
  %v1334 = vmul.f32 %v1275, %v1306
  %v1335 = vmul.f32 %v1334, %v1278
  %v1336 = vadd.f32 %v1333, %v1335
  %v1337 = vmul.f32 %v1272, %v1306
  %v1338 = vmul.f32 %v1337, %v1278
  %v1339 = vmul.f32 %v1282, %v1306
  %v1340 = vmul.f32 %v1339, %v1285
  %v1341 = vadd.f32 %v1338, %v1340
  %v1342 = vmul.f32 %v1279, %v1306
  %v1343 = vmul.f32 %v1342, %v1285
  %v1344 = vmul.f32 %v1289, %v1306
  %v1345 = vmul.f32 %v1344, %v1292
  %v1346 = vadd.f32 %v1343, %v1345
  %v1347 = vmul.f32 %v1286, %v1306
  %v1348 = vmul.f32 %v1347, %v1292
  %v1349 = vmul.f32 %v1296, %v1306
  %v1350 = vmul.f32 %v1349, %v1299
  %v1351 = vadd.f32 %v1348, %v1350
  %v1352 = vrcp.pop 1.2
  %v1353 = vmul.f32 1.2, %v1352
  %v1354 = vsub.f32 1.0, %v1353
  %v1355 = vmul.f32 %v1352, %v1354
  %v1356 = vadd.f32 %v1352, %v1355
  %vm1357 = vweird.f32 %v1352
  %v1358 = vsel %vm1357, %v1352, %v1356
  %v1359 = vmul.f32 %v1223, %v1358
  %v1360 = vmul.f32 %v1359, %v1311
  %v1361 = vmul.f32 %v1247, %v1358
  %v1362 = vmul.f32 %v1361, %v1316
  %v1363 = vadd.f32 %v1360, %v1362
  %v1364 = vmul.f32 %v1237, %v1358
  %v1365 = vmul.f32 %v1364, %v1316
  %v1366 = vmul.f32 %v1254, %v1358
  %v1367 = vmul.f32 %v1366, %v1321
  %v1368 = vadd.f32 %v1365, %v1367
  %v1369 = vmul.f32 %v1244, %v1358
  %v1370 = vmul.f32 %v1369, %v1321
  %v1371 = vmul.f32 %v1261, %v1358
  %v1372 = vmul.f32 %v1371, %v1326
  %v1373 = vadd.f32 %v1370, %v1372
  %v1374 = vmul.f32 %v1251, %v1358
  %v1375 = vmul.f32 %v1374, %v1326
  %v1376 = vmul.f32 %v1268, %v1358
  %v1377 = vmul.f32 %v1376, %v1331
  %v1378 = vadd.f32 %v1375, %v1377
  %v1379 = vmul.f32 %v1258, %v1358
  %v1380 = vmul.f32 %v1379, %v1331
  %v1381 = vmul.f32 %v1275, %v1358
  %v1382 = vmul.f32 %v1381, %v1336
  %v1383 = vadd.f32 %v1380, %v1382
  %v1384 = vmul.f32 %v1265, %v1358
  %v1385 = vmul.f32 %v1384, %v1336
  %v1386 = vmul.f32 %v1282, %v1358
  %v1387 = vmul.f32 %v1386, %v1341
  %v1388 = vadd.f32 %v1385, %v1387
  %v1389 = vmul.f32 %v1272, %v1358
  %v1390 = vmul.f32 %v1389, %v1341
  %v1391 = vmul.f32 %v1289, %v1358
  %v1392 = vmul.f32 %v1391, %v1346
  %v1393 = vadd.f32 %v1390, %v1392
  %v1394 = vmul.f32 %v1279, %v1358
  %v1395 = vmul.f32 %v1394, %v1346
  %v1396 = vmul.f32 %v1296, %v1358
  %v1397 = vmul.f32 %v1396, %v1351
  %v1398 = vadd.f32 %v1395, %v1397
  %1400 = vrot.lane.b32.xlu0 %v1167, 64
  %v1401 = vpop.permute.xlu0 %1400
  %1404 = vrot.lane.b32.xlu0 %v1363, 96
  %v1405 = vpop.permute.xlu0 %1404
  %1408 = vrot.lane.b32.xlu0 %v1373, 32
  %v1409 = vpop.permute.xlu0 %1408
  %1412 = vrot.lane.b32.xlu0 %v1378, 64
  %v1413 = vpop.permute.xlu0 %1412
  %1416 = vrot.lane.b32.xlu0 %v1383, 96
  %v1417 = vpop.permute.xlu0 %1416
  %1420 = vrot.lane.b32.xlu0 %v1393, 32
  %v1421 = vpop.permute.xlu0 %1420
  %1424 = vrot.lane.b32.xlu0 %v1398, 64
  %v1425 = vpop.permute.xlu0 %1424
  %v1426 = vsel %vm61, %v1401, %v1405
  %v1427 = vsel %vm135, %v1426, %v1368
  %vm1428 = vcmask 785408
  %v1429 = vsel %vm1428, %v1427, %v1409
  %v1430 = vsel %vm61, %v1413, %v1417
  %v1431 = vsel %vm135, %v1430, %v1388
  %v1432 = vsel %vm1428, %v1431, %v1421
  %v1433 = vld [vmem:[%s6] sm:$0xff]
  %v1434 = vld [vmem:[%s6 + $0x8] sm:$0xff]
  %v1435 = vld [vmem:[%s6 + $0x10] sm:$0xff]
  %v1436 = vld [vmem:[%s6 + $0x18] sm:$0xff]
  %v1437 = vld [vmem:[%s6 + $0x20] sm:$0xff]
  %v1438 = vld [vmem:[%s6 + $0x28] sm:$0xff]
  %v1439 = vld [vmem:[%s6 + $0x30] sm:$0xff]
  %v1440 = vld [vmem:[%s6 + $0x38] sm:$0xff]
  %v1441 = vld [vmem:[%s6 + $0x40] sm:$0xff]
  %v1442 = vld [vmem:[%s6 + $0x48] sm:$0xff]
  %v1443 = vld [vmem:[%s6 + $0x50] sm:$0xff]
  %v1444 = vld [vmem:[%s6 + $0x58] sm:$0xff]
  %v1445 = vld [vmem:[%s6 + $0x60] sm:$0xff]
  %v1446 = vld [vmem:[%s6 + $0x68] sm:$0xff]
  %v1447 = vld [vmem:[%s6 + $0x70] sm:$0xff]
  %v1448 = vld [vmem:[%s6 + $0x78] sm:$0xff]
  %v1449 = vld [vmem:[%s6 + $0x80] sm:$0xff]
  %v1450 = vld [vmem:[%s6 + $0x88] sm:$0xff]
  %v1451 = vld [vmem:[%s6 + $0x90] sm:$0xff]
  %v1452 = vld [vmem:[%s6 + $0x98] sm:$0xff]
  %v1453 = vld [vmem:[%s6 + $0xa0] sm:$0xff]
  %v1454 = vld [vmem:[%s6 + $0xa8] sm:$0xff]
  %v1455 = vld [vmem:[%s6 + $0xb0] sm:$0xff]
  %v1456 = vld [vmem:[%s6 + $0xb8] sm:$0xff]
  %v1457 = vld [vmem:[%s6 + $0xc0] sm:$0xff]
  %v1458 = vld [vmem:[%s6 + $0xc8] sm:$0xff]
  %v1459 = vld [vmem:[%s6 + $0xd0] sm:$0xff]
  %v1460 = vld [vmem:[%s6 + $0xd8] sm:$0xff]
  %v1461 = vld [vmem:[%s6 + $0xe0] sm:$0xff]
  %v1462 = vld [vmem:[%s6 + $0xe8] sm:$0xff]
  %v1463 = vld [vmem:[%s6 + $0xf0] sm:$0xff]
  %v1464 = vld [vmem:[%s6 + $0xf8] sm:$0xff]
  %v1465 = vld [vmem:[%s6 + $0x100] sm:$0xff]
  %v1466 = vld [vmem:[%s6 + $0x108] sm:$0xff]
  %v1467 = vld [vmem:[%s6 + $0x110] sm:$0xff]
  %v1468 = vld [vmem:[%s6 + $0x118] sm:$0xff]
  %v1469 = vsel %vm61, %v1425, 0
  %1471 = vmatpush.msra.mxu0 %v1448
  %1472 = vmatpush.msra.mxu0 %v1447
  %1473 = vmatpush.msra.mxu0 %v1446
  %1474 = vmatpush.msra.mxu0 %v1445
  %1475 = vmatpush.msra.mxu0 %v1444
  %1476 = vmatpush.msra.mxu0 %v1443
  %1477 = vmatpush.msra.mxu0 %v1442
  %1478 = vmatpush.msra.mxu0 %v1441
  %1479 = vmatpush.msra.mxu0 %v1440
  %1480 = vmatpush.msra.mxu0 %v1439
  %1481 = vmatpush.msra.mxu0 %v1438
  %1482 = vmatpush.msra.mxu0 %v1437
  %1483 = vmatpush.msra.mxu0 %v1436
  %1484 = vmatpush.msra.mxu0 %v1435
  %1485 = vmatpush.msra.mxu0 %v1434
  %1486 = vmatpush.msra.mxu0 %v1433
  %1487 = vmatmul.f32.gmra.mxu0 %v1429
  %v1488 = vpop.f32.mrf.mxu0
  %v1489 = vadd.f32 0.0, %v1488
  %1490 = vdwg.mxu0
  %1491 = vmatpush.msra.mxu0 %v1464
  %1492 = vmatpush.msra.mxu0 %v1463
  %1493 = vmatpush.msra.mxu0 %v1462
  %1494 = vmatpush.msra.mxu0 %v1461
  %1495 = vmatpush.msra.mxu0 %v1460
  %1496 = vmatpush.msra.mxu0 %v1459
  %1497 = vmatpush.msra.mxu0 %v1458
  %1498 = vmatpush.msra.mxu0 %v1457
  %1499 = vmatpush.msra.mxu0 %v1456
  %1500 = vmatpush.msra.mxu0 %v1455
  %1501 = vmatpush.msra.mxu0 %v1454
  %1502 = vmatpush.msra.mxu0 %v1453
  %1503 = vmatpush.msra.mxu0 %v1452
  %1504 = vmatpush.msra.mxu0 %v1451
  %1505 = vmatpush.msra.mxu0 %v1450
  %1506 = vmatpush.msra.mxu0 %v1449
  %1507 = vmatmul.f32.gmra.mxu0 %v1432
  %v1508 = vpop.f32.mrf.mxu0
  %v1509 = vadd.f32 %v1489, %v1508
  %1510 = vdwg.mxu0
  %1511 = vmatpush.msra.mxu0 0.0
  %1512 = vmatpush.msra.mxu0 0.0
  %1513 = vmatpush.msra.mxu0 0.0
  %1514 = vmatpush.msra.mxu0 0.0
  %1515 = vmatpush.msra.mxu0 0.0
  %1516 = vmatpush.msra.mxu0 0.0
  %1517 = vmatpush.msra.mxu0 0.0
  %1518 = vmatpush.msra.mxu0 0.0
  %1519 = vmatpush.msra.mxu0 0.0
  %1520 = vmatpush.msra.mxu0 0.0
  %1521 = vmatpush.msra.mxu0 0.0
  %1522 = vmatpush.msra.mxu0 0.0
  %1523 = vmatpush.msra.mxu0 %v1468
  %1524 = vmatpush.msra.mxu0 %v1467
  %1525 = vmatpush.msra.mxu0 %v1466
  %1526 = vmatpush.msra.mxu0 %v1465
  %1527 = vmatmul.f32.gmra.mxu0 %v1469
  %v1528 = vpop.f32.mrf.mxu0
  %v1529 = vadd.f32 %v1509, %v1528
  %1530 = vdwg.mxu0
  %v1531 = vxor.u32 %v1529, 2147483648
  %v1532 = vmul.f32 %v1531, 1.442695
  %v1533 = vpow.pop %v1532
  %v1534 = vadd.f32 %v1533, 1.0
  %v1535 = vrcp.pop %v1534
  %v1536 = vmul.f32 %v1534, %v1535
  %v1537 = vsub.f32 1.0, %v1536
  %v1538 = vmul.f32 %v1535, %v1537
  %v1539 = vadd.f32 %v1535, %v1538
  %vm1540 = vweird.f32 %v1534
  %vm1541 = vweird.f32 %v1535
  %vm1542 = vmor %vm1540, %vm1541
  %v1543 = vsel %vm1542, %v1535, %v1539
  %v1544 = vand.u32 2147483647, %v1534
  %vm1545 = vcmp.eq.f32.partialorder %v1544, 8.507059e+37
  %v1546 = vand.u32 %v1534, 2147483648
  %v1547 = vor.u32 1.1754944e-38, %v1546
  %v1548 = vsel %vm1545, %v1547, %v1543
  %v1549 = vmul.f32 1.0, %v1548
  %v1550 = vmul.f32 %v1529, %v1549
  %vm1551 = vcmp.ge.f32.partialorder %v1529, -2.2
  %vm1552 = vcmp.lt.f32.partialorder %v1529, -1.8
  %vm1553 = vmand %vm1551, %vm1552
  %v1554 = vsel %vm1553, 1, 0
  %v1555 = vcvt.s32.f32 %v1554
  %vm1556 = vcmp.ge.f32.partialorder %v1529, -1.8
  %vm1557 = vcmp.lt.f32.partialorder %v1529, -1.4
  %vm1558 = vmand %vm1556, %vm1557
  %v1559 = vsel %vm1558, 1, 0
  %v1560 = vcvt.s32.f32 %v1559
  %vm1561 = vcmp.ge.f32.partialorder %v1529, -1.4
  %vm1562 = vcmp.lt.f32.partialorder %v1529, -1.0
  %vm1563 = vmand %vm1561, %vm1562
  %v1564 = vsel %vm1563, 1, 0
  %v1565 = vcvt.s32.f32 %v1564
  %vm1566 = vcmp.ge.f32.partialorder %v1529, -1.0
  %vm1567 = vcmp.lt.f32.partialorder %v1529, -0.6
  %vm1568 = vmand %vm1566, %vm1567
  %v1569 = vsel %vm1568, 1, 0
  %v1570 = vcvt.s32.f32 %v1569
  %vm1571 = vcmp.ge.f32.partialorder %v1529, -0.6
  %vm1572 = vcmp.lt.f32.partialorder %v1529, -0.2
  %vm1573 = vmand %vm1571, %vm1572
  %v1574 = vsel %vm1573, 1, 0
  %v1575 = vcvt.s32.f32 %v1574
  %vm1576 = vcmp.ge.f32.partialorder %v1529, -0.2
  %vm1577 = vcmp.lt.f32.partialorder %v1529, 0.2
  %vm1578 = vmand %vm1576, %vm1577
  %v1579 = vsel %vm1578, 1, 0
  %v1580 = vcvt.s32.f32 %v1579
  %vm1581 = vcmp.ge.f32.partialorder %v1529, 0.2
  %vm1582 = vcmp.lt.f32.partialorder %v1529, 0.6
  %vm1583 = vmand %vm1581, %vm1582
  %v1584 = vsel %vm1583, 1, 0
  %v1585 = vcvt.s32.f32 %v1584
  %vm1586 = vcmp.ge.f32.partialorder %v1529, 0.6
  %vm1587 = vcmp.lt.f32.partialorder %v1529, 1.0
  %vm1588 = vmand %vm1586, %vm1587
  %v1589 = vsel %vm1588, 1, 0
  %v1590 = vcvt.s32.f32 %v1589
  %vm1591 = vcmp.ge.f32.partialorder %v1529, 1.0
  %vm1592 = vcmp.lt.f32.partialorder %v1529, 1.4
  %vm1593 = vmand %vm1591, %vm1592
  %v1594 = vsel %vm1593, 1, 0
  %v1595 = vcvt.s32.f32 %v1594
  %vm1596 = vcmp.ge.f32.partialorder %v1529, 1.4
  %vm1597 = vcmp.lt.f32.partialorder %v1529, 1.8
  %vm1598 = vmand %vm1596, %vm1597
  %v1599 = vsel %vm1598, 1, 0
  %v1600 = vcvt.s32.f32 %v1599
  %vm1601 = vcmp.ge.f32.partialorder %v1529, 1.8
  %vm1602 = vcmp.lt.f32.partialorder %v1529, 2.2
  %vm1603 = vmand %vm1601, %vm1602
  %v1604 = vsel %vm1603, 1, 0
  %v1605 = vcvt.s32.f32 %v1604
  %v1606 = vsub.f32 %v1529, -2.2
  %v1607 = vmul.f32 %v1606, %v1230
  %v1608 = vmul.f32 %v1607, %v1555
  %v1609 = vsub.f32 -1.4, %v1529
  %v1610 = vmul.f32 %v1609, %v1230
  %v1611 = vmul.f32 %v1610, %v1560
  %v1612 = vadd.f32 %v1608, %v1611
  %v1613 = vsub.f32 %v1529, -1.8
  %v1614 = vmul.f32 %v1613, %v1230
  %v1615 = vmul.f32 %v1614, %v1560
  %v1616 = vsub.f32 -1.0, %v1529
  %v1617 = vmul.f32 %v1616, %v1230
  %v1618 = vmul.f32 %v1617, %v1565
  %v1619 = vadd.f32 %v1615, %v1618
  %v1620 = vsub.f32 %v1529, -1.4
  %v1621 = vmul.f32 %v1620, %v1230
  %v1622 = vmul.f32 %v1621, %v1565
  %v1623 = vsub.f32 -0.6, %v1529
  %v1624 = vmul.f32 %v1623, %v1230
  %v1625 = vmul.f32 %v1624, %v1570
  %v1626 = vadd.f32 %v1622, %v1625
  %v1627 = vsub.f32 %v1529, -1.0
  %v1628 = vmul.f32 %v1627, %v1230
  %v1629 = vmul.f32 %v1628, %v1570
  %v1630 = vsub.f32 -0.2, %v1529
  %v1631 = vmul.f32 %v1630, %v1230
  %v1632 = vmul.f32 %v1631, %v1575
  %v1633 = vadd.f32 %v1629, %v1632
  %v1634 = vsub.f32 %v1529, -0.6
  %v1635 = vmul.f32 %v1634, %v1230
  %v1636 = vmul.f32 %v1635, %v1575
  %v1637 = vsub.f32 0.2, %v1529
  %v1638 = vmul.f32 %v1637, %v1230
  %v1639 = vmul.f32 %v1638, %v1580
  %v1640 = vadd.f32 %v1636, %v1639
  %v1641 = vsub.f32 %v1529, -0.2
  %v1642 = vmul.f32 %v1641, %v1230
  %v1643 = vmul.f32 %v1642, %v1580
  %v1644 = vsub.f32 0.6, %v1529
  %v1645 = vmul.f32 %v1644, %v1230
  %v1646 = vmul.f32 %v1645, %v1585
  %v1647 = vadd.f32 %v1643, %v1646
  %v1648 = vsub.f32 %v1529, 0.2
  %v1649 = vmul.f32 %v1648, %v1230
  %v1650 = vmul.f32 %v1649, %v1585
  %v1651 = vsub.f32 1.0, %v1529
  %v1652 = vmul.f32 %v1651, %v1230
  %v1653 = vmul.f32 %v1652, %v1590
  %v1654 = vadd.f32 %v1650, %v1653
  %v1655 = vsub.f32 %v1529, 0.6
  %v1656 = vmul.f32 %v1655, %v1230
  %v1657 = vmul.f32 %v1656, %v1590
  %v1658 = vsub.f32 1.4, %v1529
  %v1659 = vmul.f32 %v1658, %v1230
  %v1660 = vmul.f32 %v1659, %v1595
  %v1661 = vadd.f32 %v1657, %v1660
  %v1662 = vsub.f32 %v1529, 1.0
  %v1663 = vmul.f32 %v1662, %v1230
  %v1664 = vmul.f32 %v1663, %v1595
  %v1665 = vsub.f32 1.8, %v1529
  %v1666 = vmul.f32 %v1665, %v1230
  %v1667 = vmul.f32 %v1666, %v1600
  %v1668 = vadd.f32 %v1664, %v1667
  %v1669 = vsub.f32 %v1529, 1.4
  %v1670 = vmul.f32 %v1669, %v1230
  %v1671 = vmul.f32 %v1670, %v1600
  %v1672 = vsub.f32 2.2, %v1529
  %v1673 = vmul.f32 %v1672, %v1230
  %v1674 = vmul.f32 %v1673, %v1605
  %v1675 = vadd.f32 %v1671, %v1674
  %v1676 = vmul.f32 %v1606, %v1306
  %v1677 = vmul.f32 %v1676, %v1612
  %v1678 = vmul.f32 %v1616, %v1306
  %v1679 = vmul.f32 %v1678, %v1619
  %v1680 = vadd.f32 %v1677, %v1679
  %v1681 = vmul.f32 %v1613, %v1306
  %v1682 = vmul.f32 %v1681, %v1619
  %v1683 = vmul.f32 %v1623, %v1306
  %v1684 = vmul.f32 %v1683, %v1626
  %v1685 = vadd.f32 %v1682, %v1684
  %v1686 = vmul.f32 %v1620, %v1306
  %v1687 = vmul.f32 %v1686, %v1626
  %v1688 = vmul.f32 %v1630, %v1306
  %v1689 = vmul.f32 %v1688, %v1633
  %v1690 = vadd.f32 %v1687, %v1689
  %v1691 = vmul.f32 %v1627, %v1306
  %v1692 = vmul.f32 %v1691, %v1633
  %v1693 = vmul.f32 %v1637, %v1306
  %v1694 = vmul.f32 %v1693, %v1640
  %v1695 = vadd.f32 %v1692, %v1694
  %v1696 = vmul.f32 %v1634, %v1306
  %v1697 = vmul.f32 %v1696, %v1640
  %v1698 = vmul.f32 %v1644, %v1306
  %v1699 = vmul.f32 %v1698, %v1647
  %v1700 = vadd.f32 %v1697, %v1699
  %v1701 = vmul.f32 %v1641, %v1306
  %v1702 = vmul.f32 %v1701, %v1647
  %v1703 = vmul.f32 %v1651, %v1306
  %v1704 = vmul.f32 %v1703, %v1654
  %v1705 = vadd.f32 %v1702, %v1704
  %v1706 = vmul.f32 %v1648, %v1306
  %v1707 = vmul.f32 %v1706, %v1654
  %v1708 = vmul.f32 %v1658, %v1306
  %v1709 = vmul.f32 %v1708, %v1661
  %v1710 = vadd.f32 %v1707, %v1709
  %v1711 = vmul.f32 %v1655, %v1306
  %v1712 = vmul.f32 %v1711, %v1661
  %v1713 = vmul.f32 %v1665, %v1306
  %v1714 = vmul.f32 %v1713, %v1668
  %v1715 = vadd.f32 %v1712, %v1714
  %v1716 = vmul.f32 %v1662, %v1306
  %v1717 = vmul.f32 %v1716, %v1668
  %v1718 = vmul.f32 %v1672, %v1306
  %v1719 = vmul.f32 %v1718, %v1675
  %v1720 = vadd.f32 %v1717, %v1719
  %v1721 = vmul.f32 %v1606, %v1358
  %v1722 = vmul.f32 %v1721, %v1680
  %v1723 = vmul.f32 %v1623, %v1358
  %v1724 = vmul.f32 %v1723, %v1685
  %v1725 = vadd.f32 %v1722, %v1724
  %v1726 = vmul.f32 %v1613, %v1358
  %v1727 = vmul.f32 %v1726, %v1685
  %v1728 = vmul.f32 %v1630, %v1358
  %v1729 = vmul.f32 %v1728, %v1690
  %v1730 = vadd.f32 %v1727, %v1729
  %v1731 = vmul.f32 %v1620, %v1358
  %v1732 = vmul.f32 %v1731, %v1690
  %v1733 = vmul.f32 %v1637, %v1358
  %v1734 = vmul.f32 %v1733, %v1695
  %v1735 = vadd.f32 %v1732, %v1734
  %v1736 = vmul.f32 %v1627, %v1358
  %v1737 = vmul.f32 %v1736, %v1695
  %v1738 = vmul.f32 %v1644, %v1358
  %v1739 = vmul.f32 %v1738, %v1700
  %v1740 = vadd.f32 %v1737, %v1739
  %v1741 = vmul.f32 %v1634, %v1358
  %v1742 = vmul.f32 %v1741, %v1700
  %v1743 = vmul.f32 %v1651, %v1358
  %v1744 = vmul.f32 %v1743, %v1705
  %v1745 = vadd.f32 %v1742, %v1744
  %v1746 = vmul.f32 %v1641, %v1358
  %v1747 = vmul.f32 %v1746, %v1705
  %v1748 = vmul.f32 %v1658, %v1358
  %v1749 = vmul.f32 %v1748, %v1710
  %v1750 = vadd.f32 %v1747, %v1749
  %v1751 = vmul.f32 %v1648, %v1358
  %v1752 = vmul.f32 %v1751, %v1710
  %v1753 = vmul.f32 %v1665, %v1358
  %v1754 = vmul.f32 %v1753, %v1715
  %v1755 = vadd.f32 %v1752, %v1754
  %v1756 = vmul.f32 %v1655, %v1358
  %v1757 = vmul.f32 %v1756, %v1715
  %v1758 = vmul.f32 %v1672, %v1358
  %v1759 = vmul.f32 %v1758, %v1720
  %v1760 = vadd.f32 %v1757, %v1759
  %1762 = vrot.lane.b32.xlu0 %v1725, 64
  %v1763 = vpop.permute.xlu0 %1762
  %1766 = vrot.lane.b32.xlu0 %v1735, 64
  %v1767 = vpop.permute.xlu0 %1766
  %1770 = vrot.lane.b32.xlu0 %v1745, 64
  %v1771 = vpop.permute.xlu0 %1770
  %1774 = vrot.lane.b32.xlu0 %v1755, 64
  %v1775 = vpop.permute.xlu0 %1774
  %v1777 = vsel %vm135, %v1550, %v1763
  %v1778 = vsel %vm135, %v1730, %v1767
  %v1779 = vsel %vm135, %v1740, %v1771
  %v1780 = vsel %vm135, %v1750, %v1775
  %v1781 = vld [vmem:[%s7] sm:$0xff]
  %v1782 = vld [vmem:[%s7 + $0x8] sm:$0xff]
  %v1783 = vld [vmem:[%s7 + $0x10] sm:$0xff]
  %v1784 = vld [vmem:[%s7 + $0x18] sm:$0xff]
  %v1785 = vld [vmem:[%s7 + $0x20] sm:$0xff]
  %v1786 = vld [vmem:[%s7 + $0x28] sm:$0xff]
  %v1787 = vld [vmem:[%s7 + $0x30] sm:$0xff]
  %v1788 = vld [vmem:[%s7 + $0x38] sm:$0xff]
  %v1789 = vld [vmem:[%s7 + $0x40] sm:$0xff]
  %v1790 = vld [vmem:[%s7 + $0x48] sm:$0xff]
  %v1791 = vld [vmem:[%s7 + $0x50] sm:$0xff]
  %v1792 = vld [vmem:[%s7 + $0x58] sm:$0xff]
  %v1793 = vld [vmem:[%s7 + $0x60] sm:$0xff]
  %v1794 = vld [vmem:[%s7 + $0x68] sm:$0xff]
  %v1795 = vld [vmem:[%s7 + $0x70] sm:$0xff]
  %v1796 = vld [vmem:[%s7 + $0x78] sm:$0xff]
  %v1797 = vld [vmem:[%s7 + $0x80] sm:$0xff]
  %v1798 = vld [vmem:[%s7 + $0x88] sm:$0xff]
  %v1799 = vld [vmem:[%s7 + $0x90] sm:$0xff]
  %v1800 = vld [vmem:[%s7 + $0x98] sm:$0xff]
  %v1801 = vld [vmem:[%s7 + $0xa0] sm:$0xff]
  %v1802 = vld [vmem:[%s7 + $0xa8] sm:$0xff]
  %v1803 = vld [vmem:[%s7 + $0xb0] sm:$0xff]
  %v1804 = vld [vmem:[%s7 + $0xb8] sm:$0xff]
  %v1805 = vld [vmem:[%s7 + $0xc0] sm:$0xff]
  %v1806 = vld [vmem:[%s7 + $0xc8] sm:$0xff]
  %v1807 = vld [vmem:[%s7 + $0xd0] sm:$0xff]
  %v1808 = vld [vmem:[%s7 + $0xd8] sm:$0xff]
  %v1809 = vld [vmem:[%s7 + $0xe0] sm:$0xff]
  %v1810 = vld [vmem:[%s7 + $0xe8] sm:$0xff]
  %v1811 = vld [vmem:[%s7 + $0xf0] sm:$0xff]
  %v1812 = vld [vmem:[%s7 + $0xf8] sm:$0xff]
  %v1813 = vld [vmem:[%s7 + $0x100] sm:$0xff]
  %v1814 = vld [vmem:[%s7 + $0x108] sm:$0xff]
  %v1815 = vld [vmem:[%s7 + $0x110] sm:$0xff]
  %v1816 = vld [vmem:[%s7 + $0x118] sm:$0xff]
  %v1817 = vld [vmem:[%s7 + $0x120] sm:$0xff]
  %v1818 = vld [vmem:[%s7 + $0x128] sm:$0xff]
  %v1819 = vld [vmem:[%s7 + $0x130] sm:$0xff]
  %v1820 = vld [vmem:[%s7 + $0x138] sm:$0xff]
  %v1821 = vld [vmem:[%s7 + $0x140] sm:$0xff]
  %v1822 = vld [vmem:[%s7 + $0x148] sm:$0xff]
  %v1823 = vld [vmem:[%s7 + $0x150] sm:$0xff]
  %v1824 = vld [vmem:[%s7 + $0x158] sm:$0xff]
  %v1825 = vld [vmem:[%s7 + $0x160] sm:$0xff]
  %v1826 = vld [vmem:[%s7 + $0x168] sm:$0xff]
  %v1827 = vld [vmem:[%s7 + $0x170] sm:$0xff]
  %v1828 = vld [vmem:[%s7 + $0x178] sm:$0xff]
  %v1829 = vld [vmem:[%s7 + $0x180] sm:$0xff]
  %v1830 = vld [vmem:[%s7 + $0x188] sm:$0xff]
  %v1831 = vld [vmem:[%s7 + $0x190] sm:$0xff]
  %v1832 = vld [vmem:[%s7 + $0x198] sm:$0xff]
  %v1833 = vld [vmem:[%s7 + $0x1a0] sm:$0xff]
  %v1834 = vld [vmem:[%s7 + $0x1a8] sm:$0xff]
  %v1835 = vld [vmem:[%s7 + $0x1b0] sm:$0xff]
  %v1836 = vld [vmem:[%s7 + $0x1b8] sm:$0xff]
  %v1837 = vld [vmem:[%s7 + $0x1c0] sm:$0xff]
  %v1838 = vld [vmem:[%s7 + $0x1c8] sm:$0xff]
  %v1839 = vld [vmem:[%s7 + $0x1d0] sm:$0xff]
  %v1840 = vld [vmem:[%s7 + $0x1d8] sm:$0xff]
  %v1841 = vld [vmem:[%s7 + $0x1e0] sm:$0xff]
  %v1842 = vld [vmem:[%s7 + $0x1e8] sm:$0xff]
  %v1843 = vld [vmem:[%s7 + $0x1f0] sm:$0xff]
  %v1844 = vld [vmem:[%s7 + $0x1f8] sm:$0xff]
  %v1845 = vld [vmem:[%s7 + $0x200] sm:$0xff]
  %v1846 = vld [vmem:[%s7 + $0x208] sm:$0xff]
  %v1847 = vld [vmem:[%s7 + $0x210] sm:$0xff]
  %v1848 = vld [vmem:[%s7 + $0x218] sm:$0xff]
  %v1849 = vld [vmem:[%s7 + $0x220] sm:$0xff]
  %v1850 = vld [vmem:[%s7 + $0x228] sm:$0xff]
  %v1851 = vld [vmem:[%s7 + $0x230] sm:$0xff]
  %v1852 = vld [vmem:[%s7 + $0x238] sm:$0xff]
  %v1854 = vsel %vm135, %v1760, 0
  %1856 = vmatpush.msra.mxu0 %v1796
  %1857 = vmatpush.msra.mxu0 %v1795
  %1858 = vmatpush.msra.mxu0 %v1794
  %1859 = vmatpush.msra.mxu0 %v1793
  %1860 = vmatpush.msra.mxu0 %v1792
  %1861 = vmatpush.msra.mxu0 %v1791
  %1862 = vmatpush.msra.mxu0 %v1790
  %1863 = vmatpush.msra.mxu0 %v1789
  %1864 = vmatpush.msra.mxu0 %v1788
  %1865 = vmatpush.msra.mxu0 %v1787
  %1866 = vmatpush.msra.mxu0 %v1786
  %1867 = vmatpush.msra.mxu0 %v1785
  %1868 = vmatpush.msra.mxu0 %v1784
  %1869 = vmatpush.msra.mxu0 %v1783
  %1870 = vmatpush.msra.mxu0 %v1782
  %1871 = vmatpush.msra.mxu0 %v1781
  %1872 = vmatmul.f32.gmra.mxu0 %v1777
  %v1873 = vpop.f32.mrf.mxu0
  %v1874 = vadd.f32 0.0, %v1873
  %1875 = vdwg.mxu0
  %1876 = vmatpush.msra.mxu0 %v1812
  %1877 = vmatpush.msra.mxu0 %v1811
  %1878 = vmatpush.msra.mxu0 %v1810
  %1879 = vmatpush.msra.mxu0 %v1809
  %1880 = vmatpush.msra.mxu0 %v1808
  %1881 = vmatpush.msra.mxu0 %v1807
  %1882 = vmatpush.msra.mxu0 %v1806
  %1883 = vmatpush.msra.mxu0 %v1805
  %1884 = vmatpush.msra.mxu0 %v1804
  %1885 = vmatpush.msra.mxu0 %v1803
  %1886 = vmatpush.msra.mxu0 %v1802
  %1887 = vmatpush.msra.mxu0 %v1801
  %1888 = vmatpush.msra.mxu0 %v1800
  %1889 = vmatpush.msra.mxu0 %v1799
  %1890 = vmatpush.msra.mxu0 %v1798
  %1891 = vmatpush.msra.mxu0 %v1797
  %1892 = vmatmul.f32.gmra.mxu0 %v1778
  %v1893 = vpop.f32.mrf.mxu0
  %v1894 = vadd.f32 %v1874, %v1893
  %1895 = vdwg.mxu0
  %1896 = vmatpush.msra.mxu0 %v1828
  %1897 = vmatpush.msra.mxu0 %v1827
  %1898 = vmatpush.msra.mxu0 %v1826
  %1899 = vmatpush.msra.mxu0 %v1825
  %1900 = vmatpush.msra.mxu0 %v1824
  %1901 = vmatpush.msra.mxu0 %v1823
  %1902 = vmatpush.msra.mxu0 %v1822
  %1903 = vmatpush.msra.mxu0 %v1821
  %1904 = vmatpush.msra.mxu0 %v1820
  %1905 = vmatpush.msra.mxu0 %v1819
  %1906 = vmatpush.msra.mxu0 %v1818
  %1907 = vmatpush.msra.mxu0 %v1817
  %1908 = vmatpush.msra.mxu0 %v1816
  %1909 = vmatpush.msra.mxu0 %v1815
  %1910 = vmatpush.msra.mxu0 %v1814
  %1911 = vmatpush.msra.mxu0 %v1813
  %1912 = vmatmul.f32.gmra.mxu0 %v1779
  %v1913 = vpop.f32.mrf.mxu0
  %v1914 = vadd.f32 %v1894, %v1913
  %1915 = vdwg.mxu0
  %1916 = vmatpush.msra.mxu0 %v1844
  %1917 = vmatpush.msra.mxu0 %v1843
  %1918 = vmatpush.msra.mxu0 %v1842
  %1919 = vmatpush.msra.mxu0 %v1841
  %1920 = vmatpush.msra.mxu0 %v1840
  %1921 = vmatpush.msra.mxu0 %v1839
  %1922 = vmatpush.msra.mxu0 %v1838
  %1923 = vmatpush.msra.mxu0 %v1837
  %1924 = vmatpush.msra.mxu0 %v1836
  %1925 = vmatpush.msra.mxu0 %v1835
  %1926 = vmatpush.msra.mxu0 %v1834
  %1927 = vmatpush.msra.mxu0 %v1833
  %1928 = vmatpush.msra.mxu0 %v1832
  %1929 = vmatpush.msra.mxu0 %v1831
  %1930 = vmatpush.msra.mxu0 %v1830
  %1931 = vmatpush.msra.mxu0 %v1829
  %1932 = vmatmul.f32.gmra.mxu0 %v1780
  %v1933 = vpop.f32.mrf.mxu0
  %v1934 = vadd.f32 %v1914, %v1933
  %1935 = vdwg.mxu0
  %1936 = vmatpush.msra.mxu0 0.0
  %1937 = vmatpush.msra.mxu0 0.0
  %1938 = vmatpush.msra.mxu0 0.0
  %1939 = vmatpush.msra.mxu0 0.0
  %1940 = vmatpush.msra.mxu0 0.0
  %1941 = vmatpush.msra.mxu0 0.0
  %1942 = vmatpush.msra.mxu0 0.0
  %1943 = vmatpush.msra.mxu0 0.0
  %1944 = vmatpush.msra.mxu0 %v1852
  %1945 = vmatpush.msra.mxu0 %v1851
  %1946 = vmatpush.msra.mxu0 %v1850
  %1947 = vmatpush.msra.mxu0 %v1849
  %1948 = vmatpush.msra.mxu0 %v1848
  %1949 = vmatpush.msra.mxu0 %v1847
  %1950 = vmatpush.msra.mxu0 %v1846
  %1951 = vmatpush.msra.mxu0 %v1845
  %1952 = vmatmul.f32.gmra.mxu0 %v1854
  %v1953 = vpop.f32.mrf.mxu0
  %v1954 = vadd.f32 %v1934, %v1953
  %1955 = vdwg.mxu0
  %vm1956 = vcmask 1024
  %1957 = vst.msk [vmem:[%s8] sm:$0x3] %vm1956, %v1954
  // Predicated region
  $region34: #{tpu_custom_call.1} parent=0 // pred_check
    _
  $region35: #{tpu_custom_call.1} parent=0 // pred_check_branch
    %1959 = sbr.rel (0) target = $region37
  $region36: #{tpu_custom_call.1} parent=0 // pred_region
    _
  $region37: #{tpu_custom_call.1} parent=0 // pred_fallthru
    _
  // Predicated region
  $region38: #{tpu_custom_call.1} parent=0 // pred_check
    _
  $region39: #{tpu_custom_call.1} parent=0 // pred_check_branch
    %1961 = sbr.rel (0) target = $region41
  $region40: #{tpu_custom_call.1} parent=0 // pred_region
    _
  $region41: #{tpu_custom_call.1} parent=0 // pred_fallthru
    _

</llo_original>
